<compile_context>
chip_gen: v6e
topology: v6e:2x2x1
jax: 0.10.0
libtpu: 0.0.40
codegen_flags: <defaults>
</compile_context>

<pallas_src>
import functools

import jax
import jax.numpy as jnp
from jax.experimental import pallas as pl
from jax.experimental.pallas import tpu as pltpu


def basic_block_kernel(x_ref, w1_ref, b1_ref, w2_ref, b2_ref, mask_ref,
                       out_ref, pad_ref, patch_ref, *, width):
    # x_ref:     (1, C, P)        f32  flattened NCHW image, P = H*W on lanes
    # w*_ref:    (C, 9*C)         bf16 GEMM weights, BN scale folded per row
    # b*_ref:    (C, 1)           f32  folded BN bias
    # mask_ref:  (9, P)           f32  per-tap validity mask (1.0 / 0.0)
    # out_ref:   (1, C, P)        f32
    # pad_ref:   (C, P + 2*PADL)  f32  scratch: flat image with zero halo
    # patch_ref: (9*C, P)         bf16 scratch: im2col patch (K rows x pixels)
    _, C, P = x_ref.shape
    PADL = (pad_ref.shape[1] - P) // 2
    W = width

    # Zero only the halo; the interior is fully rewritten before each conv and
    # nothing else ever touches the halo.
    pad_ref[:, :PADL] = jnp.zeros((C, PADL), jnp.float32)
    pad_ref[:, PADL + P:] = jnp.zeros((C, PADL), jnp.float32)

    def conv3x3_bn(w_ref, b_ref):
        # im2col from the flat padded buffer: tap (ky, kx) is the image
        # shifted by s = (ky-1)*W + (kx-1) flattened pixels; the mask zeroes
        # taps whose source pixel is outside the image (row wrap / border).
        for ky in range(3):
            for kx in range(3):
                t = ky * 3 + kx
                s = (ky - 1) * W + (kx - 1)
                strip = pad_ref[:, PADL + s:PADL + s + P]        # (C, P) f32
                strip = strip * mask_ref[t:t + 1, :]             # border mask
                patch_ref[t * C:(t + 1) * C, :] = strip.astype(jnp.bfloat16)
        acc = jnp.dot(w_ref[...], patch_ref[...],
                      preferred_element_type=jnp.float32)        # (C, P) f32
        return acc + b_ref[...]      # BN scale already folded into the weight

    # ---- conv1 + bn1 + relu
    pad_ref[:, PADL:PADL + P] = x_ref[0]
    out1 = jnp.maximum(conv3x3_bn(w1_ref, b1_ref), 0.0)

    # ---- conv2 + bn2 + residual add + relu (epilogue kept in f32 on the VPU)
    pad_ref[:, PADL:PADL + P] = out1
    out2 = conv3x3_bn(w2_ref, b2_ref)
    out_ref[0] = jnp.maximum(out2 + x_ref[0], 0.0)


@jax.jit
def basic_block(x_nchw, w1, g1, be1, rm1, rv1, w2, g2, be2, rm2, rv2,
                eps=1e-5):
    """BasicBlock forward. x_nchw: (N, C, H, W) float32. Returns (N, C, H, W)."""
    N, C, H, W = x_nchw.shape
    P = H * W
    x = x_nchw.reshape(N, C, P).astype(jnp.float32)   # free reshape, no transpose

    # Fold BN (inference) into per-output-channel scale/bias; fold the scale
    # into the conv weights so only bias + relu stay in-kernel.
    inv1 = g1 / jnp.sqrt(rv1 + eps)
    inv2 = g2 / jnp.sqrt(rv2 + eps)

    # PyTorch conv weight (Cout, Cin, 3, 3) -> (Cout, 3, 3, Cin) -> (Cout, 9*Cin)
    # so the K index is (ky*3 + kx)*C + ci, matching the in-kernel patch layout.
    # bf16 operands for the MXU; accumulation stays f32 in the kernel.
    w1m = (jnp.transpose(w1, (0, 2, 3, 1)).reshape(C, 9 * C)
           * inv1[:, None]).astype(jnp.bfloat16)
    w2m = (jnp.transpose(w2, (0, 2, 3, 1)).reshape(C, 9 * C)
           * inv2[:, None]).astype(jnp.bfloat16)
    b1 = (be1 - rm1 * inv1).reshape(C, 1).astype(jnp.float32)
    b2 = (be2 - rm2 * inv2).reshape(C, 1).astype(jnp.float32)

    # Per-tap validity masks over the flattened pixel index p = y*W + x.
    p = jnp.arange(P)
    yy, xx = p // W, p % W
    masks = []
    for ky in range(3):
        for kx in range(3):
            dy, dx = ky - 1, kx - 1
            ok = ((yy + dy >= 0) & (yy + dy < H) &
                  (xx + dx >= 0) & (xx + dx < W))
            masks.append(ok)
    mask = jnp.stack(masks, 0).astype(jnp.float32)      # (9, P)

    kernel = functools.partial(basic_block_kernel, width=W)

    flops = 4 * N * P * (9 * C) * C                     # 2 convs, 2 flops/MAC
    bytes_accessed = (2 * x.size * 4                    # x in + out
                      + N * 2 * (w1m.size + w2m.size)   # bf16 weights per step
                      + N * 4 * (b1.size + b2.size + mask.size))

    out_flat = pl.pallas_call(
        kernel,
        out_shape=jax.ShapeDtypeStruct((N, C, P), jnp.float32),
        grid_spec=pltpu.PrefetchScalarGridSpec(
            num_scalar_prefetch=0,
            grid=(N,),
            in_specs=[
                pl.BlockSpec((1, C, P), lambda n: (n, 0, 0)),
                pl.BlockSpec((C, 9 * C), lambda n: (0, 0)),
                pl.BlockSpec((C, 1), lambda n: (0, 0)),
                pl.BlockSpec((C, 9 * C), lambda n: (0, 0)),
                pl.BlockSpec((C, 1), lambda n: (0, 0)),
                pl.BlockSpec((9, P), lambda n: (0, 0)),
            ],
            out_specs=pl.BlockSpec((1, C, P), lambda n: (n, 0, 0)),
            scratch_shapes=[
                pltpu.VMEM((C, P + 2 * (W + 1)), jnp.float32),   # flat padded img
                pltpu.VMEM((9 * C, P), jnp.bfloat16),            # im2col patch
            ],
        ),
        compiler_params=pltpu.CompilerParams(
            dimension_semantics=("parallel",),
            # Actual footprint (<1 MiB at these shapes) + headroom; explicit
            # per review, and safely under all generations' scoped defaults.
            vmem_limit_bytes=16 * 1024 * 1024,
        ),
        cost_estimate=pl.CostEstimate(
            flops=flops, transcendentals=0, bytes_accessed=bytes_accessed),
    )(x, w1m, b1, w2m, b2, mask)

    return out_flat.reshape(N, C, H, W)


def _reference(x_nchw, w1, g1, be1, rm1, rv1, w2, g2, be2, rm2, rv2, eps=1e-5):
    """Pure-JAX f32 reference (NCHW, lax conv) mirroring the PyTorch forward."""
    def conv(x, w):
        return jax.lax.conv_general_dilated(
            x, w, window_strides=(1, 1), padding=((1, 1), (1, 1)),
            dimension_numbers=("NCHW", "OIHW", "NCHW"))

    def bn(x, g, b, rm, rv):
        inv = g / jnp.sqrt(rv + eps)
        return x * inv[None, :, None, None] + (b - rm * inv)[None, :, None, None]

    out = jax.nn.relu(bn(conv(x_nchw, w1), g1, be1, rm1, rv1))
    out = bn(conv(out, w2), g2, be2, rm2, rv2)
    return jax.nn.relu(out + x_nchw)


if __name__ == "__main__":
    # Small shapes: inplanes = planes = 32 (residual requires equal channels),
    # batch = 2, spatial = 16x16, stride = 1, downsample = None.
    N, C, H, W = 2, 32, 16, 16
    key = jax.random.PRNGKey(0)
    keys = jax.random.split(key, 8)

    x = jax.random.normal(keys[0], (N, C, H, W), jnp.float32)

    # conv weights (Cout, Cin, 3, 3), bias=False
    w1 = jax.random.normal(keys[1], (C, C, 3, 3), jnp.float32) * 0.1
    w2 = jax.random.normal(keys[2], (C, C, 3, 3), jnp.float32) * 0.1

    # BatchNorm params (deterministic, inference stats)
    g1 = 1.0 + 0.1 * jax.random.normal(keys[3], (C,), jnp.float32)
    be1 = 0.05 * jax.random.normal(keys[4], (C,), jnp.float32)
    rm1 = 0.1 * jax.random.normal(keys[5], (C,), jnp.float32)
    rv1 = 1.0 + 0.1 * jnp.abs(jax.random.normal(keys[6], (C,), jnp.float32))
    g2 = jnp.ones((C,), jnp.float32)
    be2 = jnp.zeros((C,), jnp.float32)
    rm2 = 0.1 * jax.random.normal(keys[7], (C,), jnp.float32)
    rv2 = jnp.ones((C,), jnp.float32) * 1.2

    params = (w1, g1, be1, rm1, rv1, w2, g2, be2, rm2, rv2)

    out = jax.block_until_ready(basic_block(x, *params))
    ref = jax.block_until_ready(_reference(x, *params))

    assert out.shape == (N, C, H, W), out.shape
    # bf16 MXU operands with f32 accumulation vs a pure-f32 reference: the
    # tolerance is loosened accordingly (per review); observed max |err| is
    # typically well below 5e-2 at these magnitudes.
    max_err = float(jnp.max(jnp.abs(out - ref)))
    assert jnp.allclose(out, ref, atol=1e-1, rtol=2e-2), max_err
    print("KERNEL_OK")
</pallas_src>

<mosaic_0001>
module attributes {stable_mosaic.version = 11 : i64} {
  func.func @basic_block_kernel(%arg0: i32, %arg1: memref<1x32x256xf32, #tpu.memory_space<vmem>>, %arg2: memref<32x288xbf16, #tpu.memory_space<vmem>>, %arg3: memref<32x1xf32, #tpu.memory_space<vmem>>, %arg4: memref<32x288xbf16, #tpu.memory_space<vmem>>, %arg5: memref<32x1xf32, #tpu.memory_space<vmem>>, %arg6: memref<9x256xf32, #tpu.memory_space<vmem>>, %arg7: memref<1x32x256xf32, #tpu.memory_space<vmem>>, %arg8: memref<32x290xf32, #tpu.memory_space<vmem>>, %arg9: memref<288x256xbf16, #tpu.memory_space<vmem>>) attributes {dimension_semantics = [#tpu.dimension_semantics<parallel>], iteration_bounds = array<i64: 2>, scalar_prefetch = 0 : i64, scratch_operands = 2 : i64, tpu.core_type = #tpu.core_type<tc>, window_params = [{transform_indices = @transform_0, window_bounds = array<i64: 1, 32, 256>}, {pipeline_mode = #tpu.pipeline_mode<synchronous>, transform_indices = @transform_1, window_bounds = array<i64: 32, 288>}, {pipeline_mode = #tpu.pipeline_mode<synchronous>, transform_indices = @transform_2, window_bounds = array<i64: 32, 1>}, {pipeline_mode = #tpu.pipeline_mode<synchronous>, transform_indices = @transform_3, window_bounds = array<i64: 32, 288>}, {pipeline_mode = #tpu.pipeline_mode<synchronous>, transform_indices = @transform_4, window_bounds = array<i64: 32, 1>}, {pipeline_mode = #tpu.pipeline_mode<synchronous>, transform_indices = @transform_5, window_bounds = array<i64: 9, 256>}, {transform_indices = @transform_6, window_bounds = array<i64: 1, 32, 256>}]} {
    %cst = arith.constant 0.000000e+00 : f32
    %0 = vector.broadcast %cst : f32 to vector<32x17xf32>
    %c0 = arith.constant 0 : index
    %c0_0 = arith.constant 0 : index
    %1 = vector.load %arg8[%c0, %c0_0] : memref<32x290xf32, #tpu.memory_space<vmem>>, vector<32x17xf32>
    tpu.vector_store %arg8[%c0, %c0_0], %0 {strides = array<i32>} : memref<32x290xf32, #tpu.memory_space<vmem>>, vector<32x17xf32>,
    %cst_1 = arith.constant 0.000000e+00 : f32
    %2 = vector.broadcast %cst_1 : f32 to vector<32x17xf32>
    %c0_2 = arith.constant 0 : index
    %c273 = arith.constant 273 : index
    %3 = vector.load %arg8[%c0_2, %c273] : memref<32x290xf32, #tpu.memory_space<vmem>>, vector<32x17xf32>
    tpu.vector_store %arg8[%c0_2, %c273], %2 {strides = array<i32>} : memref<32x290xf32, #tpu.memory_space<vmem>>, vector<32x17xf32>,
    %c0_3 = arith.constant 0 : index
    %c0_4 = arith.constant 0 : index
    %c0_5 = arith.constant 0 : index
    %4 = vector.load %arg1[%c0_3, %c0_4, %c0_5] : memref<1x32x256xf32, #tpu.memory_space<vmem>>, vector<1x32x256xf32>
    %5 = vector.shape_cast %4 : vector<1x32x256xf32> to vector<32x256xf32>
    %c0_6 = arith.constant 0 : index
    %c17 = arith.constant 17 : index
    %6 = vector.load %arg8[%c0_6, %c17] : memref<32x290xf32, #tpu.memory_space<vmem>>, vector<32x256xf32>
    tpu.vector_store %arg8[%c0_6, %c17], %5 {strides = array<i32>} : memref<32x290xf32, #tpu.memory_space<vmem>>, vector<32x256xf32>,
    %c0_7 = arith.constant 0 : index
    %c0_8 = arith.constant 0 : index
    %7 = vector.load %arg8[%c0_7, %c0_8] : memref<32x290xf32, #tpu.memory_space<vmem>>, vector<32x256xf32>
    %c0_9 = arith.constant 0 : index
    %c0_10 = arith.constant 0 : index
    %8 = vector.load %arg6[%c0_9, %c0_10] : memref<9x256xf32, #tpu.memory_space<vmem>>, vector<1x256xf32>
    %9 = vector.broadcast %8 : vector<1x256xf32> to vector<32x256xf32>
    %10 = arith.mulf %7, %9 : vector<32x256xf32>
    %11 = arith.truncf %10 : vector<32x256xf32> to vector<32x256xbf16>
    %c0_11 = arith.constant 0 : index
    %c0_12 = arith.constant 0 : index
    %12 = vector.load %arg9[%c0_11, %c0_12] : memref<288x256xbf16, #tpu.memory_space<vmem>>, vector<32x256xbf16>
    tpu.vector_store %arg9[%c0_11, %c0_12], %11 {strides = array<i32>} : memref<288x256xbf16, #tpu.memory_space<vmem>>, vector<32x256xbf16>,
    %c0_13 = arith.constant 0 : index
    %c1 = arith.constant 1 : index
    %13 = vector.load %arg8[%c0_13, %c1] : memref<32x290xf32, #tpu.memory_space<vmem>>, vector<32x256xf32>
    %c1_14 = arith.constant 1 : index
    %c0_15 = arith.constant 0 : index
    %14 = vector.load %arg6[%c1_14, %c0_15] : memref<9x256xf32, #tpu.memory_space<vmem>>, vector<1x256xf32>
    %15 = vector.broadcast %14 : vector<1x256xf32> to vector<32x256xf32>
    %16 = arith.mulf %13, %15 : vector<32x256xf32>
    %17 = arith.truncf %16 : vector<32x256xf32> to vector<32x256xbf16>
    %c32 = arith.constant 32 : index
    %c0_16 = arith.constant 0 : index
    %18 = vector.load %arg9[%c32, %c0_16] : memref<288x256xbf16, #tpu.memory_space<vmem>>, vector<32x256xbf16>
    tpu.vector_store %arg9[%c32, %c0_16], %17 {strides = array<i32>} : memref<288x256xbf16, #tpu.memory_space<vmem>>, vector<32x256xbf16>,
    %c0_17 = arith.constant 0 : index
    %c2 = arith.constant 2 : index
    %19 = vector.load %arg8[%c0_17, %c2] : memref<32x290xf32, #tpu.memory_space<vmem>>, vector<32x256xf32>
    %c2_18 = arith.constant 2 : index
    %c0_19 = arith.constant 0 : index
    %20 = vector.load %arg6[%c2_18, %c0_19] : memref<9x256xf32, #tpu.memory_space<vmem>>, vector<1x256xf32>
    %21 = vector.broadcast %20 : vector<1x256xf32> to vector<32x256xf32>
    %22 = arith.mulf %19, %21 : vector<32x256xf32>
    %23 = arith.truncf %22 : vector<32x256xf32> to vector<32x256xbf16>
    %c64 = arith.constant 64 : index
    %c0_20 = arith.constant 0 : index
    %24 = vector.load %arg9[%c64, %c0_20] : memref<288x256xbf16, #tpu.memory_space<vmem>>, vector<32x256xbf16>
    tpu.vector_store %arg9[%c64, %c0_20], %23 {strides = array<i32>} : memref<288x256xbf16, #tpu.memory_space<vmem>>, vector<32x256xbf16>,
    %c0_21 = arith.constant 0 : index
    %c16 = arith.constant 16 : index
    %25 = vector.load %arg8[%c0_21, %c16] : memref<32x290xf32, #tpu.memory_space<vmem>>, vector<32x256xf32>
    %c3 = arith.constant 3 : index
    %c0_22 = arith.constant 0 : index
    %26 = vector.load %arg6[%c3, %c0_22] : memref<9x256xf32, #tpu.memory_space<vmem>>, vector<1x256xf32>
    %27 = vector.broadcast %26 : vector<1x256xf32> to vector<32x256xf32>
    %28 = arith.mulf %25, %27 : vector<32x256xf32>
    %29 = arith.truncf %28 : vector<32x256xf32> to vector<32x256xbf16>
    %c96 = arith.constant 96 : index
    %c0_23 = arith.constant 0 : index
    %30 = vector.load %arg9[%c96, %c0_23] : memref<288x256xbf16, #tpu.memory_space<vmem>>, vector<32x256xbf16>
    tpu.vector_store %arg9[%c96, %c0_23], %29 {strides = array<i32>} : memref<288x256xbf16, #tpu.memory_space<vmem>>, vector<32x256xbf16>,
    %c0_24 = arith.constant 0 : index
    %c17_25 = arith.constant 17 : index
    %31 = vector.load %arg8[%c0_24, %c17_25] : memref<32x290xf32, #tpu.memory_space<vmem>>, vector<32x256xf32>
    %c4 = arith.constant 4 : index
    %c0_26 = arith.constant 0 : index
    %32 = vector.load %arg6[%c4, %c0_26] : memref<9x256xf32, #tpu.memory_space<vmem>>, vector<1x256xf32>
    %33 = vector.broadcast %32 : vector<1x256xf32> to vector<32x256xf32>
    %34 = arith.mulf %31, %33 : vector<32x256xf32>
    %35 = arith.truncf %34 : vector<32x256xf32> to vector<32x256xbf16>
    %c128 = arith.constant 128 : index
    %c0_27 = arith.constant 0 : index
    %36 = vector.load %arg9[%c128, %c0_27] : memref<288x256xbf16, #tpu.memory_space<vmem>>, vector<32x256xbf16>
    tpu.vector_store %arg9[%c128, %c0_27], %35 {strides = array<i32>} : memref<288x256xbf16, #tpu.memory_space<vmem>>, vector<32x256xbf16>,
    %c0_28 = arith.constant 0 : index
    %c18 = arith.constant 18 : index
    %37 = vector.load %arg8[%c0_28, %c18] : memref<32x290xf32, #tpu.memory_space<vmem>>, vector<32x256xf32>
    %c5 = arith.constant 5 : index
    %c0_29 = arith.constant 0 : index
    %38 = vector.load %arg6[%c5, %c0_29] : memref<9x256xf32, #tpu.memory_space<vmem>>, vector<1x256xf32>
    %39 = vector.broadcast %38 : vector<1x256xf32> to vector<32x256xf32>
    %40 = arith.mulf %37, %39 : vector<32x256xf32>
    %41 = arith.truncf %40 : vector<32x256xf32> to vector<32x256xbf16>
    %c160 = arith.constant 160 : index
    %c0_30 = arith.constant 0 : index
    %42 = vector.load %arg9[%c160, %c0_30] : memref<288x256xbf16, #tpu.memory_space<vmem>>, vector<32x256xbf16>
    tpu.vector_store %arg9[%c160, %c0_30], %41 {strides = array<i32>} : memref<288x256xbf16, #tpu.memory_space<vmem>>, vector<32x256xbf16>,
    %c0_31 = arith.constant 0 : index
    %c32_32 = arith.constant 32 : index
    %43 = vector.load %arg8[%c0_31, %c32_32] : memref<32x290xf32, #tpu.memory_space<vmem>>, vector<32x256xf32>
    %c6 = arith.constant 6 : index
    %c0_33 = arith.constant 0 : index
    %44 = vector.load %arg6[%c6, %c0_33] : memref<9x256xf32, #tpu.memory_space<vmem>>, vector<1x256xf32>
    %45 = vector.broadcast %44 : vector<1x256xf32> to vector<32x256xf32>
    %46 = arith.mulf %43, %45 : vector<32x256xf32>
    %47 = arith.truncf %46 : vector<32x256xf32> to vector<32x256xbf16>
    %c192 = arith.constant 192 : index
    %c0_34 = arith.constant 0 : index
    %48 = vector.load %arg9[%c192, %c0_34] : memref<288x256xbf16, #tpu.memory_space<vmem>>, vector<32x256xbf16>
    tpu.vector_store %arg9[%c192, %c0_34], %47 {strides = array<i32>} : memref<288x256xbf16, #tpu.memory_space<vmem>>, vector<32x256xbf16>,
    %c0_35 = arith.constant 0 : index
    %c33 = arith.constant 33 : index
    %49 = vector.load %arg8[%c0_35, %c33] : memref<32x290xf32, #tpu.memory_space<vmem>>, vector<32x256xf32>
    %c7 = arith.constant 7 : index
    %c0_36 = arith.constant 0 : index
    %50 = vector.load %arg6[%c7, %c0_36] : memref<9x256xf32, #tpu.memory_space<vmem>>, vector<1x256xf32>
    %51 = vector.broadcast %50 : vector<1x256xf32> to vector<32x256xf32>
    %52 = arith.mulf %49, %51 : vector<32x256xf32>
    %53 = arith.truncf %52 : vector<32x256xf32> to vector<32x256xbf16>
    %c224 = arith.constant 224 : index
    %c0_37 = arith.constant 0 : index
    %54 = vector.load %arg9[%c224, %c0_37] : memref<288x256xbf16, #tpu.memory_space<vmem>>, vector<32x256xbf16>
    tpu.vector_store %arg9[%c224, %c0_37], %53 {strides = array<i32>} : memref<288x256xbf16, #tpu.memory_space<vmem>>, vector<32x256xbf16>,
    %c0_38 = arith.constant 0 : index
    %c34 = arith.constant 34 : index
    %55 = vector.load %arg8[%c0_38, %c34] : memref<32x290xf32, #tpu.memory_space<vmem>>, vector<32x256xf32>
    %c8 = arith.constant 8 : index
    %c0_39 = arith.constant 0 : index
    %56 = vector.load %arg6[%c8, %c0_39] : memref<9x256xf32, #tpu.memory_space<vmem>>, vector<1x256xf32>
    %57 = vector.broadcast %56 : vector<1x256xf32> to vector<32x256xf32>
    %58 = arith.mulf %55, %57 : vector<32x256xf32>
    %59 = arith.truncf %58 : vector<32x256xf32> to vector<32x256xbf16>
    %c256 = arith.constant 256 : index
    %c0_40 = arith.constant 0 : index
    %60 = vector.load %arg9[%c256, %c0_40] : memref<288x256xbf16, #tpu.memory_space<vmem>>, vector<32x256xbf16>
    tpu.vector_store %arg9[%c256, %c0_40], %59 {strides = array<i32>} : memref<288x256xbf16, #tpu.memory_space<vmem>>, vector<32x256xbf16>,
    %c0_41 = arith.constant 0 : index
    %c0_42 = arith.constant 0 : index
    %61 = vector.load %arg2[%c0_41, %c0_42] : memref<32x288xbf16, #tpu.memory_space<vmem>>, vector<32x288xbf16>
    %c0_43 = arith.constant 0 : index
    %c0_44 = arith.constant 0 : index
    %62 = vector.load %arg9[%c0_43, %c0_44] : memref<288x256xbf16, #tpu.memory_space<vmem>>, vector<288x256xbf16>
    %cst_45 = arith.constant dense<0.000000e+00> : vector<32x256xf32>
    %63 = tpu.matmul %61, %62, %cst_45 {dimension_numbers = #tpu.dot_dimension_numbers<[1], [0], [0], [1], [0, 0, 1, 1], [], []>} : vector<32x288xbf16>, vector<288x256xbf16>, vector<32x256xf32> -> vector<32x256xf32>
    %c0_46 = arith.constant 0 : index
    %c0_47 = arith.constant 0 : index
    %64 = vector.load %arg3[%c0_46, %c0_47] : memref<32x1xf32, #tpu.memory_space<vmem>>, vector<32x1xf32>
    %65 = vector.broadcast %64 : vector<32x1xf32> to vector<32x256xf32>
    %66 = arith.addf %63, %65 : vector<32x256xf32>
    %cst_48 = arith.constant 0.000000e+00 : f32
    %67 = vector.broadcast %cst_48 : f32 to vector<32x256xf32>
    %68 = arith.maximumf %66, %67 : vector<32x256xf32>
    %c0_49 = arith.constant 0 : index
    %c17_50 = arith.constant 17 : index
    %69 = vector.load %arg8[%c0_49, %c17_50] : memref<32x290xf32, #tpu.memory_space<vmem>>, vector<32x256xf32>
    tpu.vector_store %arg8[%c0_49, %c17_50], %68 {strides = array<i32>} : memref<32x290xf32, #tpu.memory_space<vmem>>, vector<32x256xf32>,
    %c0_51 = arith.constant 0 : index
    %c0_52 = arith.constant 0 : index
    %70 = vector.load %arg8[%c0_51, %c0_52] : memref<32x290xf32, #tpu.memory_space<vmem>>, vector<32x256xf32>
    %c0_53 = arith.constant 0 : index
    %c0_54 = arith.constant 0 : index
    %71 = vector.load %arg6[%c0_53, %c0_54] : memref<9x256xf32, #tpu.memory_space<vmem>>, vector<1x256xf32>
    %72 = vector.broadcast %71 : vector<1x256xf32> to vector<32x256xf32>
    %73 = arith.mulf %70, %72 : vector<32x256xf32>
    %74 = arith.truncf %73 : vector<32x256xf32> to vector<32x256xbf16>
    %c0_55 = arith.constant 0 : index
    %c0_56 = arith.constant 0 : index
    %75 = vector.load %arg9[%c0_55, %c0_56] : memref<288x256xbf16, #tpu.memory_space<vmem>>, vector<32x256xbf16>
    tpu.vector_store %arg9[%c0_55, %c0_56], %74 {strides = array<i32>} : memref<288x256xbf16, #tpu.memory_space<vmem>>, vector<32x256xbf16>,
    %c0_57 = arith.constant 0 : index
    %c1_58 = arith.constant 1 : index
    %76 = vector.load %arg8[%c0_57, %c1_58] : memref<32x290xf32, #tpu.memory_space<vmem>>, vector<32x256xf32>
    %c1_59 = arith.constant 1 : index
    %c0_60 = arith.constant 0 : index
    %77 = vector.load %arg6[%c1_59, %c0_60] : memref<9x256xf32, #tpu.memory_space<vmem>>, vector<1x256xf32>
    %78 = vector.broadcast %77 : vector<1x256xf32> to vector<32x256xf32>
    %79 = arith.mulf %76, %78 : vector<32x256xf32>
    %80 = arith.truncf %79 : vector<32x256xf32> to vector<32x256xbf16>
    %c32_61 = arith.constant 32 : index
    %c0_62 = arith.constant 0 : index
    %81 = vector.load %arg9[%c32_61, %c0_62] : memref<288x256xbf16, #tpu.memory_space<vmem>>, vector<32x256xbf16>
    tpu.vector_store %arg9[%c32_61, %c0_62], %80 {strides = array<i32>} : memref<288x256xbf16, #tpu.memory_space<vmem>>, vector<32x256xbf16>,
    %c0_63 = arith.constant 0 : index
    %c2_64 = arith.constant 2 : index
    %82 = vector.load %arg8[%c0_63, %c2_64] : memref<32x290xf32, #tpu.memory_space<vmem>>, vector<32x256xf32>
    %c2_65 = arith.constant 2 : index
    %c0_66 = arith.constant 0 : index
    %83 = vector.load %arg6[%c2_65, %c0_66] : memref<9x256xf32, #tpu.memory_space<vmem>>, vector<1x256xf32>
    %84 = vector.broadcast %83 : vector<1x256xf32> to vector<32x256xf32>
    %85 = arith.mulf %82, %84 : vector<32x256xf32>
    %86 = arith.truncf %85 : vector<32x256xf32> to vector<32x256xbf16>
    %c64_67 = arith.constant 64 : index
    %c0_68 = arith.constant 0 : index
    %87 = vector.load %arg9[%c64_67, %c0_68] : memref<288x256xbf16, #tpu.memory_space<vmem>>, vector<32x256xbf16>
    tpu.vector_store %arg9[%c64_67, %c0_68], %86 {strides = array<i32>} : memref<288x256xbf16, #tpu.memory_space<vmem>>, vector<32x256xbf16>,
    %c0_69 = arith.constant 0 : index
    %c16_70 = arith.constant 16 : index
    %88 = vector.load %arg8[%c0_69, %c16_70] : memref<32x290xf32, #tpu.memory_space<vmem>>, vector<32x256xf32>
    %c3_71 = arith.constant 3 : index
    %c0_72 = arith.constant 0 : index
    %89 = vector.load %arg6[%c3_71, %c0_72] : memref<9x256xf32, #tpu.memory_space<vmem>>, vector<1x256xf32>
    %90 = vector.broadcast %89 : vector<1x256xf32> to vector<32x256xf32>
    %91 = arith.mulf %88, %90 : vector<32x256xf32>
    %92 = arith.truncf %91 : vector<32x256xf32> to vector<32x256xbf16>
    %c96_73 = arith.constant 96 : index
    %c0_74 = arith.constant 0 : index
    %93 = vector.load %arg9[%c96_73, %c0_74] : memref<288x256xbf16, #tpu.memory_space<vmem>>, vector<32x256xbf16>
    tpu.vector_store %arg9[%c96_73, %c0_74], %92 {strides = array<i32>} : memref<288x256xbf16, #tpu.memory_space<vmem>>, vector<32x256xbf16>,
    %c0_75 = arith.constant 0 : index
    %c17_76 = arith.constant 17 : index
    %94 = vector.load %arg8[%c0_75, %c17_76] : memref<32x290xf32, #tpu.memory_space<vmem>>, vector<32x256xf32>
    %c4_77 = arith.constant 4 : index
    %c0_78 = arith.constant 0 : index
    %95 = vector.load %arg6[%c4_77, %c0_78] : memref<9x256xf32, #tpu.memory_space<vmem>>, vector<1x256xf32>
    %96 = vector.broadcast %95 : vector<1x256xf32> to vector<32x256xf32>
    %97 = arith.mulf %94, %96 : vector<32x256xf32>
    %98 = arith.truncf %97 : vector<32x256xf32> to vector<32x256xbf16>
    %c128_79 = arith.constant 128 : index
    %c0_80 = arith.constant 0 : index
    %99 = vector.load %arg9[%c128_79, %c0_80] : memref<288x256xbf16, #tpu.memory_space<vmem>>, vector<32x256xbf16>
    tpu.vector_store %arg9[%c128_79, %c0_80], %98 {strides = array<i32>} : memref<288x256xbf16, #tpu.memory_space<vmem>>, vector<32x256xbf16>,
    %c0_81 = arith.constant 0 : index
    %c18_82 = arith.constant 18 : index
    %100 = vector.load %arg8[%c0_81, %c18_82] : memref<32x290xf32, #tpu.memory_space<vmem>>, vector<32x256xf32>
    %c5_83 = arith.constant 5 : index
    %c0_84 = arith.constant 0 : index
    %101 = vector.load %arg6[%c5_83, %c0_84] : memref<9x256xf32, #tpu.memory_space<vmem>>, vector<1x256xf32>
    %102 = vector.broadcast %101 : vector<1x256xf32> to vector<32x256xf32>
    %103 = arith.mulf %100, %102 : vector<32x256xf32>
    %104 = arith.truncf %103 : vector<32x256xf32> to vector<32x256xbf16>
    %c160_85 = arith.constant 160 : index
    %c0_86 = arith.constant 0 : index
    %105 = vector.load %arg9[%c160_85, %c0_86] : memref<288x256xbf16, #tpu.memory_space<vmem>>, vector<32x256xbf16>
    tpu.vector_store %arg9[%c160_85, %c0_86], %104 {strides = array<i32>} : memref<288x256xbf16, #tpu.memory_space<vmem>>, vector<32x256xbf16>,
    %c0_87 = arith.constant 0 : index
    %c32_88 = arith.constant 32 : index
    %106 = vector.load %arg8[%c0_87, %c32_88] : memref<32x290xf32, #tpu.memory_space<vmem>>, vector<32x256xf32>
    %c6_89 = arith.constant 6 : index
    %c0_90 = arith.constant 0 : index
    %107 = vector.load %arg6[%c6_89, %c0_90] : memref<9x256xf32, #tpu.memory_space<vmem>>, vector<1x256xf32>
    %108 = vector.broadcast %107 : vector<1x256xf32> to vector<32x256xf32>
    %109 = arith.mulf %106, %108 : vector<32x256xf32>
    %110 = arith.truncf %109 : vector<32x256xf32> to vector<32x256xbf16>
    %c192_91 = arith.constant 192 : index
    %c0_92 = arith.constant 0 : index
    %111 = vector.load %arg9[%c192_91, %c0_92] : memref<288x256xbf16, #tpu.memory_space<vmem>>, vector<32x256xbf16>
    tpu.vector_store %arg9[%c192_91, %c0_92], %110 {strides = array<i32>} : memref<288x256xbf16, #tpu.memory_space<vmem>>, vector<32x256xbf16>,
    %c0_93 = arith.constant 0 : index
    %c33_94 = arith.constant 33 : index
    %112 = vector.load %arg8[%c0_93, %c33_94] : memref<32x290xf32, #tpu.memory_space<vmem>>, vector<32x256xf32>
    %c7_95 = arith.constant 7 : index
    %c0_96 = arith.constant 0 : index
    %113 = vector.load %arg6[%c7_95, %c0_96] : memref<9x256xf32, #tpu.memory_space<vmem>>, vector<1x256xf32>
    %114 = vector.broadcast %113 : vector<1x256xf32> to vector<32x256xf32>
    %115 = arith.mulf %112, %114 : vector<32x256xf32>
    %116 = arith.truncf %115 : vector<32x256xf32> to vector<32x256xbf16>
    %c224_97 = arith.constant 224 : index
    %c0_98 = arith.constant 0 : index
    %117 = vector.load %arg9[%c224_97, %c0_98] : memref<288x256xbf16, #tpu.memory_space<vmem>>, vector<32x256xbf16>
    tpu.vector_store %arg9[%c224_97, %c0_98], %116 {strides = array<i32>} : memref<288x256xbf16, #tpu.memory_space<vmem>>, vector<32x256xbf16>,
    %c0_99 = arith.constant 0 : index
    %c34_100 = arith.constant 34 : index
    %118 = vector.load %arg8[%c0_99, %c34_100] : memref<32x290xf32, #tpu.memory_space<vmem>>, vector<32x256xf32>
    %c8_101 = arith.constant 8 : index
    %c0_102 = arith.constant 0 : index
    %119 = vector.load %arg6[%c8_101, %c0_102] : memref<9x256xf32, #tpu.memory_space<vmem>>, vector<1x256xf32>
    %120 = vector.broadcast %119 : vector<1x256xf32> to vector<32x256xf32>
    %121 = arith.mulf %118, %120 : vector<32x256xf32>
    %122 = arith.truncf %121 : vector<32x256xf32> to vector<32x256xbf16>
    %c256_103 = arith.constant 256 : index
    %c0_104 = arith.constant 0 : index
    %123 = vector.load %arg9[%c256_103, %c0_104] : memref<288x256xbf16, #tpu.memory_space<vmem>>, vector<32x256xbf16>
    tpu.vector_store %arg9[%c256_103, %c0_104], %122 {strides = array<i32>} : memref<288x256xbf16, #tpu.memory_space<vmem>>, vector<32x256xbf16>,
    %c0_105 = arith.constant 0 : index
    %c0_106 = arith.constant 0 : index
    %124 = vector.load %arg4[%c0_105, %c0_106] : memref<32x288xbf16, #tpu.memory_space<vmem>>, vector<32x288xbf16>
    %c0_107 = arith.constant 0 : index
    %c0_108 = arith.constant 0 : index
    %125 = vector.load %arg9[%c0_107, %c0_108] : memref<288x256xbf16, #tpu.memory_space<vmem>>, vector<288x256xbf16>
    %cst_109 = arith.constant dense<0.000000e+00> : vector<32x256xf32>
    %126 = tpu.matmul %124, %125, %cst_109 {dimension_numbers = #tpu.dot_dimension_numbers<[1], [0], [0], [1], [0, 0, 1, 1], [], []>} : vector<32x288xbf16>, vector<288x256xbf16>, vector<32x256xf32> -> vector<32x256xf32>
    %c0_110 = arith.constant 0 : index
    %c0_111 = arith.constant 0 : index
    %127 = vector.load %arg5[%c0_110, %c0_111] : memref<32x1xf32, #tpu.memory_space<vmem>>, vector<32x1xf32>
    %128 = vector.broadcast %127 : vector<32x1xf32> to vector<32x256xf32>
    %129 = arith.addf %126, %128 : vector<32x256xf32>
    %c0_112 = arith.constant 0 : index
    %c0_113 = arith.constant 0 : index
    %c0_114 = arith.constant 0 : index
    %130 = vector.load %arg1[%c0_112, %c0_113, %c0_114] : memref<1x32x256xf32, #tpu.memory_space<vmem>>, vector<1x32x256xf32>
    %131 = vector.shape_cast %130 : vector<1x32x256xf32> to vector<32x256xf32>
    %132 = arith.addf %129, %131 : vector<32x256xf32>
    %cst_115 = arith.constant 0.000000e+00 : f32
    %133 = vector.broadcast %cst_115 : f32 to vector<32x256xf32>
    %134 = arith.maximumf %132, %133 : vector<32x256xf32>
    %c0_116 = arith.constant 0 : index
    %c0_117 = arith.constant 0 : index
    %c0_118 = arith.constant 0 : index
    %135 = vector.load %arg7[%c0_116, %c0_117, %c0_118] : memref<1x32x256xf32, #tpu.memory_space<vmem>>, vector<1x32x256xf32>
    %136 = vector.shape_cast %135 : vector<1x32x256xf32> to vector<32x256xf32>
    %137 = vector.shape_cast %134 : vector<32x256xf32> to vector<1x32x256xf32>
    tpu.vector_store %arg7[%c0_116, %c0_117, %c0_118], %137 {strides = array<i32>} : memref<1x32x256xf32, #tpu.memory_space<vmem>>, vector<1x32x256xf32>,
    return
  }
  func.func @transform_0(%arg0: i32) -> (i32, i32, i32) {
    %c0_i32 = arith.constant 0 : i32
    %c0_i32_0 = arith.constant 0 : i32
    %c0_i32_1 = arith.constant 0 : i32
    return %arg0, %c0_i32, %c0_i32_0 : i32, i32, i32
  }
  func.func @transform_1(%arg0: i32) -> (i32, i32) {
    %c0_i32 = arith.constant 0 : i32
    %c0_i32_0 = arith.constant 0 : i32
    %c0_i32_1 = arith.constant 0 : i32
    return %c0_i32, %c0_i32_0 : i32, i32
  }
  func.func @transform_2(%arg0: i32) -> (i32, i32) {
    %c0_i32 = arith.constant 0 : i32
    %c0_i32_0 = arith.constant 0 : i32
    %c0_i32_1 = arith.constant 0 : i32
    return %c0_i32, %c0_i32_0 : i32, i32
  }
  func.func @transform_3(%arg0: i32) -> (i32, i32) {
    %c0_i32 = arith.constant 0 : i32
    %c0_i32_0 = arith.constant 0 : i32
    %c0_i32_1 = arith.constant 0 : i32
    return %c0_i32, %c0_i32_0 : i32, i32
  }
  func.func @transform_4(%arg0: i32) -> (i32, i32) {
    %c0_i32 = arith.constant 0 : i32
    %c0_i32_0 = arith.constant 0 : i32
    %c0_i32_1 = arith.constant 0 : i32
    return %c0_i32, %c0_i32_0 : i32, i32
  }
  func.func @transform_5(%arg0: i32) -> (i32, i32) {
    %c0_i32 = arith.constant 0 : i32
    %c0_i32_0 = arith.constant 0 : i32
    %c0_i32_1 = arith.constant 0 : i32
    return %c0_i32, %c0_i32_0 : i32, i32
  }
  func.func @transform_6(%arg0: i32) -> (i32, i32, i32) {
    %c0_i32 = arith.constant 0 : i32
    %c0_i32_0 = arith.constant 0 : i32
    %c0_i32_1 = arith.constant 0 : i32
    return %arg0, %c0_i32, %c0_i32_0 : i32, i32, i32
  }
}

</mosaic_0001>

<llo_original>
// kernel: basic_block.1
$region0: #{basic_block.1}
  #allocation0 [shape = 'u32[]', space=smem, size = 0x4, offset = 0x4, fixed_abs, tag = 'smem constant byte address 0x4 - core index']
  #allocation1 [shape = 'u32[144,128]{1,0:T(1,128)}', space=vmem, size = 0x12000, scoped, tag = 'internal scratch']
  #allocation2 [shape = 'f32[32,290]{1,0:T(8,128)}', space=vmem, size = 0xc000, scoped, tag = 'scratch operand']
  #allocation3 [shape = 'bf16[288,256]{1,0:T(8,128)(2,1)}', space=vmem, size = 0x24000, scoped, tag = 'scratch operand']
  %s0 = inlined_call_operand.vmem [shape: f32[2,32,256], index: 0, kind: input, shape index: {}]
  %s1 = inlined_call_operand.vmem [shape: bf16[32,288], index: 1, kind: input, shape index: {}]
  %s2 = inlined_call_operand.vmem [shape: f32[32,1], index: 2, kind: input, shape index: {}]
  %s3 = inlined_call_operand.vmem [shape: bf16[32,288], index: 3, kind: input, shape index: {}]
  %s4 = inlined_call_operand.vmem [shape: f32[32,1], index: 4, kind: input, shape index: {}]
  %s5 = inlined_call_operand.vmem [shape: f32[9,256], index: 5, kind: input, shape index: {}]
  %s6 = inlined_call_operand.vmem [shape: f32[2,32,256], index: 6, kind: output, shape index: {}]
  %s7 = sld [smem:[#allocation0]]
  $region57: #{basic_block.1} parent=0
    _
  %s9 = ssub.s32 1, %s7
  %s10 = scalar_select 0, %s9, %s7
  loop: start=0, step=1, limit=4
  $region2: #{basic_block.1} parent=0 // loop_pre_header
    _
  $region3: #{basic_block.1} parent=0 // loop_header
    %s12 = sphi 0, %s16
    %p13 = scmp.ge.s32.totalorder %s12, 4
    %s22 = sphi 0, %s24
    %s25 = sphi 0, %s22
    %s26 = sphi 0, %s25
    %s42 = sphi 0, %s26
    %s46 = sphi 0, %s46
    %s48 = sphi 0, %s46
    %s49 = sphi 0, %s48
    %s63 = sphi 0, %s49
    %s67 = sphi 0, %s67
    %s69 = sphi 0, %s67
    %s70 = sphi 0, %s69
    %s84 = sphi 0, %s70
    %s88 = sphi 0, %s88
    %s90 = sphi 0, %s88
    %s91 = sphi 0, %s90
    %s105 = sphi 0, %s91
    %s109 = sphi 0, %s109
    %s111 = sphi 0, %s109
    %s112 = sphi 0, %s111
    %s126 = sphi 0, %s112
    %s130 = sphi 0, %s130
    %s132 = sphi 0, %s130
    %s133 = sphi 0, %s132
    %s147 = sphi 0, %s133
    %s153 = sphi 0, %s155
    %s156 = sphi 0, %s153
    %s157 = sphi 0, %s156
    %s173 = sphi 0, %s157
  $region4: #{basic_block.1} parent=0 // loop_header_branch
    %15 = sbr.rel (%p13) target = $region8
  $region5: #{basic_block.1} parent=0 // loop_body
    %s17 = ssub.s32 %s12, 1
    %s18 = ssub.s32 %s12, 2
    %s19 = sadd.s32 %s12, 1
    %s20 = ssub.s32 %s12, %s19
    %p21 = scmp.eq.s32.totalorder %s20, 0
    %s23 = sadd.s32 %s22, 1
    %s24 = scalar_select %p21, %s22, %s23
    %p27 = pneg %p21
    %p28 = scmp.eq.s32.totalorder %s12, 1
    %p29 = por %p27, %p28
    %p30 = scmp.ne.s32.totalorder %s22, %s25
    %p31 = scmp.eq.s32.totalorder %s12, 0
    %p32 = por %p30, %p31
    %p33 = scmp.ne.s32.totalorder %s22, %s25
    %p34 = scmp.eq.s32.totalorder %s17, 1
    %p35 = por %p33, %p34
    %p36 = scmp.ne.s32.totalorder %s25, %s26
    %p37 = scmp.eq.s32.totalorder %s17, 0
    %p38 = por %p36, %p37
    %p39 = scmp.ne.s32.totalorder %s25, %s26
    %p40 = scmp.eq.s32.totalorder %s18, 1
    %p41 = por %p39, %p40
    %p43 = scmp.ne.s32.totalorder %s26, %s42
    %p44 = scmp.eq.s32.totalorder %s18, 0
    %p45 = por %p43, %p44
    %s47 = sadd.s32 %s46, 1
    %p50 = scmp.eq.s32.totalorder %s12, 1
    %p51 = scmp.ne.s32.totalorder %s46, %s48
    %p52 = scmp.eq.s32.totalorder %s12, 0
    %p53 = por %p51, %p52
    %p54 = scmp.ne.s32.totalorder %s46, %s48
    %p55 = scmp.eq.s32.totalorder %s17, 1
    %p56 = por %p54, %p55
    %p57 = scmp.ne.s32.totalorder %s48, %s49
    %p58 = scmp.eq.s32.totalorder %s17, 0
    %p59 = por %p57, %p58
    %p60 = scmp.ne.s32.totalorder %s48, %s49
    %p61 = scmp.eq.s32.totalorder %s18, 1
    %p62 = por %p60, %p61
    %p64 = scmp.ne.s32.totalorder %s49, %s63
    %p65 = scmp.eq.s32.totalorder %s18, 0
    %p66 = por %p64, %p65
    %s68 = sadd.s32 %s67, 1
    %p71 = scmp.eq.s32.totalorder %s12, 1
    %p72 = scmp.ne.s32.totalorder %s67, %s69
    %p73 = scmp.eq.s32.totalorder %s12, 0
    %p74 = por %p72, %p73
    %p75 = scmp.ne.s32.totalorder %s67, %s69
    %p76 = scmp.eq.s32.totalorder %s17, 1
    %p77 = por %p75, %p76
    %p78 = scmp.ne.s32.totalorder %s69, %s70
    %p79 = scmp.eq.s32.totalorder %s17, 0
    %p80 = por %p78, %p79
    %p81 = scmp.ne.s32.totalorder %s69, %s70
    %p82 = scmp.eq.s32.totalorder %s18, 1
    %p83 = por %p81, %p82
    %p85 = scmp.ne.s32.totalorder %s70, %s84
    %p86 = scmp.eq.s32.totalorder %s18, 0
    %p87 = por %p85, %p86
    %s89 = sadd.s32 %s88, 1
    %p92 = scmp.eq.s32.totalorder %s12, 1
    %p93 = scmp.ne.s32.totalorder %s88, %s90
    %p94 = scmp.eq.s32.totalorder %s12, 0
    %p95 = por %p93, %p94
    %p96 = scmp.ne.s32.totalorder %s88, %s90
    %p97 = scmp.eq.s32.totalorder %s17, 1
    %p98 = por %p96, %p97
    %p99 = scmp.ne.s32.totalorder %s90, %s91
    %p100 = scmp.eq.s32.totalorder %s17, 0
    %p101 = por %p99, %p100
    %p102 = scmp.ne.s32.totalorder %s90, %s91
    %p103 = scmp.eq.s32.totalorder %s18, 1
    %p104 = por %p102, %p103
    %p106 = scmp.ne.s32.totalorder %s91, %s105
    %p107 = scmp.eq.s32.totalorder %s18, 0
    %p108 = por %p106, %p107
    %s110 = sadd.s32 %s109, 1
    %p113 = scmp.eq.s32.totalorder %s12, 1
    %p114 = scmp.ne.s32.totalorder %s109, %s111
    %p115 = scmp.eq.s32.totalorder %s12, 0
    %p116 = por %p114, %p115
    %p117 = scmp.ne.s32.totalorder %s109, %s111
    %p118 = scmp.eq.s32.totalorder %s17, 1
    %p119 = por %p117, %p118
    %p120 = scmp.ne.s32.totalorder %s111, %s112
    %p121 = scmp.eq.s32.totalorder %s17, 0
    %p122 = por %p120, %p121
    %p123 = scmp.ne.s32.totalorder %s111, %s112
    %p124 = scmp.eq.s32.totalorder %s18, 1
    %p125 = por %p123, %p124
    %p127 = scmp.ne.s32.totalorder %s112, %s126
    %p128 = scmp.eq.s32.totalorder %s18, 0
    %p129 = por %p127, %p128
    %s131 = sadd.s32 %s130, 1
    %p134 = scmp.eq.s32.totalorder %s12, 1
    %p135 = scmp.ne.s32.totalorder %s130, %s132
    %p136 = scmp.eq.s32.totalorder %s12, 0
    %p137 = por %p135, %p136
    %p138 = scmp.ne.s32.totalorder %s130, %s132
    %p139 = scmp.eq.s32.totalorder %s17, 1
    %p140 = por %p138, %p139
    %p141 = scmp.ne.s32.totalorder %s132, %s133
    %p142 = scmp.eq.s32.totalorder %s17, 0
    %p143 = por %p141, %p142
    %p144 = scmp.ne.s32.totalorder %s132, %s133
    %p145 = scmp.eq.s32.totalorder %s18, 1
    %p146 = por %p144, %p145
    %p148 = scmp.ne.s32.totalorder %s133, %s147
    %p149 = scmp.eq.s32.totalorder %s18, 0
    %p150 = por %p148, %p149
    %s151 = ssub.s32 %s12, %s19
    %p152 = scmp.eq.s32.totalorder %s151, 0
    %s154 = sadd.s32 %s153, 1
    %s155 = scalar_select %p152, %s153, %s154
    %p158 = pneg %p152
    %p159 = scmp.eq.s32.totalorder %s12, 1
    %p160 = por %p158, %p159
    %p161 = scmp.ne.s32.totalorder %s153, %s156
    %p162 = scmp.eq.s32.totalorder %s12, 0
    %p163 = por %p161, %p162
    %p164 = scmp.ne.s32.totalorder %s153, %s156
    %p165 = scmp.eq.s32.totalorder %s17, 1
    %p166 = por %p164, %p165
    %p167 = scmp.ne.s32.totalorder %s156, %s157
    %p168 = scmp.eq.s32.totalorder %s17, 0
    %p169 = por %p167, %p168
    %p170 = scmp.ne.s32.totalorder %s156, %s157
    %p171 = scmp.eq.s32.totalorder %s18, 1
    %p172 = por %p170, %p171
    %p174 = scmp.ne.s32.totalorder %s157, %s173
    %p175 = scmp.eq.s32.totalorder %s18, 0
    %p176 = por %p174, %p175
    %p177 = scmp.le.s32.totalorder 1, %s12
    %p178 = scmp.lt.s32.totalorder %s12, 3
    %p179 = pnand %p177, %p178
    %p180 = pneg %p179
    // Predicated region
    $region9: #{basic_block.1} parent=5 // pred_check
      _
    $region10: #{basic_block.1} parent=5 // pred_check_branch
      %182 = sbr.rel (%p179) target = $region12
    $region11: #{basic_block.1} parent=5 // pred_region
      %s183 = ssub.s32 %s12, 1
      // Predicated region
      $region13: #{basic_block.1} parent=11 // pred_check
        %p184 = pneg %p59
      $region14: #{basic_block.1} parent=11 // pred_check_branch
        %186 = sbr.rel (%p184) target = $region16
      $region15: #{basic_block.1} parent=11 // pred_region
        _
      $region16: #{basic_block.1} parent=11 // pred_fallthru
        _
      // Predicated region
      $region17: #{basic_block.1} parent=11 // pred_check
        %p187 = pneg %p80
      $region18: #{basic_block.1} parent=11 // pred_check_branch
        %189 = sbr.rel (%p187) target = $region20
      $region19: #{basic_block.1} parent=11 // pred_region
        _
      $region20: #{basic_block.1} parent=11 // pred_fallthru
        _
      // Predicated region
      $region21: #{basic_block.1} parent=11 // pred_check
        %p190 = pneg %p101
      $region22: #{basic_block.1} parent=11 // pred_check_branch
        %192 = sbr.rel (%p190) target = $region24
      $region23: #{basic_block.1} parent=11 // pred_region
        _
      $region24: #{basic_block.1} parent=11 // pred_fallthru
        _
      // Predicated region
      $region25: #{basic_block.1} parent=11 // pred_check
        %p193 = pneg %p122
      $region26: #{basic_block.1} parent=11 // pred_check_branch
        %195 = sbr.rel (%p193) target = $region28
      $region27: #{basic_block.1} parent=11 // pred_region
        _
      $region28: #{basic_block.1} parent=11 // pred_fallthru
        _
      // Predicated region
      $region29: #{basic_block.1} parent=11 // pred_check
        %p196 = pneg %p143
      $region30: #{basic_block.1} parent=11 // pred_check_branch
        %198 = sbr.rel (%p196) target = $region32
      $region31: #{basic_block.1} parent=11 // pred_region
        _
      $region32: #{basic_block.1} parent=11 // pred_fallthru
        _
    $region12: #{basic_block.1} parent=5 // pred_fallthru
      _
    %p199 = scmp.lt.s32.totalorder %s12, 2
    // Predicated region
    $region33: #{basic_block.1} parent=5 // pred_check
      %p200 = pneg %p199
    $region34: #{basic_block.1} parent=5 // pred_check_branch
      %202 = sbr.rel (%p200) target = $region36
    $region35: #{basic_block.1} parent=5 // pred_region
      // Predicated region
      $region37: #{basic_block.1} parent=35 // pred_check
        %p203 = pneg %p32
      $region38: #{basic_block.1} parent=35 // pred_check_branch
        %205 = sbr.rel (%p203) target = $region40
      $region39: #{basic_block.1} parent=35 // pred_region
        %p206 = scmp.lt.s32.totalorder %s12, 1
        %s207 = scalar_select %p206, %s12, 1
        %s208 = smul.addr %s207, 8
        %s209 = smul.addr %s208, 8
        %s210 = scalar_lea.vmem %s0, %s209
      $region40: #{basic_block.1} parent=35 // pred_fallthru
        _
    $region36: #{basic_block.1} parent=5 // pred_fallthru
      _
    %p211 = scmp.le.s32.totalorder 1, %s12
    %p212 = scmp.lt.s32.totalorder %s12, 3
    %p213 = pnand %p211, %p212
    %p214 = pneg %p213
    // Predicated region
    $region41: #{basic_block.1} parent=5 // pred_check
      _
    $region42: #{basic_block.1} parent=5 // pred_check_branch
      %216 = sbr.rel (%p213) target = $region44
    $region43: #{basic_block.1} parent=5 // pred_region
      %s217 = ssub.s32 %s12, 1
      %p218 = scmp.lt.s32.totalorder %s17, 1
      %s219 = scalar_select %p218, %s17, 1
      %s220 = smul.addr %s219, 8
      %s221 = smul.addr %s220, 8
      %s222 = scalar_lea.vmem %s0, %s221
      %p223 = pneg %p38
      %p224 = pneg %p35
      %p225 = pneg %p59
      %p226 = pneg %p56
      %p227 = pneg %p80
      %p228 = pneg %p77
      %p229 = pneg %p101
      %p230 = pneg %p98
      %p231 = pneg %p122
      %p232 = pneg %p119
      %p233 = pneg %p143
      %p234 = pneg %p140
      %p235 = pneg %p169
      %p236 = pneg %p166
      %p237 = scmp.lt.s32.totalorder %s17, 1
      %s238 = scalar_select %p237, %s17, 1
      %s239 = smul.addr %s238, 8
      %s240 = smul.addr %s239, 8
      %s241 = scalar_lea.vmem %s6, %s240
      %p242 = scmp.lt.s32.totalorder %s17, 1
      %s243 = scalar_select %p242, %s17, 1
      %s244 = smul.addr %s243, 8
      %s245 = smul.addr %s244, 8
      %s246 = scalar_lea.vmem %s0, %s245
      %p247 = scmp.lt.s32.totalorder %s17, 1
      %s248 = scalar_select %p247, %s17, 1
      %s249 = smul.addr %s248, 8
      %s250 = smul.addr %s249, 8
      %s251 = scalar_lea.vmem %s6, %s250
      %vm253 = vcmask 138240
      %254 = vst.msk [vmem:[#allocation2] sm:$0xff] %vm253, 0.0
      %255 = vst.msk [vmem:[#allocation2 + $0x18] sm:$0xff] %vm253, 0.0
      %256 = vst.msk [vmem:[#allocation2 + $0x30] sm:$0xff] %vm253, 0.0
      %257 = vst.msk [vmem:[#allocation2 + $0x48] sm:$0xff] %vm253, 0.0
      %vm258 = vcmask 277640
      %259 = vst.msk [vmem:[#allocation2 + $0x10] sm:$0xff] %vm258, 0.0
      %260 = vst.msk [vmem:[#allocation2 + $0x28] sm:$0xff] %vm258, 0.0
      %261 = vst.msk [vmem:[#allocation2 + $0x40] sm:$0xff] %vm258, 0.0
      %262 = vst.msk [vmem:[#allocation2 + $0x58] sm:$0xff] %vm258, 0.0
      %v263 = vld [vmem:[%s246] sm:$0xff]
      %v264 = vld [vmem:[%s246 + $0x8] sm:$0xff]
      %v265 = vld [vmem:[%s246 + $0x10] sm:$0xff]
      %v266 = vld [vmem:[%s246 + $0x18] sm:$0xff]
      %v267 = vld [vmem:[%s246 + $0x20] sm:$0xff]
      %v268 = vld [vmem:[%s246 + $0x28] sm:$0xff]
      %v269 = vld [vmem:[%s246 + $0x30] sm:$0xff]
      %v270 = vld [vmem:[%s246 + $0x38] sm:$0xff]
      %279 = vrot.lane.b32.xlu0 %v263, 17
      %v280 = vpop.permute.xlu0 %279
      %281 = vrot.lane.b32.xlu0 %v264, 17
      %v282 = vpop.permute.xlu0 %281
      %283 = vrot.lane.b32.xlu0 %v265, 17
      %v284 = vpop.permute.xlu0 %283
      %285 = vrot.lane.b32.xlu0 %v266, 17
      %v286 = vpop.permute.xlu0 %285
      %287 = vrot.lane.b32.xlu0 %v267, 17
      %v288 = vpop.permute.xlu0 %287
      %289 = vrot.lane.b32.xlu0 %v268, 17
      %v290 = vpop.permute.xlu0 %289
      %291 = vrot.lane.b32.xlu0 %v269, 17
      %v292 = vpop.permute.xlu0 %291
      %293 = vrot.lane.b32.xlu0 %v270, 17
      %v294 = vpop.permute.xlu0 %293
      %v295 = vsel %vm253, %v280, %v282
      %v296 = vsel %vm253, %v284, %v286
      %v297 = vsel %vm253, %v288, %v290
      %v298 = vsel %vm253, %v292, %v294
      %vm311 = vcmask 1047688
      %312 = vst.msk [vmem:[#allocation2] sm:$0xff] %vm311, %v280
      %313 = vst [vmem:[#allocation2 + $0x8] sm:$0xff] %v295
      %314 = vst.msk [vmem:[#allocation2 + $0x10] sm:$0xff] %vm253, %v282
      %315 = vst.msk [vmem:[#allocation2 + $0x18] sm:$0xff] %vm311, %v284
      %316 = vst [vmem:[#allocation2 + $0x20] sm:$0xff] %v296
      %317 = vst.msk [vmem:[#allocation2 + $0x28] sm:$0xff] %vm253, %v286
      %318 = vst.msk [vmem:[#allocation2 + $0x30] sm:$0xff] %vm311, %v288
      %319 = vst [vmem:[#allocation2 + $0x38] sm:$0xff] %v297
      %320 = vst.msk [vmem:[#allocation2 + $0x40] sm:$0xff] %vm253, %v290
      %321 = vst.msk [vmem:[#allocation2 + $0x48] sm:$0xff] %vm311, %v292
      %322 = vst [vmem:[#allocation2 + $0x50] sm:$0xff] %v298
      %323 = vst.msk [vmem:[#allocation2 + $0x58] sm:$0xff] %vm253, %v294
      %v324 = vld [vmem:[#allocation2] sm:$0xff]
      %v325 = vld [vmem:[#allocation2 + $0x8] sm:$0xff]
      %v326 = vld [vmem:[#allocation2 + $0x18] sm:$0xff]
      %v327 = vld [vmem:[#allocation2 + $0x20] sm:$0xff]
      %v328 = vld [vmem:[#allocation2 + $0x30] sm:$0xff]
      %v329 = vld [vmem:[#allocation2 + $0x38] sm:$0xff]
      %v330 = vld [vmem:[#allocation2 + $0x48] sm:$0xff]
      %v331 = vld [vmem:[#allocation2 + $0x50] sm:$0xff]
      %v332 = vld [vmem:[%s5] ss:$8 sm:$0x3]
      %v334 = vlaneseq
      %v335 = vshrl.u32 %v334, 7
      %v336 = vsub.s32 0, %v335
      %v337 = vrot.slane %v332, %v336
      %v338 = vlaneseq
      %v339 = vshrl.u32 %v338, 7
      %v340 = vsub.s32 1, %v339
      %v341 = vrot.slane %v332, %v340
      %v344 = vmul.f32 %v324, %v337
      %v345 = vmul.f32 %v325, %v341
      %v346 = vmul.f32 %v326, %v337
      %v347 = vmul.f32 %v327, %v341
      %v348 = vmul.f32 %v328, %v337
      %v349 = vmul.f32 %v329, %v341
      %v350 = vmul.f32 %v330, %v337
      %v351 = vmul.f32 %v331, %v341
      %v352 = vpack.c.bf16 %v346, %v344
      %v353 = vpack.c.bf16 %v347, %v345
      %v354 = vpack.c.bf16 %v350, %v348
      %v355 = vpack.c.bf16 %v351, %v349
      %v360 = vunpack.c.l.b16 %v352
      %v361 = vunpack.c.l.b16 %v353
      %v362 = vunpack.c.h.b16 %v352
      %v363 = vunpack.c.h.b16 %v353
      %v364 = vunpack.c.l.b16 %v354
      %v365 = vunpack.c.l.b16 %v355
      %v366 = vunpack.c.h.b16 %v354
      %v367 = vunpack.c.h.b16 %v355
      %v368 = vpack.c.b16 %v361, %v360
      %v369 = vpack.c.b16 %v363, %v362
      %v370 = vpack.c.b16 %v365, %v364
      %v371 = vpack.c.b16 %v367, %v366
      %376 = vst [vmem:[#allocation3] sm:$0xff] %v368
      %377 = vst [vmem:[#allocation3 + $0x8] sm:$0xff] %v369
      %378 = vst [vmem:[#allocation3 + $0x10] sm:$0xff] %v370
      %379 = vst [vmem:[#allocation3 + $0x18] sm:$0xff] %v371
      %v380 = vld [vmem:[#allocation2] sm:$0xff]
      %v381 = vld [vmem:[#allocation2 + $0x8] sm:$0xff]
      %v382 = vld [vmem:[#allocation2 + $0x10] sm:$0xff]
      %v383 = vld [vmem:[#allocation2 + $0x18] sm:$0xff]
      %v384 = vld [vmem:[#allocation2 + $0x20] sm:$0xff]
      %v385 = vld [vmem:[#allocation2 + $0x28] sm:$0xff]
      %v386 = vld [vmem:[#allocation2 + $0x30] sm:$0xff]
      %v387 = vld [vmem:[#allocation2 + $0x38] sm:$0xff]
      %v388 = vld [vmem:[#allocation2 + $0x40] sm:$0xff]
      %v389 = vld [vmem:[#allocation2 + $0x48] sm:$0xff]
      %v390 = vld [vmem:[#allocation2 + $0x50] sm:$0xff]
      %v391 = vld [vmem:[#allocation2 + $0x58] sm:$0xff]
      %s392 = scalar_lea.vmem %s5, 1
      %v393 = vld [vmem:[%s392] ss:$8 sm:$0x3]
      %v395 = vlaneseq
      %v396 = vshrl.u32 %v395, 7
      %v397 = vsub.s32 0, %v396
      %v398 = vrot.slane %v393, %v397
      %v399 = vlaneseq
      %v400 = vshrl.u32 %v399, 7
      %v401 = vsub.s32 1, %v400
      %v402 = vrot.slane %v393, %v401
      %403 = vrot.lane.b32.xlu0 %v398, 1
      %v404 = vpop.permute.xlu0 %403
      %405 = vrot.lane.b32.xlu0 %v402, 1
      %v406 = vpop.permute.xlu0 %405
      %vm407 = vcmask 7168
      %v408 = vsel %vm407, %v404, %v406
      %v412 = vmul.f32 %v380, %v404
      %v413 = vmul.f32 %v381, %v408
      %v414 = vmul.f32 %v382, %v406
      %v415 = vmul.f32 %v383, %v404
      %v416 = vmul.f32 %v384, %v408
      %v417 = vmul.f32 %v385, %v406
      %v418 = vmul.f32 %v386, %v404
      %v419 = vmul.f32 %v387, %v408
      %v420 = vmul.f32 %v388, %v406
      %v421 = vmul.f32 %v389, %v404
      %v422 = vmul.f32 %v390, %v408
      %v423 = vmul.f32 %v391, %v406
      %v424 = vpack.c.bf16 %v415, %v412
      %v425 = vpack.c.bf16 %v416, %v413
      %v426 = vpack.c.bf16 %v417, %v414
      %v427 = vpack.c.bf16 %v421, %v418
      %v428 = vpack.c.bf16 %v422, %v419
      %v429 = vpack.c.bf16 %v423, %v420
      %v436 = vunpack.c.l.b16 %v424
      %v437 = vunpack.c.l.b16 %v425
      %v438 = vunpack.c.l.b16 %v426
      %v439 = vunpack.c.h.b16 %v424
      %v440 = vunpack.c.h.b16 %v425
      %v441 = vunpack.c.h.b16 %v426
      %v442 = vunpack.c.l.b16 %v427
      %v443 = vunpack.c.l.b16 %v428
      %v444 = vunpack.c.l.b16 %v429
      %v445 = vunpack.c.h.b16 %v427
      %v446 = vunpack.c.h.b16 %v428
      %v447 = vunpack.c.h.b16 %v429
      %v448 = vpack.c.b16 %v437, %v436
      %v449 = vpack.c.b16 %v438, %v438
      %v450 = vpack.c.b16 %v440, %v439
      %v451 = vpack.c.b16 %v441, %v441
      %v452 = vpack.c.b16 %v443, %v442
      %v453 = vpack.c.b16 %v444, %v444
      %v454 = vpack.c.b16 %v446, %v445
      %v455 = vpack.c.b16 %v447, %v447
      %456 = vrot.lane.b32.xlu0 %v448, 127
      %v457 = vpop.permute.xlu0 %456
      %458 = vrot.lane.b32.xlu0 %v449, 127
      %v459 = vpop.permute.xlu0 %458
      %460 = vrot.lane.b32.xlu0 %v450, 127
      %v461 = vpop.permute.xlu0 %460
      %462 = vrot.lane.b32.xlu0 %v451, 127
      %v463 = vpop.permute.xlu0 %462
      %464 = vrot.lane.b32.xlu0 %v452, 127
      %v465 = vpop.permute.xlu0 %464
      %466 = vrot.lane.b32.xlu0 %v453, 127
      %v467 = vpop.permute.xlu0 %466
      %468 = vrot.lane.b32.xlu0 %v454, 127
      %v469 = vpop.permute.xlu0 %468
      %470 = vrot.lane.b32.xlu0 %v455, 127
      %v471 = vpop.permute.xlu0 %470
      %v472 = vrot.slane %v457, 4
      %v473 = vrot.slane %v459, 4
      %v474 = vrot.slane %v461, 4
      %v475 = vrot.slane %v463, 4
      %v476 = vrot.slane %v465, 4
      %v477 = vrot.slane %v467, 4
      %v478 = vrot.slane %v469, 4
      %v479 = vrot.slane %v471, 4
      %vm480 = vcmask 1043456
      %v481 = vsel %vm480, %v472, %v473
      %vm482 = vcmask 1039360
      %v483 = vsel %vm482, %v457, %v481
      %v484 = vsel %vm480, %v474, %v475
      %v485 = vsel %vm482, %v461, %v484
      %v486 = vsel %vm480, %v476, %v477
      %v487 = vsel %vm482, %v465, %v486
      %v488 = vsel %vm480, %v478, %v479
      %v489 = vsel %vm482, %v469, %v488
      %494 = vst [vmem:[#allocation3 + $0x20] sm:$0xff] %v483
      %495 = vst [vmem:[#allocation3 + $0x28] sm:$0xff] %v485
      %496 = vst [vmem:[#allocation3 + $0x30] sm:$0xff] %v487
      %497 = vst [vmem:[#allocation3 + $0x38] sm:$0xff] %v489
      %v498 = vld [vmem:[#allocation2] sm:$0xff]
      %v499 = vld [vmem:[#allocation2 + $0x8] sm:$0xff]
      %v500 = vld [vmem:[#allocation2 + $0x10] sm:$0xff]
      %v501 = vld [vmem:[#allocation2 + $0x18] sm:$0xff]
      %v502 = vld [vmem:[#allocation2 + $0x20] sm:$0xff]
      %v503 = vld [vmem:[#allocation2 + $0x28] sm:$0xff]
      %v504 = vld [vmem:[#allocation2 + $0x30] sm:$0xff]
      %v505 = vld [vmem:[#allocation2 + $0x38] sm:$0xff]
      %v506 = vld [vmem:[#allocation2 + $0x40] sm:$0xff]
      %v507 = vld [vmem:[#allocation2 + $0x48] sm:$0xff]
      %v508 = vld [vmem:[#allocation2 + $0x50] sm:$0xff]
      %v509 = vld [vmem:[#allocation2 + $0x58] sm:$0xff]
      %s510 = scalar_lea.vmem %s5, 2
      %v511 = vld [vmem:[%s510] ss:$8 sm:$0x3]
      %v513 = vlaneseq
      %v514 = vshrl.u32 %v513, 7
      %v515 = vsub.s32 0, %v514
      %v516 = vrot.slane %v511, %v515
      %v517 = vlaneseq
      %v518 = vshrl.u32 %v517, 7
      %v519 = vsub.s32 1, %v518
      %v520 = vrot.slane %v511, %v519
      %521 = vrot.lane.b32.xlu0 %v516, 2
      %v522 = vpop.permute.xlu0 %521
      %523 = vrot.lane.b32.xlu0 %v520, 2
      %v524 = vpop.permute.xlu0 %523
      %vm525 = vcmask 15360
      %v526 = vsel %vm525, %v522, %v524
      %v530 = vmul.f32 %v498, %v522
      %v531 = vmul.f32 %v499, %v526
      %v532 = vmul.f32 %v500, %v524
      %v533 = vmul.f32 %v501, %v522
      %v534 = vmul.f32 %v502, %v526
      %v535 = vmul.f32 %v503, %v524
      %v536 = vmul.f32 %v504, %v522
      %v537 = vmul.f32 %v505, %v526
      %v538 = vmul.f32 %v506, %v524
      %v539 = vmul.f32 %v507, %v522
      %v540 = vmul.f32 %v508, %v526
      %v541 = vmul.f32 %v509, %v524
      %v542 = vpack.c.bf16 %v533, %v530
      %v543 = vpack.c.bf16 %v534, %v531
      %v544 = vpack.c.bf16 %v535, %v532
      %v545 = vpack.c.bf16 %v539, %v536
      %v546 = vpack.c.bf16 %v540, %v537
      %v547 = vpack.c.bf16 %v541, %v538
      %v554 = vunpack.c.l.b16 %v542
      %v555 = vunpack.c.l.b16 %v543
      %v556 = vunpack.c.l.b16 %v544
      %v557 = vunpack.c.h.b16 %v542
      %v558 = vunpack.c.h.b16 %v543
      %v559 = vunpack.c.h.b16 %v544
      %v560 = vunpack.c.l.b16 %v545
      %v561 = vunpack.c.l.b16 %v546
      %v562 = vunpack.c.l.b16 %v547
      %v563 = vunpack.c.h.b16 %v545
      %v564 = vunpack.c.h.b16 %v546
      %v565 = vunpack.c.h.b16 %v547
      %v566 = vpack.c.b16 %v555, %v554
      %v567 = vpack.c.b16 %v556, %v556
      %v568 = vpack.c.b16 %v558, %v557
      %v569 = vpack.c.b16 %v559, %v559
      %v570 = vpack.c.b16 %v561, %v560
      %v571 = vpack.c.b16 %v562, %v562
      %v572 = vpack.c.b16 %v564, %v563
      %v573 = vpack.c.b16 %v565, %v565
      %574 = vrot.lane.b32.xlu0 %v566, 126
      %v575 = vpop.permute.xlu0 %574
      %576 = vrot.lane.b32.xlu0 %v567, 126
      %v577 = vpop.permute.xlu0 %576
      %578 = vrot.lane.b32.xlu0 %v568, 126
      %v579 = vpop.permute.xlu0 %578
      %580 = vrot.lane.b32.xlu0 %v569, 126
      %v581 = vpop.permute.xlu0 %580
      %582 = vrot.lane.b32.xlu0 %v570, 126
      %v583 = vpop.permute.xlu0 %582
      %584 = vrot.lane.b32.xlu0 %v571, 126
      %v585 = vpop.permute.xlu0 %584
      %586 = vrot.lane.b32.xlu0 %v572, 126
      %v587 = vpop.permute.xlu0 %586
      %588 = vrot.lane.b32.xlu0 %v573, 126
      %v589 = vpop.permute.xlu0 %588
      %v590 = vrot.slane %v575, 4
      %v591 = vrot.slane %v577, 4
      %v592 = vrot.slane %v579, 4
      %v593 = vrot.slane %v581, 4
      %v594 = vrot.slane %v583, 4
      %v595 = vrot.slane %v585, 4
      %v596 = vrot.slane %v587, 4
      %v597 = vrot.slane %v589, 4
      %v598 = vsel %vm480, %v590, %v591
      %vm599 = vcmask 1031168
      %v600 = vsel %vm599, %v575, %v598
      %v601 = vsel %vm480, %v592, %v593
      %v602 = vsel %vm599, %v579, %v601
      %v603 = vsel %vm480, %v594, %v595
      %v604 = vsel %vm599, %v583, %v603
      %v605 = vsel %vm480, %v596, %v597
      %v606 = vsel %vm599, %v587, %v605
      %611 = vst [vmem:[#allocation3 + $0x40] sm:$0xff] %v600
      %612 = vst [vmem:[#allocation3 + $0x48] sm:$0xff] %v602
      %613 = vst [vmem:[#allocation3 + $0x50] sm:$0xff] %v604
      %614 = vst [vmem:[#allocation3 + $0x58] sm:$0xff] %v606
      %v615 = vld [vmem:[#allocation2] sm:$0xff]
      %v616 = vld [vmem:[#allocation2 + $0x8] sm:$0xff]
      %v617 = vld [vmem:[#allocation2 + $0x10] sm:$0xff]
      %v618 = vld [vmem:[#allocation2 + $0x18] sm:$0xff]
      %v619 = vld [vmem:[#allocation2 + $0x20] sm:$0xff]
      %v620 = vld [vmem:[#allocation2 + $0x28] sm:$0xff]
      %v621 = vld [vmem:[#allocation2 + $0x30] sm:$0xff]
      %v622 = vld [vmem:[#allocation2 + $0x38] sm:$0xff]
      %v623 = vld [vmem:[#allocation2 + $0x40] sm:$0xff]
      %v624 = vld [vmem:[#allocation2 + $0x48] sm:$0xff]
      %v625 = vld [vmem:[#allocation2 + $0x50] sm:$0xff]
      %v626 = vld [vmem:[#allocation2 + $0x58] sm:$0xff]
      %s627 = scalar_lea.vmem %s5, 3
      %v628 = vld [vmem:[%s627] ss:$8 sm:$0x3]
      %v630 = vlaneseq
      %v631 = vshrl.u32 %v630, 7
      %v632 = vsub.s32 0, %v631
      %v633 = vrot.slane %v628, %v632
      %v634 = vlaneseq
      %v635 = vshrl.u32 %v634, 7
      %v636 = vsub.s32 1, %v635
      %v637 = vrot.slane %v628, %v636
      %638 = vrot.lane.b32.xlu0 %v633, 16
      %v639 = vpop.permute.xlu0 %638
      %640 = vrot.lane.b32.xlu0 %v637, 16
      %v641 = vpop.permute.xlu0 %640
      %vm642 = vcmask 130048
      %v643 = vsel %vm642, %v639, %v641
      %v647 = vmul.f32 %v615, %v639
      %v648 = vmul.f32 %v616, %v643
      %v649 = vmul.f32 %v617, %v641
      %v650 = vmul.f32 %v618, %v639
      %v651 = vmul.f32 %v619, %v643
      %v652 = vmul.f32 %v620, %v641
      %v653 = vmul.f32 %v621, %v639
      %v654 = vmul.f32 %v622, %v643
      %v655 = vmul.f32 %v623, %v641
      %v656 = vmul.f32 %v624, %v639
      %v657 = vmul.f32 %v625, %v643
      %v658 = vmul.f32 %v626, %v641
      %v659 = vpack.c.bf16 %v650, %v647
      %v660 = vpack.c.bf16 %v651, %v648
      %v661 = vpack.c.bf16 %v652, %v649
      %v662 = vpack.c.bf16 %v656, %v653
      %v663 = vpack.c.bf16 %v657, %v654
      %v664 = vpack.c.bf16 %v658, %v655
      %v671 = vunpack.c.l.b16 %v659
      %v672 = vunpack.c.l.b16 %v660
      %v673 = vunpack.c.l.b16 %v661
      %v674 = vunpack.c.h.b16 %v659
      %v675 = vunpack.c.h.b16 %v660
      %v676 = vunpack.c.h.b16 %v661
      %v677 = vunpack.c.l.b16 %v662
      %v678 = vunpack.c.l.b16 %v663
      %v679 = vunpack.c.l.b16 %v664
      %v680 = vunpack.c.h.b16 %v662
      %v681 = vunpack.c.h.b16 %v663
      %v682 = vunpack.c.h.b16 %v664
      %v683 = vpack.c.b16 %v672, %v671
      %v684 = vpack.c.b16 %v673, %v673
      %v685 = vpack.c.b16 %v675, %v674
      %v686 = vpack.c.b16 %v676, %v676
      %v687 = vpack.c.b16 %v678, %v677
      %v688 = vpack.c.b16 %v679, %v679
      %v689 = vpack.c.b16 %v681, %v680
      %v690 = vpack.c.b16 %v682, %v682
      %691 = vrot.lane.b32.xlu0 %v683, 112
      %v692 = vpop.permute.xlu0 %691
      %693 = vrot.lane.b32.xlu0 %v684, 112
      %v694 = vpop.permute.xlu0 %693
      %695 = vrot.lane.b32.xlu0 %v685, 112
      %v696 = vpop.permute.xlu0 %695
      %697 = vrot.lane.b32.xlu0 %v686, 112
      %v698 = vpop.permute.xlu0 %697
      %699 = vrot.lane.b32.xlu0 %v687, 112
      %v700 = vpop.permute.xlu0 %699
      %701 = vrot.lane.b32.xlu0 %v688, 112
      %v702 = vpop.permute.xlu0 %701
      %703 = vrot.lane.b32.xlu0 %v689, 112
      %v704 = vpop.permute.xlu0 %703
      %705 = vrot.lane.b32.xlu0 %v690, 112
      %v706 = vpop.permute.xlu0 %705
      %v707 = vrot.slane %v692, 4
      %v708 = vrot.slane %v694, 4
      %v709 = vrot.slane %v696, 4
      %v710 = vrot.slane %v698, 4
      %v711 = vrot.slane %v700, 4
      %v712 = vrot.slane %v702, 4
      %v713 = vrot.slane %v704, 4
      %v714 = vrot.slane %v706, 4
      %v715 = vsel %vm480, %v707, %v708
      %vm716 = vcmask 916480
      %v717 = vsel %vm716, %v692, %v715
      %v718 = vsel %vm480, %v709, %v710
      %v719 = vsel %vm716, %v696, %v718
      %v720 = vsel %vm480, %v711, %v712
      %v721 = vsel %vm716, %v700, %v720
      %v722 = vsel %vm480, %v713, %v714
      %v723 = vsel %vm716, %v704, %v722
      %728 = vst [vmem:[#allocation3 + $0x60] sm:$0xff] %v717
      %729 = vst [vmem:[#allocation3 + $0x68] sm:$0xff] %v719
      %730 = vst [vmem:[#allocation3 + $0x70] sm:$0xff] %v721
      %731 = vst [vmem:[#allocation3 + $0x78] sm:$0xff] %v723
      %v732 = vld [vmem:[#allocation2] sm:$0xff]
      %v733 = vld [vmem:[#allocation2 + $0x8] sm:$0xff]
      %v734 = vld [vmem:[#allocation2 + $0x10] sm:$0xff]
      %v735 = vld [vmem:[#allocation2 + $0x18] sm:$0xff]
      %v736 = vld [vmem:[#allocation2 + $0x20] sm:$0xff]
      %v737 = vld [vmem:[#allocation2 + $0x28] sm:$0xff]
      %v738 = vld [vmem:[#allocation2 + $0x30] sm:$0xff]
      %v739 = vld [vmem:[#allocation2 + $0x38] sm:$0xff]
      %v740 = vld [vmem:[#allocation2 + $0x40] sm:$0xff]
      %v741 = vld [vmem:[#allocation2 + $0x48] sm:$0xff]
      %v742 = vld [vmem:[#allocation2 + $0x50] sm:$0xff]
      %v743 = vld [vmem:[#allocation2 + $0x58] sm:$0xff]
      %s744 = scalar_lea.vmem %s5, 4
      %v745 = vld [vmem:[%s744] ss:$8 sm:$0x3]
      %v747 = vlaneseq
      %v748 = vshrl.u32 %v747, 7
      %v749 = vsub.s32 0, %v748
      %v750 = vrot.slane %v745, %v749
      %v751 = vlaneseq
      %v752 = vshrl.u32 %v751, 7
      %v753 = vsub.s32 1, %v752
      %v754 = vrot.slane %v745, %v753
      %755 = vrot.lane.b32.xlu0 %v750, 17
      %v756 = vpop.permute.xlu0 %755
      %757 = vrot.lane.b32.xlu0 %v754, 17
      %v758 = vpop.permute.xlu0 %757
      %v759 = vsel %vm253, %v756, %v758
      %v763 = vmul.f32 %v732, %v756
      %v764 = vmul.f32 %v733, %v759
      %v765 = vmul.f32 %v734, %v758
      %v766 = vmul.f32 %v735, %v756
      %v767 = vmul.f32 %v736, %v759
      %v768 = vmul.f32 %v737, %v758
      %v769 = vmul.f32 %v738, %v756
      %v770 = vmul.f32 %v739, %v759
      %v771 = vmul.f32 %v740, %v758
      %v772 = vmul.f32 %v741, %v756
      %v773 = vmul.f32 %v742, %v759
      %v774 = vmul.f32 %v743, %v758
      %v775 = vpack.c.bf16 %v766, %v763
      %v776 = vpack.c.bf16 %v767, %v764
      %v777 = vpack.c.bf16 %v768, %v765
      %v778 = vpack.c.bf16 %v772, %v769
      %v779 = vpack.c.bf16 %v773, %v770
      %v780 = vpack.c.bf16 %v774, %v771
      %v787 = vunpack.c.l.b16 %v775
      %v788 = vunpack.c.l.b16 %v776
      %v789 = vunpack.c.l.b16 %v777
      %v790 = vunpack.c.h.b16 %v775
      %v791 = vunpack.c.h.b16 %v776
      %v792 = vunpack.c.h.b16 %v777
      %v793 = vunpack.c.l.b16 %v778
      %v794 = vunpack.c.l.b16 %v779
      %v795 = vunpack.c.l.b16 %v780
      %v796 = vunpack.c.h.b16 %v778
      %v797 = vunpack.c.h.b16 %v779
      %v798 = vunpack.c.h.b16 %v780
      %v799 = vpack.c.b16 %v788, %v787
      %v800 = vpack.c.b16 %v789, %v789
      %v801 = vpack.c.b16 %v791, %v790
      %v802 = vpack.c.b16 %v792, %v792
      %v803 = vpack.c.b16 %v794, %v793
      %v804 = vpack.c.b16 %v795, %v795
      %v805 = vpack.c.b16 %v797, %v796
      %v806 = vpack.c.b16 %v798, %v798
      %807 = vrot.lane.b32.xlu0 %v799, 111
      %v808 = vpop.permute.xlu0 %807
      %809 = vrot.lane.b32.xlu0 %v800, 111
      %v810 = vpop.permute.xlu0 %809
      %811 = vrot.lane.b32.xlu0 %v801, 111
      %v812 = vpop.permute.xlu0 %811
      %813 = vrot.lane.b32.xlu0 %v802, 111
      %v814 = vpop.permute.xlu0 %813
      %815 = vrot.lane.b32.xlu0 %v803, 111
      %v816 = vpop.permute.xlu0 %815
      %817 = vrot.lane.b32.xlu0 %v804, 111
      %v818 = vpop.permute.xlu0 %817
      %819 = vrot.lane.b32.xlu0 %v805, 111
      %v820 = vpop.permute.xlu0 %819
      %821 = vrot.lane.b32.xlu0 %v806, 111
      %v822 = vpop.permute.xlu0 %821
      %v823 = vrot.slane %v808, 4
      %v824 = vrot.slane %v810, 4
      %v825 = vrot.slane %v812, 4
      %v826 = vrot.slane %v814, 4
      %v827 = vrot.slane %v816, 4
      %v828 = vrot.slane %v818, 4
      %v829 = vrot.slane %v820, 4
      %v830 = vrot.slane %v822, 4
      %v831 = vsel %vm480, %v823, %v824
      %vm832 = vcmask 908288
      %v833 = vsel %vm832, %v808, %v831
      %v834 = vsel %vm480, %v825, %v826
      %v835 = vsel %vm832, %v812, %v834
      %v836 = vsel %vm480, %v827, %v828
      %v837 = vsel %vm832, %v816, %v836
      %v838 = vsel %vm480, %v829, %v830
      %v839 = vsel %vm832, %v820, %v838
      %844 = vst [vmem:[#allocation3 + $0x80] sm:$0xff] %v833
      %845 = vst [vmem:[#allocation3 + $0x88] sm:$0xff] %v835
      %846 = vst [vmem:[#allocation3 + $0x90] sm:$0xff] %v837
      %847 = vst [vmem:[#allocation3 + $0x98] sm:$0xff] %v839
      %v848 = vld [vmem:[#allocation2] sm:$0xff]
      %v849 = vld [vmem:[#allocation2 + $0x8] sm:$0xff]
      %v850 = vld [vmem:[#allocation2 + $0x10] sm:$0xff]
      %v851 = vld [vmem:[#allocation2 + $0x18] sm:$0xff]
      %v852 = vld [vmem:[#allocation2 + $0x20] sm:$0xff]
      %v853 = vld [vmem:[#allocation2 + $0x28] sm:$0xff]
      %v854 = vld [vmem:[#allocation2 + $0x30] sm:$0xff]
      %v855 = vld [vmem:[#allocation2 + $0x38] sm:$0xff]
      %v856 = vld [vmem:[#allocation2 + $0x40] sm:$0xff]
      %v857 = vld [vmem:[#allocation2 + $0x48] sm:$0xff]
      %v858 = vld [vmem:[#allocation2 + $0x50] sm:$0xff]
      %v859 = vld [vmem:[#allocation2 + $0x58] sm:$0xff]
      %s860 = scalar_lea.vmem %s5, 5
      %v861 = vld [vmem:[%s860] ss:$8 sm:$0x3]
      %v863 = vlaneseq
      %v864 = vshrl.u32 %v863, 7
      %v865 = vsub.s32 0, %v864
      %v866 = vrot.slane %v861, %v865
      %v867 = vlaneseq
      %v868 = vshrl.u32 %v867, 7
      %v869 = vsub.s32 1, %v868
      %v870 = vrot.slane %v861, %v869
      %871 = vrot.lane.b32.xlu0 %v866, 18
      %v872 = vpop.permute.xlu0 %871
      %873 = vrot.lane.b32.xlu0 %v870, 18
      %v874 = vpop.permute.xlu0 %873
      %vm875 = vcmask 146432
      %v876 = vsel %vm875, %v872, %v874
      %v880 = vmul.f32 %v848, %v872
      %v881 = vmul.f32 %v849, %v876
      %v882 = vmul.f32 %v850, %v874
      %v883 = vmul.f32 %v851, %v872
      %v884 = vmul.f32 %v852, %v876
      %v885 = vmul.f32 %v853, %v874
      %v886 = vmul.f32 %v854, %v872
      %v887 = vmul.f32 %v855, %v876
      %v888 = vmul.f32 %v856, %v874
      %v889 = vmul.f32 %v857, %v872
      %v890 = vmul.f32 %v858, %v876
      %v891 = vmul.f32 %v859, %v874
      %v892 = vpack.c.bf16 %v883, %v880
      %v893 = vpack.c.bf16 %v884, %v881
      %v894 = vpack.c.bf16 %v885, %v882
      %v895 = vpack.c.bf16 %v889, %v886
      %v896 = vpack.c.bf16 %v890, %v887
      %v897 = vpack.c.bf16 %v891, %v888
      %v904 = vunpack.c.l.b16 %v892
      %v905 = vunpack.c.l.b16 %v893
      %v906 = vunpack.c.l.b16 %v894
      %v907 = vunpack.c.h.b16 %v892
      %v908 = vunpack.c.h.b16 %v893
      %v909 = vunpack.c.h.b16 %v894
      %v910 = vunpack.c.l.b16 %v895
      %v911 = vunpack.c.l.b16 %v896
      %v912 = vunpack.c.l.b16 %v897
      %v913 = vunpack.c.h.b16 %v895
      %v914 = vunpack.c.h.b16 %v896
      %v915 = vunpack.c.h.b16 %v897
      %v916 = vpack.c.b16 %v905, %v904
      %v917 = vpack.c.b16 %v906, %v906
      %v918 = vpack.c.b16 %v908, %v907
      %v919 = vpack.c.b16 %v909, %v909
      %v920 = vpack.c.b16 %v911, %v910
      %v921 = vpack.c.b16 %v912, %v912
      %v922 = vpack.c.b16 %v914, %v913
      %v923 = vpack.c.b16 %v915, %v915
      %924 = vrot.lane.b32.xlu0 %v916, 110
      %v925 = vpop.permute.xlu0 %924
      %926 = vrot.lane.b32.xlu0 %v917, 110
      %v927 = vpop.permute.xlu0 %926
      %928 = vrot.lane.b32.xlu0 %v918, 110
      %v929 = vpop.permute.xlu0 %928
      %930 = vrot.lane.b32.xlu0 %v919, 110
      %v931 = vpop.permute.xlu0 %930
      %932 = vrot.lane.b32.xlu0 %v920, 110
      %v933 = vpop.permute.xlu0 %932
      %934 = vrot.lane.b32.xlu0 %v921, 110
      %v935 = vpop.permute.xlu0 %934
      %936 = vrot.lane.b32.xlu0 %v922, 110
      %v937 = vpop.permute.xlu0 %936
      %938 = vrot.lane.b32.xlu0 %v923, 110
      %v939 = vpop.permute.xlu0 %938
      %v940 = vrot.slane %v925, 4
      %v941 = vrot.slane %v927, 4
      %v942 = vrot.slane %v929, 4
      %v943 = vrot.slane %v931, 4
      %v944 = vrot.slane %v933, 4
      %v945 = vrot.slane %v935, 4
      %v946 = vrot.slane %v937, 4
      %v947 = vrot.slane %v939, 4
      %v948 = vsel %vm480, %v940, %v941
      %vm949 = vcmask 900096
      %v950 = vsel %vm949, %v925, %v948
      %v951 = vsel %vm480, %v942, %v943
      %v952 = vsel %vm949, %v929, %v951
      %v953 = vsel %vm480, %v944, %v945
      %v954 = vsel %vm949, %v933, %v953
      %v955 = vsel %vm480, %v946, %v947
      %v956 = vsel %vm949, %v937, %v955
      %961 = vst [vmem:[#allocation3 + $0xa0] sm:$0xff] %v950
      %962 = vst [vmem:[#allocation3 + $0xa8] sm:$0xff] %v952
      %963 = vst [vmem:[#allocation3 + $0xb0] sm:$0xff] %v954
      %964 = vst [vmem:[#allocation3 + $0xb8] sm:$0xff] %v956
      %v965 = vld [vmem:[#allocation2] sm:$0xff]
      %v966 = vld [vmem:[#allocation2 + $0x8] sm:$0xff]
      %v967 = vld [vmem:[#allocation2 + $0x10] sm:$0xff]
      %v968 = vld [vmem:[#allocation2 + $0x18] sm:$0xff]
      %v969 = vld [vmem:[#allocation2 + $0x20] sm:$0xff]
      %v970 = vld [vmem:[#allocation2 + $0x28] sm:$0xff]
      %v971 = vld [vmem:[#allocation2 + $0x30] sm:$0xff]
      %v972 = vld [vmem:[#allocation2 + $0x38] sm:$0xff]
      %v973 = vld [vmem:[#allocation2 + $0x40] sm:$0xff]
      %v974 = vld [vmem:[#allocation2 + $0x48] sm:$0xff]
      %v975 = vld [vmem:[#allocation2 + $0x50] sm:$0xff]
      %v976 = vld [vmem:[#allocation2 + $0x58] sm:$0xff]
      %s977 = scalar_lea.vmem %s5, 6
      %v978 = vld [vmem:[%s977] ss:$8 sm:$0x3]
      %v980 = vlaneseq
      %v981 = vshrl.u32 %v980, 7
      %v982 = vsub.s32 0, %v981
      %v983 = vrot.slane %v978, %v982
      %v984 = vlaneseq
      %v985 = vshrl.u32 %v984, 7
      %v986 = vsub.s32 1, %v985
      %v987 = vrot.slane %v978, %v986
      %988 = vrot.lane.b32.xlu0 %v983, 32
      %v989 = vpop.permute.xlu0 %988
      %990 = vrot.lane.b32.xlu0 %v987, 32
      %v991 = vpop.permute.xlu0 %990
      %vm992 = vcmask 261120
      %v993 = vsel %vm992, %v989, %v991
      %v997 = vmul.f32 %v965, %v989
      %v998 = vmul.f32 %v966, %v993
      %v999 = vmul.f32 %v967, %v991
      %v1000 = vmul.f32 %v968, %v989
      %v1001 = vmul.f32 %v969, %v993
      %v1002 = vmul.f32 %v970, %v991
      %v1003 = vmul.f32 %v971, %v989
      %v1004 = vmul.f32 %v972, %v993
      %v1005 = vmul.f32 %v973, %v991
      %v1006 = vmul.f32 %v974, %v989
      %v1007 = vmul.f32 %v975, %v993
      %v1008 = vmul.f32 %v976, %v991
      %v1009 = vpack.c.bf16 %v1000, %v997
      %v1010 = vpack.c.bf16 %v1001, %v998
      %v1011 = vpack.c.bf16 %v1002, %v999
      %v1012 = vpack.c.bf16 %v1006, %v1003
      %v1013 = vpack.c.bf16 %v1007, %v1004
      %v1014 = vpack.c.bf16 %v1008, %v1005
      %v1021 = vunpack.c.l.b16 %v1009
      %v1022 = vunpack.c.l.b16 %v1010
      %v1023 = vunpack.c.l.b16 %v1011
      %v1024 = vunpack.c.h.b16 %v1009
      %v1025 = vunpack.c.h.b16 %v1010
      %v1026 = vunpack.c.h.b16 %v1011
      %v1027 = vunpack.c.l.b16 %v1012
      %v1028 = vunpack.c.l.b16 %v1013
      %v1029 = vunpack.c.l.b16 %v1014
      %v1030 = vunpack.c.h.b16 %v1012
      %v1031 = vunpack.c.h.b16 %v1013
      %v1032 = vunpack.c.h.b16 %v1014
      %v1033 = vpack.c.b16 %v1022, %v1021
      %v1034 = vpack.c.b16 %v1023, %v1023
      %v1035 = vpack.c.b16 %v1025, %v1024
      %v1036 = vpack.c.b16 %v1026, %v1026
      %v1037 = vpack.c.b16 %v1028, %v1027
      %v1038 = vpack.c.b16 %v1029, %v1029
      %v1039 = vpack.c.b16 %v1031, %v1030
      %v1040 = vpack.c.b16 %v1032, %v1032
      %1041 = vrot.lane.b32.xlu0 %v1033, 96
      %v1042 = vpop.permute.xlu0 %1041
      %1043 = vrot.lane.b32.xlu0 %v1034, 96
      %v1044 = vpop.permute.xlu0 %1043
      %1045 = vrot.lane.b32.xlu0 %v1035, 96
      %v1046 = vpop.permute.xlu0 %1045
      %1047 = vrot.lane.b32.xlu0 %v1036, 96
      %v1048 = vpop.permute.xlu0 %1047
      %1049 = vrot.lane.b32.xlu0 %v1037, 96
      %v1050 = vpop.permute.xlu0 %1049
      %1051 = vrot.lane.b32.xlu0 %v1038, 96
      %v1052 = vpop.permute.xlu0 %1051
      %1053 = vrot.lane.b32.xlu0 %v1039, 96
      %v1054 = vpop.permute.xlu0 %1053
      %1055 = vrot.lane.b32.xlu0 %v1040, 96
      %v1056 = vpop.permute.xlu0 %1055
      %v1057 = vrot.slane %v1042, 4
      %v1058 = vrot.slane %v1044, 4
      %v1059 = vrot.slane %v1046, 4
      %v1060 = vrot.slane %v1048, 4
      %v1061 = vrot.slane %v1050, 4
      %v1062 = vrot.slane %v1052, 4
      %v1063 = vrot.slane %v1054, 4
      %v1064 = vrot.slane %v1056, 4
      %v1065 = vsel %vm480, %v1057, %v1058
      %vm1066 = vcmask 785408
      %v1067 = vsel %vm1066, %v1042, %v1065
      %v1068 = vsel %vm480, %v1059, %v1060
      %v1069 = vsel %vm1066, %v1046, %v1068
      %v1070 = vsel %vm480, %v1061, %v1062
      %v1071 = vsel %vm1066, %v1050, %v1070
      %v1072 = vsel %vm480, %v1063, %v1064
      %v1073 = vsel %vm1066, %v1054, %v1072
      %1078 = vst [vmem:[#allocation3 + $0xc0] sm:$0xff] %v1067
      %1079 = vst [vmem:[#allocation3 + $0xc8] sm:$0xff] %v1069
      %1080 = vst [vmem:[#allocation3 + $0xd0] sm:$0xff] %v1071
      %1081 = vst [vmem:[#allocation3 + $0xd8] sm:$0xff] %v1073
      %v1082 = vld [vmem:[#allocation2] sm:$0xff]
      %v1083 = vld [vmem:[#allocation2 + $0x8] sm:$0xff]
      %v1084 = vld [vmem:[#allocation2 + $0x10] sm:$0xff]
      %v1085 = vld [vmem:[#allocation2 + $0x18] sm:$0xff]
      %v1086 = vld [vmem:[#allocation2 + $0x20] sm:$0xff]
      %v1087 = vld [vmem:[#allocation2 + $0x28] sm:$0xff]
      %v1088 = vld [vmem:[#allocation2 + $0x30] sm:$0xff]
      %v1089 = vld [vmem:[#allocation2 + $0x38] sm:$0xff]
      %v1090 = vld [vmem:[#allocation2 + $0x40] sm:$0xff]
      %v1091 = vld [vmem:[#allocation2 + $0x48] sm:$0xff]
      %v1092 = vld [vmem:[#allocation2 + $0x50] sm:$0xff]
      %v1093 = vld [vmem:[#allocation2 + $0x58] sm:$0xff]
      %s1094 = scalar_lea.vmem %s5, 7
      %v1095 = vld [vmem:[%s1094] ss:$8 sm:$0x3]
      %v1097 = vlaneseq
      %v1098 = vshrl.u32 %v1097, 7
      %v1099 = vsub.s32 0, %v1098
      %v1100 = vrot.slane %v1095, %v1099
      %v1101 = vlaneseq
      %v1102 = vshrl.u32 %v1101, 7
      %v1103 = vsub.s32 1, %v1102
      %v1104 = vrot.slane %v1095, %v1103
      %1105 = vrot.lane.b32.xlu0 %v1100, 33
      %v1106 = vpop.permute.xlu0 %1105
      %1107 = vrot.lane.b32.xlu0 %v1104, 33
      %v1108 = vpop.permute.xlu0 %1107
      %vm1109 = vcmask 269312
      %v1110 = vsel %vm1109, %v1106, %v1108
      %v1114 = vmul.f32 %v1082, %v1106
      %v1115 = vmul.f32 %v1083, %v1110
      %v1116 = vmul.f32 %v1084, %v1108
      %v1117 = vmul.f32 %v1085, %v1106
      %v1118 = vmul.f32 %v1086, %v1110
      %v1119 = vmul.f32 %v1087, %v1108
      %v1120 = vmul.f32 %v1088, %v1106
      %v1121 = vmul.f32 %v1089, %v1110
      %v1122 = vmul.f32 %v1090, %v1108
      %v1123 = vmul.f32 %v1091, %v1106
      %v1124 = vmul.f32 %v1092, %v1110
      %v1125 = vmul.f32 %v1093, %v1108
      %v1126 = vpack.c.bf16 %v1117, %v1114
      %v1127 = vpack.c.bf16 %v1118, %v1115
      %v1128 = vpack.c.bf16 %v1119, %v1116
      %v1129 = vpack.c.bf16 %v1123, %v1120
      %v1130 = vpack.c.bf16 %v1124, %v1121
      %v1131 = vpack.c.bf16 %v1125, %v1122
      %v1138 = vunpack.c.l.b16 %v1126
      %v1139 = vunpack.c.l.b16 %v1127
      %v1140 = vunpack.c.l.b16 %v1128
      %v1141 = vunpack.c.h.b16 %v1126
      %v1142 = vunpack.c.h.b16 %v1127
      %v1143 = vunpack.c.h.b16 %v1128
      %v1144 = vunpack.c.l.b16 %v1129
      %v1145 = vunpack.c.l.b16 %v1130
      %v1146 = vunpack.c.l.b16 %v1131
      %v1147 = vunpack.c.h.b16 %v1129
      %v1148 = vunpack.c.h.b16 %v1130
      %v1149 = vunpack.c.h.b16 %v1131
      %v1150 = vpack.c.b16 %v1139, %v1138
      %v1151 = vpack.c.b16 %v1140, %v1140
      %v1152 = vpack.c.b16 %v1142, %v1141
      %v1153 = vpack.c.b16 %v1143, %v1143
      %v1154 = vpack.c.b16 %v1145, %v1144
      %v1155 = vpack.c.b16 %v1146, %v1146
      %v1156 = vpack.c.b16 %v1148, %v1147
      %v1157 = vpack.c.b16 %v1149, %v1149
      %1158 = vrot.lane.b32.xlu0 %v1150, 95
      %v1159 = vpop.permute.xlu0 %1158
      %1160 = vrot.lane.b32.xlu0 %v1151, 95
      %v1161 = vpop.permute.xlu0 %1160
      %1162 = vrot.lane.b32.xlu0 %v1152, 95
      %v1163 = vpop.permute.xlu0 %1162
      %1164 = vrot.lane.b32.xlu0 %v1153, 95
      %v1165 = vpop.permute.xlu0 %1164
      %1166 = vrot.lane.b32.xlu0 %v1154, 95
      %v1167 = vpop.permute.xlu0 %1166
      %1168 = vrot.lane.b32.xlu0 %v1155, 95
      %v1169 = vpop.permute.xlu0 %1168
      %1170 = vrot.lane.b32.xlu0 %v1156, 95
      %v1171 = vpop.permute.xlu0 %1170
      %1172 = vrot.lane.b32.xlu0 %v1157, 95
      %v1173 = vpop.permute.xlu0 %1172
      %v1174 = vrot.slane %v1159, 4
      %v1175 = vrot.slane %v1161, 4
      %v1176 = vrot.slane %v1163, 4
      %v1177 = vrot.slane %v1165, 4
      %v1178 = vrot.slane %v1167, 4
      %v1179 = vrot.slane %v1169, 4
      %v1180 = vrot.slane %v1171, 4
      %v1181 = vrot.slane %v1173, 4
      %v1182 = vsel %vm480, %v1174, %v1175
      %vm1183 = vcmask 777216
      %v1184 = vsel %vm1183, %v1159, %v1182
      %v1185 = vsel %vm480, %v1176, %v1177
      %v1186 = vsel %vm1183, %v1163, %v1185
      %v1187 = vsel %vm480, %v1178, %v1179
      %v1188 = vsel %vm1183, %v1167, %v1187
      %v1189 = vsel %vm480, %v1180, %v1181
      %v1190 = vsel %vm1183, %v1171, %v1189
      %1195 = vst [vmem:[#allocation3 + $0xe0] sm:$0xff] %v1184
      %1196 = vst [vmem:[#allocation3 + $0xe8] sm:$0xff] %v1186
      %1197 = vst [vmem:[#allocation3 + $0xf0] sm:$0xff] %v1188
      %1198 = vst [vmem:[#allocation3 + $0xf8] sm:$0xff] %v1190
      %v1199 = vld [vmem:[#allocation2] sm:$0xff]
      %v1200 = vld [vmem:[#allocation2 + $0x8] sm:$0xff]
      %v1201 = vld [vmem:[#allocation2 + $0x10] sm:$0xff]
      %v1202 = vld [vmem:[#allocation2 + $0x18] sm:$0xff]
      %v1203 = vld [vmem:[#allocation2 + $0x20] sm:$0xff]
      %v1204 = vld [vmem:[#allocation2 + $0x28] sm:$0xff]
      %v1205 = vld [vmem:[#allocation2 + $0x30] sm:$0xff]
      %v1206 = vld [vmem:[#allocation2 + $0x38] sm:$0xff]
      %v1207 = vld [vmem:[#allocation2 + $0x40] sm:$0xff]
      %v1208 = vld [vmem:[#allocation2 + $0x48] sm:$0xff]
      %v1209 = vld [vmem:[#allocation2 + $0x50] sm:$0xff]
      %v1210 = vld [vmem:[#allocation2 + $0x58] sm:$0xff]
      %s1211 = scalar_lea.vmem %s5, 16
      %v1212 = vld [vmem:[%s1211] ss:$8 sm:$0x3]
      %v1214 = vlaneseq
      %v1215 = vshrl.u32 %v1214, 7
      %v1216 = vsub.s32 0, %v1215
      %v1217 = vrot.slane %v1212, %v1216
      %v1218 = vlaneseq
      %v1219 = vshrl.u32 %v1218, 7
      %v1220 = vsub.s32 1, %v1219
      %v1221 = vrot.slane %v1212, %v1220
      %1222 = vrot.lane.b32.xlu0 %v1217, 34
      %v1223 = vpop.permute.xlu0 %1222
      %1224 = vrot.lane.b32.xlu0 %v1221, 34
      %v1225 = vpop.permute.xlu0 %1224
      %vm1226 = vcmask 277504
      %v1227 = vsel %vm1226, %v1223, %v1225
      %v1231 = vmul.f32 %v1199, %v1223
      %v1232 = vmul.f32 %v1200, %v1227
      %v1233 = vmul.f32 %v1201, %v1225
      %v1234 = vmul.f32 %v1202, %v1223
      %v1235 = vmul.f32 %v1203, %v1227
      %v1236 = vmul.f32 %v1204, %v1225
      %v1237 = vmul.f32 %v1205, %v1223
      %v1238 = vmul.f32 %v1206, %v1227
      %v1239 = vmul.f32 %v1207, %v1225
      %v1240 = vmul.f32 %v1208, %v1223
      %v1241 = vmul.f32 %v1209, %v1227
      %v1242 = vmul.f32 %v1210, %v1225
      %v1243 = vpack.c.bf16 %v1234, %v1231
      %v1244 = vpack.c.bf16 %v1235, %v1232
      %v1245 = vpack.c.bf16 %v1236, %v1233
      %v1246 = vpack.c.bf16 %v1240, %v1237
      %v1247 = vpack.c.bf16 %v1241, %v1238
      %v1248 = vpack.c.bf16 %v1242, %v1239
      %v1255 = vunpack.c.l.b16 %v1243
      %v1256 = vunpack.c.l.b16 %v1244
      %v1257 = vunpack.c.l.b16 %v1245
      %v1258 = vunpack.c.h.b16 %v1243
      %v1259 = vunpack.c.h.b16 %v1244
      %v1260 = vunpack.c.h.b16 %v1245
      %v1261 = vunpack.c.l.b16 %v1246
      %v1262 = vunpack.c.l.b16 %v1247
      %v1263 = vunpack.c.l.b16 %v1248
      %v1264 = vunpack.c.h.b16 %v1246
      %v1265 = vunpack.c.h.b16 %v1247
      %v1266 = vunpack.c.h.b16 %v1248
      %v1267 = vpack.c.b16 %v1256, %v1255
      %v1268 = vpack.c.b16 %v1257, %v1257
      %v1269 = vpack.c.b16 %v1259, %v1258
      %v1270 = vpack.c.b16 %v1260, %v1260
      %v1271 = vpack.c.b16 %v1262, %v1261
      %v1272 = vpack.c.b16 %v1263, %v1263
      %v1273 = vpack.c.b16 %v1265, %v1264
      %v1274 = vpack.c.b16 %v1266, %v1266
      %1275 = vrot.lane.b32.xlu0 %v1267, 94
      %v1276 = vpop.permute.xlu0 %1275
      %1277 = vrot.lane.b32.xlu0 %v1268, 94
      %v1278 = vpop.permute.xlu0 %1277
      %1279 = vrot.lane.b32.xlu0 %v1269, 94
      %v1280 = vpop.permute.xlu0 %1279
      %1281 = vrot.lane.b32.xlu0 %v1270, 94
      %v1282 = vpop.permute.xlu0 %1281
      %1283 = vrot.lane.b32.xlu0 %v1271, 94
      %v1284 = vpop.permute.xlu0 %1283
      %1285 = vrot.lane.b32.xlu0 %v1272, 94
      %v1286 = vpop.permute.xlu0 %1285
      %1287 = vrot.lane.b32.xlu0 %v1273, 94
      %v1288 = vpop.permute.xlu0 %1287
      %1289 = vrot.lane.b32.xlu0 %v1274, 94
      %v1290 = vpop.permute.xlu0 %1289
      %v1291 = vrot.slane %v1276, 4
      %v1292 = vrot.slane %v1278, 4
      %v1293 = vrot.slane %v1280, 4
      %v1294 = vrot.slane %v1282, 4
      %v1295 = vrot.slane %v1284, 4
      %v1296 = vrot.slane %v1286, 4
      %v1297 = vrot.slane %v1288, 4
      %v1298 = vrot.slane %v1290, 4
      %v1299 = vsel %vm480, %v1291, %v1292
      %vm1300 = vcmask 769024
      %v1301 = vsel %vm1300, %v1276, %v1299
      %v1302 = vsel %vm480, %v1293, %v1294
      %v1303 = vsel %vm1300, %v1280, %v1302
      %v1304 = vsel %vm480, %v1295, %v1296
      %v1305 = vsel %vm1300, %v1284, %v1304
      %v1306 = vsel %vm480, %v1297, %v1298
      %v1307 = vsel %vm1300, %v1288, %v1306
      %1312 = vst [vmem:[#allocation3 + $0x100] sm:$0xff] %v1301
      %1313 = vst [vmem:[#allocation3 + $0x108] sm:$0xff] %v1303
      %1314 = vst [vmem:[#allocation3 + $0x110] sm:$0xff] %v1305
      %1315 = vst [vmem:[#allocation3 + $0x118] sm:$0xff] %v1307
      %v1316 = vld [vmem:[%s1] sm:$0xff]
      %v1317 = vld [vmem:[%s1 + $0x8] sm:$0xf]
      %v1318 = vld [vmem:[%s1 + $0xc] sm:$0xff]
      %v1319 = vld [vmem:[%s1 + $0x14] sm:$0xf]
      %v1320 = vld [vmem:[%s1 + $0x18] sm:$0xff]
      %v1321 = vld [vmem:[%s1 + $0x20] sm:$0xf]
      %v1322 = vld [vmem:[%s1 + $0x24] sm:$0xff]
      %v1323 = vld [vmem:[%s1 + $0x2c] sm:$0xf]
      %v1324 = vld [vmem:[#allocation3] sm:$0xff]
      %v1325 = vld [vmem:[#allocation3 + $0x8] sm:$0xff]
      %v1326 = vld [vmem:[#allocation3 + $0x10] sm:$0xff]
      %v1327 = vld [vmem:[#allocation3 + $0x18] sm:$0xff]
      %v1328 = vld [vmem:[#allocation3 + $0x20] sm:$0xff]
      %v1329 = vld [vmem:[#allocation3 + $0x28] sm:$0xff]
      %v1330 = vld [vmem:[#allocation3 + $0x30] sm:$0xff]
      %v1331 = vld [vmem:[#allocation3 + $0x38] sm:$0xff]
      %v1332 = vld [vmem:[#allocation3 + $0x40] sm:$0xff]
      %v1333 = vld [vmem:[#allocation3 + $0x48] sm:$0xff]
      %v1334 = vld [vmem:[#allocation3 + $0x50] sm:$0xff]
      %v1335 = vld [vmem:[#allocation3 + $0x58] sm:$0xff]
      %v1336 = vld [vmem:[#allocation3 + $0x60] sm:$0xff]
      %v1337 = vld [vmem:[#allocation3 + $0x68] sm:$0xff]
      %v1338 = vld [vmem:[#allocation3 + $0x70] sm:$0xff]
      %v1339 = vld [vmem:[#allocation3 + $0x78] sm:$0xff]
      %v1340 = vld [vmem:[#allocation3 + $0x80] sm:$0xff]
      %v1341 = vld [vmem:[#allocation3 + $0x88] sm:$0xff]
      %v1342 = vld [vmem:[#allocation3 + $0x90] sm:$0xff]
      %v1343 = vld [vmem:[#allocation3 + $0x98] sm:$0xff]
      %v1344 = vld [vmem:[#allocation3 + $0xa0] sm:$0xff]
      %v1345 = vld [vmem:[#allocation3 + $0xa8] sm:$0xff]
      %v1346 = vld [vmem:[#allocation3 + $0xb0] sm:$0xff]
      %v1347 = vld [vmem:[#allocation3 + $0xb8] sm:$0xff]
      %v1348 = vld [vmem:[#allocation3 + $0xc0] sm:$0xff]
      %v1349 = vld [vmem:[#allocation3 + $0xc8] sm:$0xff]
      %v1350 = vld [vmem:[#allocation3 + $0xd0] sm:$0xff]
      %v1351 = vld [vmem:[#allocation3 + $0xd8] sm:$0xff]
      %v1352 = vld [vmem:[#allocation3 + $0xe0] sm:$0xff]
      %v1353 = vld [vmem:[#allocation3 + $0xe8] sm:$0xff]
      %v1354 = vld [vmem:[#allocation3 + $0xf0] sm:$0xff]
      %v1355 = vld [vmem:[#allocation3 + $0xf8] sm:$0xff]
      %v1356 = vld [vmem:[#allocation3 + $0x100] sm:$0xff]
      %v1357 = vld [vmem:[#allocation3 + $0x108] sm:$0xff]
      %v1358 = vld [vmem:[#allocation3 + $0x110] sm:$0xff]
      %v1359 = vld [vmem:[#allocation3 + $0x118] sm:$0xff]
      %v1360 = vld [vmem:[%s2] sm:$0xff]
      %v1361 = vld [vmem:[%s2 + $0x8] sm:$0xff]
      %v1362 = vld [vmem:[%s2 + $0x10] sm:$0xff]
      %v1363 = vld [vmem:[%s2 + $0x18] sm:$0xff]
      %1365 = vset.pattern.permute.xlu0 0
      %1366 = vperm.xlu0 %1365, %v1360
      %v1367 = vpop.permute.xlu0 %1366
      %1370 = vset.pattern.permute.xlu0 0
      %1371 = vperm.xlu0 %1370, %v1361
      %v1372 = vpop.permute.xlu0 %1371
      %1375 = vset.pattern.permute.xlu0 0
      %1376 = vperm.xlu0 %1375, %v1362
      %v1377 = vpop.permute.xlu0 %1376
      %1380 = vset.pattern.permute.xlu0 0
      %1381 = vperm.xlu0 %1380, %v1363
      %v1382 = vpop.permute.xlu0 %1381
      %v1392 = vunpack.c.l.b16 %v1316
      %v1393 = vunpack.c.h.b16 %v1316
      %v1394 = vunpack.c.l.b16 %v1317
      %v1395 = vunpack.c.l.b16 %v1318
      %v1396 = vunpack.c.h.b16 %v1318
      %v1397 = vunpack.c.l.b16 %v1319
      %v1398 = vunpack.c.l.b16 %v1320
      %v1399 = vunpack.c.h.b16 %v1320
      %v1400 = vunpack.c.l.b16 %v1321
      %v1401 = vunpack.c.l.b16 %v1322
      %v1402 = vunpack.c.h.b16 %v1322
      %v1403 = vunpack.c.l.b16 %v1323
      %v1404 = vpack.c.b16 %v1395, %v1392
      %v1405 = vpack.c.b16 %v1396, %v1393
      %v1406 = vpack.c.b16 %v1397, %v1394
      %v1407 = vpack.c.b16 %v1401, %v1398
      %v1408 = vpack.c.b16 %v1402, %v1399
      %v1409 = vpack.c.b16 %v1403, %v1400
      %v1450 = vunpack.c.l.b16 %v1324
      %v1451 = vunpack.c.h.b16 %v1324
      %v1452 = vunpack.c.l.b16 %v1325
      %v1453 = vunpack.c.h.b16 %v1325
      %v1454 = vunpack.c.l.b16 %v1326
      %v1455 = vunpack.c.h.b16 %v1326
      %v1456 = vunpack.c.l.b16 %v1327
      %v1457 = vunpack.c.h.b16 %v1327
      %v1458 = vunpack.c.l.b16 %v1328
      %v1459 = vunpack.c.h.b16 %v1328
      %v1460 = vunpack.c.l.b16 %v1329
      %v1461 = vunpack.c.h.b16 %v1329
      %v1462 = vunpack.c.l.b16 %v1330
      %v1463 = vunpack.c.h.b16 %v1330
      %v1464 = vunpack.c.l.b16 %v1331
      %v1465 = vunpack.c.h.b16 %v1331
      %v1466 = vunpack.c.l.b16 %v1332
      %v1467 = vunpack.c.h.b16 %v1332
      %v1468 = vunpack.c.l.b16 %v1333
      %v1469 = vunpack.c.h.b16 %v1333
      %v1470 = vunpack.c.l.b16 %v1334
      %v1471 = vunpack.c.h.b16 %v1334
      %v1472 = vunpack.c.l.b16 %v1335
      %v1473 = vunpack.c.h.b16 %v1335
      %v1474 = vunpack.c.l.b16 %v1336
      %v1475 = vunpack.c.h.b16 %v1336
      %v1476 = vunpack.c.l.b16 %v1337
      %v1477 = vunpack.c.h.b16 %v1337
      %v1478 = vunpack.c.l.b16 %v1338
      %v1479 = vunpack.c.h.b16 %v1338
      %v1480 = vunpack.c.l.b16 %v1339
      %v1481 = vunpack.c.h.b16 %v1339
      %v1482 = vunpack.c.l.b16 %v1340
      %v1483 = vunpack.c.h.b16 %v1340
      %v1484 = vunpack.c.l.b16 %v1341
      %v1485 = vunpack.c.h.b16 %v1341
      %v1486 = vunpack.c.l.b16 %v1342
      %v1487 = vunpack.c.h.b16 %v1342
      %v1488 = vunpack.c.l.b16 %v1343
      %v1489 = vunpack.c.h.b16 %v1343
      %v1490 = vunpack.c.l.b16 %v1344
      %v1491 = vunpack.c.h.b16 %v1344
      %v1492 = vunpack.c.l.b16 %v1345
      %v1493 = vunpack.c.h.b16 %v1345
      %v1494 = vunpack.c.l.b16 %v1346
      %v1495 = vunpack.c.h.b16 %v1346
      %v1496 = vunpack.c.l.b16 %v1347
      %v1497 = vunpack.c.h.b16 %v1347
      %v1498 = vunpack.c.l.b16 %v1348
      %v1499 = vunpack.c.h.b16 %v1348
      %v1500 = vunpack.c.l.b16 %v1349
      %v1501 = vunpack.c.h.b16 %v1349
      %v1502 = vunpack.c.l.b16 %v1350
      %v1503 = vunpack.c.h.b16 %v1350
      %v1504 = vunpack.c.l.b16 %v1351
      %v1505 = vunpack.c.h.b16 %v1351
      %v1506 = vunpack.c.l.b16 %v1352
      %v1507 = vunpack.c.h.b16 %v1352
      %v1508 = vunpack.c.l.b16 %v1353
      %v1509 = vunpack.c.h.b16 %v1353
      %v1510 = vunpack.c.l.b16 %v1354
      %v1511 = vunpack.c.h.b16 %v1354
      %v1512 = vunpack.c.l.b16 %v1355
      %v1513 = vunpack.c.h.b16 %v1355
      %v1514 = vunpack.c.l.b16 %v1356
      %v1515 = vunpack.c.h.b16 %v1356
      %v1516 = vunpack.c.l.b16 %v1357
      %v1517 = vunpack.c.h.b16 %v1357
      %v1518 = vunpack.c.l.b16 %v1358
      %v1519 = vunpack.c.h.b16 %v1358
      %v1520 = vunpack.c.l.b16 %v1359
      %v1521 = vunpack.c.h.b16 %v1359
      %v1522 = vpack.c.b16 %v1452, %v1450
      %v1523 = vpack.c.b16 %v1453, %v1451
      %v1524 = vpack.c.b16 %v1456, %v1454
      %v1525 = vpack.c.b16 %v1457, %v1455
      %v1526 = vpack.c.b16 %v1460, %v1458
      %v1527 = vpack.c.b16 %v1461, %v1459
      %v1528 = vpack.c.b16 %v1464, %v1462
      %v1529 = vpack.c.b16 %v1465, %v1463
      %v1530 = vpack.c.b16 %v1468, %v1466
      %v1531 = vpack.c.b16 %v1469, %v1467
      %v1532 = vpack.c.b16 %v1472, %v1470
      %v1533 = vpack.c.b16 %v1473, %v1471
      %v1534 = vpack.c.b16 %v1476, %v1474
      %v1535 = vpack.c.b16 %v1477, %v1475
      %v1536 = vpack.c.b16 %v1480, %v1478
      %v1537 = vpack.c.b16 %v1481, %v1479
      %v1538 = vpack.c.b16 %v1484, %v1482
      %v1539 = vpack.c.b16 %v1485, %v1483
      %v1540 = vpack.c.b16 %v1488, %v1486
      %v1541 = vpack.c.b16 %v1489, %v1487
      %v1542 = vpack.c.b16 %v1492, %v1490
      %v1543 = vpack.c.b16 %v1493, %v1491
      %v1544 = vpack.c.b16 %v1496, %v1494
      %v1545 = vpack.c.b16 %v1497, %v1495
      %v1546 = vpack.c.b16 %v1500, %v1498
      %v1547 = vpack.c.b16 %v1501, %v1499
      %v1548 = vpack.c.b16 %v1504, %v1502
      %v1549 = vpack.c.b16 %v1505, %v1503
      %v1550 = vpack.c.b16 %v1508, %v1506
      %v1551 = vpack.c.b16 %v1509, %v1507
      %v1552 = vpack.c.b16 %v1512, %v1510
      %v1553 = vpack.c.b16 %v1513, %v1511
      %v1554 = vpack.c.b16 %v1516, %v1514
      %v1555 = vpack.c.b16 %v1517, %v1515
      %v1556 = vpack.c.b16 %v1520, %v1518
      %v1557 = vpack.c.b16 %v1521, %v1519
      %v1595 = vsel %vm992, %v1406, 0
      %v1598 = vsel %vm992, %v1409, 0
      %1600 = vmatprep.subr.bf16.mxu0 %v1537
      %1601 = vmatpush1.bf16.msra.mxu0 %v1536
      %1602 = vmatprep.subr.bf16.mxu0 %v1535
      %1603 = vmatpush1.bf16.msra.mxu0 %v1534
      %1604 = vmatprep.subr.bf16.mxu0 %v1533
      %1605 = vmatpush1.bf16.msra.mxu0 %v1532
      %1606 = vmatprep.subr.bf16.mxu0 %v1531
      %1607 = vmatpush1.bf16.msra.mxu0 %v1530
      %1608 = vmatprep.subr.bf16.mxu0 %v1529
      %1609 = vmatpush1.bf16.msra.mxu0 %v1528
      %1610 = vmatprep.subr.bf16.mxu0 %v1527
      %1611 = vmatpush1.bf16.msra.mxu0 %v1526
      %1612 = vmatprep.subr.bf16.mxu0 %v1525
      %1613 = vmatpush1.bf16.msra.mxu0 %v1524
      %1614 = vmatprep.subr.bf16.mxu0 %v1523
      %1615 = vmatpush1.bf16.msra.mxu0 %v1522
      %1616 = vmatprep.subr.bf16.mxu0 %v1553
      %1617 = vmatpush2.bf16.msra.mxu0 %v1552
      %1618 = vmatprep.subr.bf16.mxu0 %v1551
      %1619 = vmatpush2.bf16.msra.mxu0 %v1550
      %1620 = vmatprep.subr.bf16.mxu0 %v1549
      %1621 = vmatpush2.bf16.msra.mxu0 %v1548
      %1622 = vmatprep.subr.bf16.mxu0 %v1547
      %1623 = vmatpush2.bf16.msra.mxu0 %v1546
      %1624 = vmatprep.subr.bf16.mxu0 %v1545
      %1625 = vmatpush2.bf16.msra.mxu0 %v1544
      %1626 = vmatprep.subr.bf16.mxu0 %v1543
      %1627 = vmatpush2.bf16.msra.mxu0 %v1542
      %1628 = vmatprep.subr.bf16.mxu0 %v1541
      %1629 = vmatpush2.bf16.msra.mxu0 %v1540
      %1630 = vmatprep.subr.bf16.mxu0 %v1539
      %1631 = vmatpush2.bf16.msra.mxu0 %v1538
      %1632 = vmatprep.mubr.bf16.mxu0 %v1405
      %1633 = vmatmul.mubr.bf16.gmra.mxu0 %v1404
      %v1634 = vpop.f32.mrf.mxu0
      %v1635 = vadd.f32 %v1367, %v1634
      %v1636 = vpop.f32.mrf.mxu0
      %v1637 = vadd.f32 %v1367, %v1636
      %v1638 = vpop.f32.mrf.mxu0
      %v1639 = vadd.f32 %v1372, %v1638
      %v1640 = vpop.f32.mrf.mxu0
      %v1641 = vadd.f32 %v1372, %v1640
      %1642 = vmatprep.mubr.bf16.mxu0 %v1408
      %1643 = vmatmul.mubr.bf16.gmra.mxu0 %v1407
      %v1644 = vpop.f32.mrf.mxu0
      %v1645 = vadd.f32 %v1377, %v1644
      %v1646 = vpop.f32.mrf.mxu0
      %v1647 = vadd.f32 %v1377, %v1646
      %v1648 = vpop.f32.mrf.mxu0
      %v1649 = vadd.f32 %v1382, %v1648
      %v1650 = vpop.f32.mrf.mxu0
      %v1651 = vadd.f32 %v1382, %v1650
      %1652 = vdwg.mxu0
      %1653 = vmatprep.subr.bf16.mxu0 0
      %1654 = vmatpush1.bf16.msra.mxu0 0
      %1655 = vmatprep.subr.bf16.mxu0 0
      %1656 = vmatpush1.bf16.msra.mxu0 0
      %1657 = vmatprep.subr.bf16.mxu0 0
      %1658 = vmatpush1.bf16.msra.mxu0 0
      %1659 = vmatprep.subr.bf16.mxu0 0
      %1660 = vmatpush1.bf16.msra.mxu0 0
      %1661 = vmatprep.subr.bf16.mxu0 0
      %1662 = vmatpush1.bf16.msra.mxu0 0
      %1663 = vmatprep.subr.bf16.mxu0 0
      %1664 = vmatpush1.bf16.msra.mxu0 0
      %1665 = vmatprep.subr.bf16.mxu0 %v1557
      %1666 = vmatpush1.bf16.msra.mxu0 %v1556
      %1667 = vmatprep.subr.bf16.mxu0 %v1555
      %1668 = vmatpush1.bf16.msra.mxu0 %v1554
      %1669 = vmatprep.subr.bf16.mxu0 0
      %1670 = vmatpush2.bf16.msra.mxu0 0
      %1671 = vmatprep.subr.bf16.mxu0 0
      %1672 = vmatpush2.bf16.msra.mxu0 0
      %1673 = vmatprep.subr.bf16.mxu0 0
      %1674 = vmatpush2.bf16.msra.mxu0 0
      %1675 = vmatprep.subr.bf16.mxu0 0
      %1676 = vmatpush2.bf16.msra.mxu0 0
      %1677 = vmatprep.subr.bf16.mxu0 0
      %1678 = vmatpush2.bf16.msra.mxu0 0
      %1679 = vmatprep.subr.bf16.mxu0 0
      %1680 = vmatpush2.bf16.msra.mxu0 0
      %1681 = vmatprep.subr.bf16.mxu0 0
      %1682 = vmatpush2.bf16.msra.mxu0 0
      %1683 = vmatprep.subr.bf16.mxu0 0
      %1684 = vmatpush2.bf16.msra.mxu0 0
      %1685 = vmatprep.mubr.bf16.mxu0 0
      %1686 = vmatmul.mubr.bf16.gmra.mxu0 %v1595
      %v1687 = vpop.f32.mrf.mxu0
      %v1688 = vadd.f32 %v1635, %v1687
      %v1689 = vpop.f32.mrf.mxu0
      %v1690 = vadd.f32 %v1637, %v1689
      %v1691 = vpop.f32.mrf.mxu0
      %v1692 = vadd.f32 %v1639, %v1691
      %v1693 = vpop.f32.mrf.mxu0
      %v1694 = vadd.f32 %v1641, %v1693
      %1695 = vmatprep.mubr.bf16.mxu0 0
      %1696 = vmatmul.mubr.bf16.gmra.mxu0 %v1598
      %v1697 = vpop.f32.mrf.mxu0
      %v1698 = vadd.f32 %v1645, %v1697
      %v1699 = vpop.f32.mrf.mxu0
      %v1700 = vadd.f32 %v1647, %v1699
      %v1701 = vpop.f32.mrf.mxu0
      %v1702 = vadd.f32 %v1649, %v1701
      %v1703 = vpop.f32.mrf.mxu0
      %v1704 = vadd.f32 %v1651, %v1703
      %1705 = vdwg.mxu0
      %v1706 = vmax.f32 %v1688, 0.0
      %v1707 = vmax.f32 %v1690, 0.0
      %v1708 = vmax.f32 %v1692, 0.0
      %v1709 = vmax.f32 %v1694, 0.0
      %v1710 = vmax.f32 %v1698, 0.0
      %v1711 = vmax.f32 %v1700, 0.0
      %v1712 = vmax.f32 %v1702, 0.0
      %v1713 = vmax.f32 %v1704, 0.0
      %1722 = vrot.lane.b32.xlu0 %v1706, 17
      %v1723 = vpop.permute.xlu0 %1722
      %1724 = vrot.lane.b32.xlu0 %v1707, 17
      %v1725 = vpop.permute.xlu0 %1724
      %1726 = vrot.lane.b32.xlu0 %v1708, 17
      %v1727 = vpop.permute.xlu0 %1726
      %1728 = vrot.lane.b32.xlu0 %v1709, 17
      %v1729 = vpop.permute.xlu0 %1728
      %1730 = vrot.lane.b32.xlu0 %v1710, 17
      %v1731 = vpop.permute.xlu0 %1730
      %1732 = vrot.lane.b32.xlu0 %v1711, 17
      %v1733 = vpop.permute.xlu0 %1732
      %1734 = vrot.lane.b32.xlu0 %v1712, 17
      %v1735 = vpop.permute.xlu0 %1734
      %1736 = vrot.lane.b32.xlu0 %v1713, 17
      %v1737 = vpop.permute.xlu0 %1736
      %v1738 = vsel %vm253, %v1723, %v1725
      %v1739 = vsel %vm253, %v1727, %v1729
      %v1740 = vsel %vm253, %v1731, %v1733
      %v1741 = vsel %vm253, %v1735, %v1737
      %1754 = vst.msk [vmem:[#allocation2] sm:$0xff] %vm311, %v1723
      %1755 = vst [vmem:[#allocation2 + $0x8] sm:$0xff] %v1738
      %1756 = vst.msk [vmem:[#allocation2 + $0x10] sm:$0xff] %vm253, %v1725
      %1757 = vst.msk [vmem:[#allocation2 + $0x18] sm:$0xff] %vm311, %v1727
      %1758 = vst [vmem:[#allocation2 + $0x20] sm:$0xff] %v1739
      %1759 = vst.msk [vmem:[#allocation2 + $0x28] sm:$0xff] %vm253, %v1729
      %1760 = vst.msk [vmem:[#allocation2 + $0x30] sm:$0xff] %vm311, %v1731
      %1761 = vst [vmem:[#allocation2 + $0x38] sm:$0xff] %v1740
      %1762 = vst.msk [vmem:[#allocation2 + $0x40] sm:$0xff] %vm253, %v1733
      %1763 = vst.msk [vmem:[#allocation2 + $0x48] sm:$0xff] %vm311, %v1735
      %1764 = vst [vmem:[#allocation2 + $0x50] sm:$0xff] %v1741
      %1765 = vst.msk [vmem:[#allocation2 + $0x58] sm:$0xff] %vm253, %v1737
      %v1766 = vld [vmem:[#allocation2] sm:$0xff]
      %v1767 = vld [vmem:[#allocation2 + $0x8] sm:$0xff]
      %v1768 = vld [vmem:[#allocation2 + $0x18] sm:$0xff]
      %v1769 = vld [vmem:[#allocation2 + $0x20] sm:$0xff]
      %v1770 = vld [vmem:[#allocation2 + $0x30] sm:$0xff]
      %v1771 = vld [vmem:[#allocation2 + $0x38] sm:$0xff]
      %v1772 = vld [vmem:[#allocation2 + $0x48] sm:$0xff]
      %v1773 = vld [vmem:[#allocation2 + $0x50] sm:$0xff]
      %v1774 = vld [vmem:[%s5] ss:$8 sm:$0x3]
      %v1776 = vlaneseq
      %v1777 = vshrl.u32 %v1776, 7
      %v1778 = vsub.s32 0, %v1777
      %v1779 = vrot.slane %v1774, %v1778
      %v1780 = vlaneseq
      %v1781 = vshrl.u32 %v1780, 7
      %v1782 = vsub.s32 1, %v1781
      %v1783 = vrot.slane %v1774, %v1782
      %v1786 = vmul.f32 %v1766, %v1779
      %v1787 = vmul.f32 %v1767, %v1783
      %v1788 = vmul.f32 %v1768, %v1779
      %v1789 = vmul.f32 %v1769, %v1783
      %v1790 = vmul.f32 %v1770, %v1779
      %v1791 = vmul.f32 %v1771, %v1783
      %v1792 = vmul.f32 %v1772, %v1779
      %v1793 = vmul.f32 %v1773, %v1783
      %v1794 = vpack.c.bf16 %v1788, %v1786
      %v1795 = vpack.c.bf16 %v1789, %v1787
      %v1796 = vpack.c.bf16 %v1792, %v1790
      %v1797 = vpack.c.bf16 %v1793, %v1791
      %v1802 = vunpack.c.l.b16 %v1794
      %v1803 = vunpack.c.l.b16 %v1795
      %v1804 = vunpack.c.h.b16 %v1794
      %v1805 = vunpack.c.h.b16 %v1795
      %v1806 = vunpack.c.l.b16 %v1796
      %v1807 = vunpack.c.l.b16 %v1797
      %v1808 = vunpack.c.h.b16 %v1796
      %v1809 = vunpack.c.h.b16 %v1797
      %v1810 = vpack.c.b16 %v1803, %v1802
      %v1811 = vpack.c.b16 %v1805, %v1804
      %v1812 = vpack.c.b16 %v1807, %v1806
      %v1813 = vpack.c.b16 %v1809, %v1808
      %1818 = vst [vmem:[#allocation3] sm:$0xff] %v1810
      %1819 = vst [vmem:[#allocation3 + $0x8] sm:$0xff] %v1811
      %1820 = vst [vmem:[#allocation3 + $0x10] sm:$0xff] %v1812
      %1821 = vst [vmem:[#allocation3 + $0x18] sm:$0xff] %v1813
      %v1822 = vld [vmem:[#allocation2] sm:$0xff]
      %v1823 = vld [vmem:[#allocation2 + $0x8] sm:$0xff]
      %v1824 = vld [vmem:[#allocation2 + $0x10] sm:$0xff]
      %v1825 = vld [vmem:[#allocation2 + $0x18] sm:$0xff]
      %v1826 = vld [vmem:[#allocation2 + $0x20] sm:$0xff]
      %v1827 = vld [vmem:[#allocation2 + $0x28] sm:$0xff]
      %v1828 = vld [vmem:[#allocation2 + $0x30] sm:$0xff]
      %v1829 = vld [vmem:[#allocation2 + $0x38] sm:$0xff]
      %v1830 = vld [vmem:[#allocation2 + $0x40] sm:$0xff]
      %v1831 = vld [vmem:[#allocation2 + $0x48] sm:$0xff]
      %v1832 = vld [vmem:[#allocation2 + $0x50] sm:$0xff]
      %v1833 = vld [vmem:[#allocation2 + $0x58] sm:$0xff]
      %v1834 = vld [vmem:[%s392] ss:$8 sm:$0x3]
      %v1836 = vlaneseq
      %v1837 = vshrl.u32 %v1836, 7
      %v1838 = vsub.s32 0, %v1837
      %v1839 = vrot.slane %v1834, %v1838
      %v1840 = vlaneseq
      %v1841 = vshrl.u32 %v1840, 7
      %v1842 = vsub.s32 1, %v1841
      %v1843 = vrot.slane %v1834, %v1842
      %1844 = vrot.lane.b32.xlu0 %v1839, 1
      %v1845 = vpop.permute.xlu0 %1844
      %1846 = vrot.lane.b32.xlu0 %v1843, 1
      %v1847 = vpop.permute.xlu0 %1846
      %v1848 = vsel %vm407, %v1845, %v1847
      %v1852 = vmul.f32 %v1822, %v1845
      %v1853 = vmul.f32 %v1823, %v1848
      %v1854 = vmul.f32 %v1824, %v1847
      %v1855 = vmul.f32 %v1825, %v1845
      %v1856 = vmul.f32 %v1826, %v1848
      %v1857 = vmul.f32 %v1827, %v1847
      %v1858 = vmul.f32 %v1828, %v1845
      %v1859 = vmul.f32 %v1829, %v1848
      %v1860 = vmul.f32 %v1830, %v1847
      %v1861 = vmul.f32 %v1831, %v1845
      %v1862 = vmul.f32 %v1832, %v1848
      %v1863 = vmul.f32 %v1833, %v1847
      %v1864 = vpack.c.bf16 %v1855, %v1852
      %v1865 = vpack.c.bf16 %v1856, %v1853
      %v1866 = vpack.c.bf16 %v1857, %v1854
      %v1867 = vpack.c.bf16 %v1861, %v1858
      %v1868 = vpack.c.bf16 %v1862, %v1859
      %v1869 = vpack.c.bf16 %v1863, %v1860
      %v1876 = vunpack.c.l.b16 %v1864
      %v1877 = vunpack.c.l.b16 %v1865
      %v1878 = vunpack.c.l.b16 %v1866
      %v1879 = vunpack.c.h.b16 %v1864
      %v1880 = vunpack.c.h.b16 %v1865
      %v1881 = vunpack.c.h.b16 %v1866
      %v1882 = vunpack.c.l.b16 %v1867
      %v1883 = vunpack.c.l.b16 %v1868
      %v1884 = vunpack.c.l.b16 %v1869
      %v1885 = vunpack.c.h.b16 %v1867
      %v1886 = vunpack.c.h.b16 %v1868
      %v1887 = vunpack.c.h.b16 %v1869
      %v1888 = vpack.c.b16 %v1877, %v1876
      %v1889 = vpack.c.b16 %v1878, %v1878
      %v1890 = vpack.c.b16 %v1880, %v1879
      %v1891 = vpack.c.b16 %v1881, %v1881
      %v1892 = vpack.c.b16 %v1883, %v1882
      %v1893 = vpack.c.b16 %v1884, %v1884
      %v1894 = vpack.c.b16 %v1886, %v1885
      %v1895 = vpack.c.b16 %v1887, %v1887
      %1896 = vrot.lane.b32.xlu0 %v1888, 127
      %v1897 = vpop.permute.xlu0 %1896
      %1898 = vrot.lane.b32.xlu0 %v1889, 127
      %v1899 = vpop.permute.xlu0 %1898
      %1900 = vrot.lane.b32.xlu0 %v1890, 127
      %v1901 = vpop.permute.xlu0 %1900
      %1902 = vrot.lane.b32.xlu0 %v1891, 127
      %v1903 = vpop.permute.xlu0 %1902
      %1904 = vrot.lane.b32.xlu0 %v1892, 127
      %v1905 = vpop.permute.xlu0 %1904
      %1906 = vrot.lane.b32.xlu0 %v1893, 127
      %v1907 = vpop.permute.xlu0 %1906
      %1908 = vrot.lane.b32.xlu0 %v1894, 127
      %v1909 = vpop.permute.xlu0 %1908
      %1910 = vrot.lane.b32.xlu0 %v1895, 127
      %v1911 = vpop.permute.xlu0 %1910
      %v1912 = vrot.slane %v1897, 4
      %v1913 = vrot.slane %v1899, 4
      %v1914 = vrot.slane %v1901, 4
      %v1915 = vrot.slane %v1903, 4
      %v1916 = vrot.slane %v1905, 4
      %v1917 = vrot.slane %v1907, 4
      %v1918 = vrot.slane %v1909, 4
      %v1919 = vrot.slane %v1911, 4
      %v1920 = vsel %vm480, %v1912, %v1913
      %v1921 = vsel %vm482, %v1897, %v1920
      %v1922 = vsel %vm480, %v1914, %v1915
      %v1923 = vsel %vm482, %v1901, %v1922
      %v1924 = vsel %vm480, %v1916, %v1917
      %v1925 = vsel %vm482, %v1905, %v1924
      %v1926 = vsel %vm480, %v1918, %v1919
      %v1927 = vsel %vm482, %v1909, %v1926
      %1932 = vst [vmem:[#allocation3 + $0x20] sm:$0xff] %v1921
      %1933 = vst [vmem:[#allocation3 + $0x28] sm:$0xff] %v1923
      %1934 = vst [vmem:[#allocation3 + $0x30] sm:$0xff] %v1925
      %1935 = vst [vmem:[#allocation3 + $0x38] sm:$0xff] %v1927
      %v1936 = vld [vmem:[#allocation2] sm:$0xff]
      %v1937 = vld [vmem:[#allocation2 + $0x8] sm:$0xff]
      %v1938 = vld [vmem:[#allocation2 + $0x10] sm:$0xff]
      %v1939 = vld [vmem:[#allocation2 + $0x18] sm:$0xff]
      %v1940 = vld [vmem:[#allocation2 + $0x20] sm:$0xff]
      %v1941 = vld [vmem:[#allocation2 + $0x28] sm:$0xff]
      %v1942 = vld [vmem:[#allocation2 + $0x30] sm:$0xff]
      %v1943 = vld [vmem:[#allocation2 + $0x38] sm:$0xff]
      %v1944 = vld [vmem:[#allocation2 + $0x40] sm:$0xff]
      %v1945 = vld [vmem:[#allocation2 + $0x48] sm:$0xff]
      %v1946 = vld [vmem:[#allocation2 + $0x50] sm:$0xff]
      %v1947 = vld [vmem:[#allocation2 + $0x58] sm:$0xff]
      %v1948 = vld [vmem:[%s510] ss:$8 sm:$0x3]
      %v1950 = vlaneseq
      %v1951 = vshrl.u32 %v1950, 7
      %v1952 = vsub.s32 0, %v1951
      %v1953 = vrot.slane %v1948, %v1952
      %v1954 = vlaneseq
      %v1955 = vshrl.u32 %v1954, 7
      %v1956 = vsub.s32 1, %v1955
      %v1957 = vrot.slane %v1948, %v1956
      %1958 = vrot.lane.b32.xlu0 %v1953, 2
      %v1959 = vpop.permute.xlu0 %1958
      %1960 = vrot.lane.b32.xlu0 %v1957, 2
      %v1961 = vpop.permute.xlu0 %1960
      %v1962 = vsel %vm525, %v1959, %v1961
      %v1966 = vmul.f32 %v1936, %v1959
      %v1967 = vmul.f32 %v1937, %v1962
      %v1968 = vmul.f32 %v1938, %v1961
      %v1969 = vmul.f32 %v1939, %v1959
      %v1970 = vmul.f32 %v1940, %v1962
      %v1971 = vmul.f32 %v1941, %v1961
      %v1972 = vmul.f32 %v1942, %v1959
      %v1973 = vmul.f32 %v1943, %v1962
      %v1974 = vmul.f32 %v1944, %v1961
      %v1975 = vmul.f32 %v1945, %v1959
      %v1976 = vmul.f32 %v1946, %v1962
      %v1977 = vmul.f32 %v1947, %v1961
      %v1978 = vpack.c.bf16 %v1969, %v1966
      %v1979 = vpack.c.bf16 %v1970, %v1967
      %v1980 = vpack.c.bf16 %v1971, %v1968
      %v1981 = vpack.c.bf16 %v1975, %v1972
      %v1982 = vpack.c.bf16 %v1976, %v1973
      %v1983 = vpack.c.bf16 %v1977, %v1974
      %v1990 = vunpack.c.l.b16 %v1978
      %v1991 = vunpack.c.l.b16 %v1979
      %v1992 = vunpack.c.l.b16 %v1980
      %v1993 = vunpack.c.h.b16 %v1978
      %v1994 = vunpack.c.h.b16 %v1979
      %v1995 = vunpack.c.h.b16 %v1980
      %v1996 = vunpack.c.l.b16 %v1981
      %v1997 = vunpack.c.l.b16 %v1982
      %v1998 = vunpack.c.l.b16 %v1983
      %v1999 = vunpack.c.h.b16 %v1981
      %v2000 = vunpack.c.h.b16 %v1982
      %v2001 = vunpack.c.h.b16 %v1983
      %v2002 = vpack.c.b16 %v1991, %v1990
      %v2003 = vpack.c.b16 %v1992, %v1992
      %v2004 = vpack.c.b16 %v1994, %v1993
      %v2005 = vpack.c.b16 %v1995, %v1995
      %v2006 = vpack.c.b16 %v1997, %v1996
      %v2007 = vpack.c.b16 %v1998, %v1998
      %v2008 = vpack.c.b16 %v2000, %v1999
      %v2009 = vpack.c.b16 %v2001, %v2001
      %2010 = vrot.lane.b32.xlu0 %v2002, 126
      %v2011 = vpop.permute.xlu0 %2010
      %2012 = vrot.lane.b32.xlu0 %v2003, 126
      %v2013 = vpop.permute.xlu0 %2012
      %2014 = vrot.lane.b32.xlu0 %v2004, 126
      %v2015 = vpop.permute.xlu0 %2014
      %2016 = vrot.lane.b32.xlu0 %v2005, 126
      %v2017 = vpop.permute.xlu0 %2016
      %2018 = vrot.lane.b32.xlu0 %v2006, 126
      %v2019 = vpop.permute.xlu0 %2018
      %2020 = vrot.lane.b32.xlu0 %v2007, 126
      %v2021 = vpop.permute.xlu0 %2020
      %2022 = vrot.lane.b32.xlu0 %v2008, 126
      %v2023 = vpop.permute.xlu0 %2022
      %2024 = vrot.lane.b32.xlu0 %v2009, 126
      %v2025 = vpop.permute.xlu0 %2024
      %v2026 = vrot.slane %v2011, 4
      %v2027 = vrot.slane %v2013, 4
      %v2028 = vrot.slane %v2015, 4
      %v2029 = vrot.slane %v2017, 4
      %v2030 = vrot.slane %v2019, 4
      %v2031 = vrot.slane %v2021, 4
      %v2032 = vrot.slane %v2023, 4
      %v2033 = vrot.slane %v2025, 4
      %v2034 = vsel %vm480, %v2026, %v2027
      %v2035 = vsel %vm599, %v2011, %v2034
      %v2036 = vsel %vm480, %v2028, %v2029
      %v2037 = vsel %vm599, %v2015, %v2036
      %v2038 = vsel %vm480, %v2030, %v2031
      %v2039 = vsel %vm599, %v2019, %v2038
      %v2040 = vsel %vm480, %v2032, %v2033
      %v2041 = vsel %vm599, %v2023, %v2040
      %2046 = vst [vmem:[#allocation3 + $0x40] sm:$0xff] %v2035
      %2047 = vst [vmem:[#allocation3 + $0x48] sm:$0xff] %v2037
      %2048 = vst [vmem:[#allocation3 + $0x50] sm:$0xff] %v2039
      %2049 = vst [vmem:[#allocation3 + $0x58] sm:$0xff] %v2041
      %v2050 = vld [vmem:[#allocation2] sm:$0xff]
      %v2051 = vld [vmem:[#allocation2 + $0x8] sm:$0xff]
      %v2052 = vld [vmem:[#allocation2 + $0x10] sm:$0xff]
      %v2053 = vld [vmem:[#allocation2 + $0x18] sm:$0xff]
      %v2054 = vld [vmem:[#allocation2 + $0x20] sm:$0xff]
      %v2055 = vld [vmem:[#allocation2 + $0x28] sm:$0xff]
      %v2056 = vld [vmem:[#allocation2 + $0x30] sm:$0xff]
      %v2057 = vld [vmem:[#allocation2 + $0x38] sm:$0xff]
      %v2058 = vld [vmem:[#allocation2 + $0x40] sm:$0xff]
      %v2059 = vld [vmem:[#allocation2 + $0x48] sm:$0xff]
      %v2060 = vld [vmem:[#allocation2 + $0x50] sm:$0xff]
      %v2061 = vld [vmem:[#allocation2 + $0x58] sm:$0xff]
      %v2062 = vld [vmem:[%s627] ss:$8 sm:$0x3]
      %v2064 = vlaneseq
      %v2065 = vshrl.u32 %v2064, 7
      %v2066 = vsub.s32 0, %v2065
      %v2067 = vrot.slane %v2062, %v2066
      %v2068 = vlaneseq
      %v2069 = vshrl.u32 %v2068, 7
      %v2070 = vsub.s32 1, %v2069
      %v2071 = vrot.slane %v2062, %v2070
      %2072 = vrot.lane.b32.xlu0 %v2067, 16
      %v2073 = vpop.permute.xlu0 %2072
      %2074 = vrot.lane.b32.xlu0 %v2071, 16
      %v2075 = vpop.permute.xlu0 %2074
      %v2076 = vsel %vm642, %v2073, %v2075
      %v2080 = vmul.f32 %v2050, %v2073
      %v2081 = vmul.f32 %v2051, %v2076
      %v2082 = vmul.f32 %v2052, %v2075
      %v2083 = vmul.f32 %v2053, %v2073
      %v2084 = vmul.f32 %v2054, %v2076
      %v2085 = vmul.f32 %v2055, %v2075
      %v2086 = vmul.f32 %v2056, %v2073
      %v2087 = vmul.f32 %v2057, %v2076
      %v2088 = vmul.f32 %v2058, %v2075
      %v2089 = vmul.f32 %v2059, %v2073
      %v2090 = vmul.f32 %v2060, %v2076
      %v2091 = vmul.f32 %v2061, %v2075
      %v2092 = vpack.c.bf16 %v2083, %v2080
      %v2093 = vpack.c.bf16 %v2084, %v2081
      %v2094 = vpack.c.bf16 %v2085, %v2082
      %v2095 = vpack.c.bf16 %v2089, %v2086
      %v2096 = vpack.c.bf16 %v2090, %v2087
      %v2097 = vpack.c.bf16 %v2091, %v2088
      %v2104 = vunpack.c.l.b16 %v2092
      %v2105 = vunpack.c.l.b16 %v2093
      %v2106 = vunpack.c.l.b16 %v2094
      %v2107 = vunpack.c.h.b16 %v2092
      %v2108 = vunpack.c.h.b16 %v2093
      %v2109 = vunpack.c.h.b16 %v2094
      %v2110 = vunpack.c.l.b16 %v2095
      %v2111 = vunpack.c.l.b16 %v2096
      %v2112 = vunpack.c.l.b16 %v2097
      %v2113 = vunpack.c.h.b16 %v2095
      %v2114 = vunpack.c.h.b16 %v2096
      %v2115 = vunpack.c.h.b16 %v2097
      %v2116 = vpack.c.b16 %v2105, %v2104
      %v2117 = vpack.c.b16 %v2106, %v2106
      %v2118 = vpack.c.b16 %v2108, %v2107
      %v2119 = vpack.c.b16 %v2109, %v2109
      %v2120 = vpack.c.b16 %v2111, %v2110
      %v2121 = vpack.c.b16 %v2112, %v2112
      %v2122 = vpack.c.b16 %v2114, %v2113
      %v2123 = vpack.c.b16 %v2115, %v2115
      %2124 = vrot.lane.b32.xlu0 %v2116, 112
      %v2125 = vpop.permute.xlu0 %2124
      %2126 = vrot.lane.b32.xlu0 %v2117, 112
      %v2127 = vpop.permute.xlu0 %2126
      %2128 = vrot.lane.b32.xlu0 %v2118, 112
      %v2129 = vpop.permute.xlu0 %2128
      %2130 = vrot.lane.b32.xlu0 %v2119, 112
      %v2131 = vpop.permute.xlu0 %2130
      %2132 = vrot.lane.b32.xlu0 %v2120, 112
      %v2133 = vpop.permute.xlu0 %2132
      %2134 = vrot.lane.b32.xlu0 %v2121, 112
      %v2135 = vpop.permute.xlu0 %2134
      %2136 = vrot.lane.b32.xlu0 %v2122, 112
      %v2137 = vpop.permute.xlu0 %2136
      %2138 = vrot.lane.b32.xlu0 %v2123, 112
      %v2139 = vpop.permute.xlu0 %2138
      %v2140 = vrot.slane %v2125, 4
      %v2141 = vrot.slane %v2127, 4
      %v2142 = vrot.slane %v2129, 4
      %v2143 = vrot.slane %v2131, 4
      %v2144 = vrot.slane %v2133, 4
      %v2145 = vrot.slane %v2135, 4
      %v2146 = vrot.slane %v2137, 4
      %v2147 = vrot.slane %v2139, 4
      %v2148 = vsel %vm480, %v2140, %v2141
      %v2149 = vsel %vm716, %v2125, %v2148
      %v2150 = vsel %vm480, %v2142, %v2143
      %v2151 = vsel %vm716, %v2129, %v2150
      %v2152 = vsel %vm480, %v2144, %v2145
      %v2153 = vsel %vm716, %v2133, %v2152
      %v2154 = vsel %vm480, %v2146, %v2147
      %v2155 = vsel %vm716, %v2137, %v2154
      %2160 = vst [vmem:[#allocation3 + $0x60] sm:$0xff] %v2149
      %2161 = vst [vmem:[#allocation3 + $0x68] sm:$0xff] %v2151
      %2162 = vst [vmem:[#allocation3 + $0x70] sm:$0xff] %v2153
      %2163 = vst [vmem:[#allocation3 + $0x78] sm:$0xff] %v2155
      %v2164 = vld [vmem:[#allocation2] sm:$0xff]
      %v2165 = vld [vmem:[#allocation2 + $0x8] sm:$0xff]
      %v2166 = vld [vmem:[#allocation2 + $0x10] sm:$0xff]
      %v2167 = vld [vmem:[#allocation2 + $0x18] sm:$0xff]
      %v2168 = vld [vmem:[#allocation2 + $0x20] sm:$0xff]
      %v2169 = vld [vmem:[#allocation2 + $0x28] sm:$0xff]
      %v2170 = vld [vmem:[#allocation2 + $0x30] sm:$0xff]
      %v2171 = vld [vmem:[#allocation2 + $0x38] sm:$0xff]
      %v2172 = vld [vmem:[#allocation2 + $0x40] sm:$0xff]
      %v2173 = vld [vmem:[#allocation2 + $0x48] sm:$0xff]
      %v2174 = vld [vmem:[#allocation2 + $0x50] sm:$0xff]
      %v2175 = vld [vmem:[#allocation2 + $0x58] sm:$0xff]
      %v2176 = vld [vmem:[%s744] ss:$8 sm:$0x3]
      %v2178 = vlaneseq
      %v2179 = vshrl.u32 %v2178, 7
      %v2180 = vsub.s32 0, %v2179
      %v2181 = vrot.slane %v2176, %v2180
      %v2182 = vlaneseq
      %v2183 = vshrl.u32 %v2182, 7
      %v2184 = vsub.s32 1, %v2183
      %v2185 = vrot.slane %v2176, %v2184
      %2186 = vrot.lane.b32.xlu0 %v2181, 17
      %v2187 = vpop.permute.xlu0 %2186
      %2188 = vrot.lane.b32.xlu0 %v2185, 17
      %v2189 = vpop.permute.xlu0 %2188
      %v2190 = vsel %vm253, %v2187, %v2189
      %v2194 = vmul.f32 %v2164, %v2187
      %v2195 = vmul.f32 %v2165, %v2190
      %v2196 = vmul.f32 %v2166, %v2189
      %v2197 = vmul.f32 %v2167, %v2187
      %v2198 = vmul.f32 %v2168, %v2190
      %v2199 = vmul.f32 %v2169, %v2189
      %v2200 = vmul.f32 %v2170, %v2187
      %v2201 = vmul.f32 %v2171, %v2190
      %v2202 = vmul.f32 %v2172, %v2189
      %v2203 = vmul.f32 %v2173, %v2187
      %v2204 = vmul.f32 %v2174, %v2190
      %v2205 = vmul.f32 %v2175, %v2189
      %v2206 = vpack.c.bf16 %v2197, %v2194
      %v2207 = vpack.c.bf16 %v2198, %v2195
      %v2208 = vpack.c.bf16 %v2199, %v2196
      %v2209 = vpack.c.bf16 %v2203, %v2200
      %v2210 = vpack.c.bf16 %v2204, %v2201
      %v2211 = vpack.c.bf16 %v2205, %v2202
      %v2218 = vunpack.c.l.b16 %v2206
      %v2219 = vunpack.c.l.b16 %v2207
      %v2220 = vunpack.c.l.b16 %v2208
      %v2221 = vunpack.c.h.b16 %v2206
      %v2222 = vunpack.c.h.b16 %v2207
      %v2223 = vunpack.c.h.b16 %v2208
      %v2224 = vunpack.c.l.b16 %v2209
      %v2225 = vunpack.c.l.b16 %v2210
      %v2226 = vunpack.c.l.b16 %v2211
      %v2227 = vunpack.c.h.b16 %v2209
      %v2228 = vunpack.c.h.b16 %v2210
      %v2229 = vunpack.c.h.b16 %v2211
      %v2230 = vpack.c.b16 %v2219, %v2218
      %v2231 = vpack.c.b16 %v2220, %v2220
      %v2232 = vpack.c.b16 %v2222, %v2221
      %v2233 = vpack.c.b16 %v2223, %v2223
      %v2234 = vpack.c.b16 %v2225, %v2224
      %v2235 = vpack.c.b16 %v2226, %v2226
      %v2236 = vpack.c.b16 %v2228, %v2227
      %v2237 = vpack.c.b16 %v2229, %v2229
      %2238 = vrot.lane.b32.xlu0 %v2230, 111
      %v2239 = vpop.permute.xlu0 %2238
      %2240 = vrot.lane.b32.xlu0 %v2231, 111
      %v2241 = vpop.permute.xlu0 %2240
      %2242 = vrot.lane.b32.xlu0 %v2232, 111
      %v2243 = vpop.permute.xlu0 %2242
      %2244 = vrot.lane.b32.xlu0 %v2233, 111
      %v2245 = vpop.permute.xlu0 %2244
      %2246 = vrot.lane.b32.xlu0 %v2234, 111
      %v2247 = vpop.permute.xlu0 %2246
      %2248 = vrot.lane.b32.xlu0 %v2235, 111
      %v2249 = vpop.permute.xlu0 %2248
      %2250 = vrot.lane.b32.xlu0 %v2236, 111
      %v2251 = vpop.permute.xlu0 %2250
      %2252 = vrot.lane.b32.xlu0 %v2237, 111
      %v2253 = vpop.permute.xlu0 %2252
      %v2254 = vrot.slane %v2239, 4
      %v2255 = vrot.slane %v2241, 4
      %v2256 = vrot.slane %v2243, 4
      %v2257 = vrot.slane %v2245, 4
      %v2258 = vrot.slane %v2247, 4
      %v2259 = vrot.slane %v2249, 4
      %v2260 = vrot.slane %v2251, 4
      %v2261 = vrot.slane %v2253, 4
      %v2262 = vsel %vm480, %v2254, %v2255
      %v2263 = vsel %vm832, %v2239, %v2262
      %v2264 = vsel %vm480, %v2256, %v2257
      %v2265 = vsel %vm832, %v2243, %v2264
      %v2266 = vsel %vm480, %v2258, %v2259
      %v2267 = vsel %vm832, %v2247, %v2266
      %v2268 = vsel %vm480, %v2260, %v2261
      %v2269 = vsel %vm832, %v2251, %v2268
      %2274 = vst [vmem:[#allocation3 + $0x80] sm:$0xff] %v2263
      %2275 = vst [vmem:[#allocation3 + $0x88] sm:$0xff] %v2265
      %2276 = vst [vmem:[#allocation3 + $0x90] sm:$0xff] %v2267
      %2277 = vst [vmem:[#allocation3 + $0x98] sm:$0xff] %v2269
      %v2278 = vld [vmem:[#allocation2] sm:$0xff]
      %v2279 = vld [vmem:[#allocation2 + $0x8] sm:$0xff]
      %v2280 = vld [vmem:[#allocation2 + $0x10] sm:$0xff]
      %v2281 = vld [vmem:[#allocation2 + $0x18] sm:$0xff]
      %v2282 = vld [vmem:[#allocation2 + $0x20] sm:$0xff]
      %v2283 = vld [vmem:[#allocation2 + $0x28] sm:$0xff]
      %v2284 = vld [vmem:[#allocation2 + $0x30] sm:$0xff]
      %v2285 = vld [vmem:[#allocation2 + $0x38] sm:$0xff]
      %v2286 = vld [vmem:[#allocation2 + $0x40] sm:$0xff]
      %v2287 = vld [vmem:[#allocation2 + $0x48] sm:$0xff]
      %v2288 = vld [vmem:[#allocation2 + $0x50] sm:$0xff]
      %v2289 = vld [vmem:[#allocation2 + $0x58] sm:$0xff]
      %v2290 = vld [vmem:[%s860] ss:$8 sm:$0x3]
      %v2292 = vlaneseq
      %v2293 = vshrl.u32 %v2292, 7
      %v2294 = vsub.s32 0, %v2293
      %v2295 = vrot.slane %v2290, %v2294
      %v2296 = vlaneseq
      %v2297 = vshrl.u32 %v2296, 7
      %v2298 = vsub.s32 1, %v2297
      %v2299 = vrot.slane %v2290, %v2298
      %2300 = vrot.lane.b32.xlu0 %v2295, 18
      %v2301 = vpop.permute.xlu0 %2300
      %2302 = vrot.lane.b32.xlu0 %v2299, 18
      %v2303 = vpop.permute.xlu0 %2302
      %v2304 = vsel %vm875, %v2301, %v2303
      %v2308 = vmul.f32 %v2278, %v2301
      %v2309 = vmul.f32 %v2279, %v2304
      %v2310 = vmul.f32 %v2280, %v2303
      %v2311 = vmul.f32 %v2281, %v2301
      %v2312 = vmul.f32 %v2282, %v2304
      %v2313 = vmul.f32 %v2283, %v2303
      %v2314 = vmul.f32 %v2284, %v2301
      %v2315 = vmul.f32 %v2285, %v2304
      %v2316 = vmul.f32 %v2286, %v2303
      %v2317 = vmul.f32 %v2287, %v2301
      %v2318 = vmul.f32 %v2288, %v2304
      %v2319 = vmul.f32 %v2289, %v2303
      %v2320 = vpack.c.bf16 %v2311, %v2308
      %v2321 = vpack.c.bf16 %v2312, %v2309
      %v2322 = vpack.c.bf16 %v2313, %v2310
      %v2323 = vpack.c.bf16 %v2317, %v2314
      %v2324 = vpack.c.bf16 %v2318, %v2315
      %v2325 = vpack.c.bf16 %v2319, %v2316
      %v2332 = vunpack.c.l.b16 %v2320
      %v2333 = vunpack.c.l.b16 %v2321
      %v2334 = vunpack.c.l.b16 %v2322
      %v2335 = vunpack.c.h.b16 %v2320
      %v2336 = vunpack.c.h.b16 %v2321
      %v2337 = vunpack.c.h.b16 %v2322
      %v2338 = vunpack.c.l.b16 %v2323
      %v2339 = vunpack.c.l.b16 %v2324
      %v2340 = vunpack.c.l.b16 %v2325
      %v2341 = vunpack.c.h.b16 %v2323
      %v2342 = vunpack.c.h.b16 %v2324
      %v2343 = vunpack.c.h.b16 %v2325
      %v2344 = vpack.c.b16 %v2333, %v2332
      %v2345 = vpack.c.b16 %v2334, %v2334
      %v2346 = vpack.c.b16 %v2336, %v2335
      %v2347 = vpack.c.b16 %v2337, %v2337
      %v2348 = vpack.c.b16 %v2339, %v2338
      %v2349 = vpack.c.b16 %v2340, %v2340
      %v2350 = vpack.c.b16 %v2342, %v2341
      %v2351 = vpack.c.b16 %v2343, %v2343
      %2352 = vrot.lane.b32.xlu0 %v2344, 110
      %v2353 = vpop.permute.xlu0 %2352
      %2354 = vrot.lane.b32.xlu0 %v2345, 110
      %v2355 = vpop.permute.xlu0 %2354
      %2356 = vrot.lane.b32.xlu0 %v2346, 110
      %v2357 = vpop.permute.xlu0 %2356
      %2358 = vrot.lane.b32.xlu0 %v2347, 110
      %v2359 = vpop.permute.xlu0 %2358
      %2360 = vrot.lane.b32.xlu0 %v2348, 110
      %v2361 = vpop.permute.xlu0 %2360
      %2362 = vrot.lane.b32.xlu0 %v2349, 110
      %v2363 = vpop.permute.xlu0 %2362
      %2364 = vrot.lane.b32.xlu0 %v2350, 110
      %v2365 = vpop.permute.xlu0 %2364
      %2366 = vrot.lane.b32.xlu0 %v2351, 110
      %v2367 = vpop.permute.xlu0 %2366
      %v2368 = vrot.slane %v2353, 4
      %v2369 = vrot.slane %v2355, 4
      %v2370 = vrot.slane %v2357, 4
      %v2371 = vrot.slane %v2359, 4
      %v2372 = vrot.slane %v2361, 4
      %v2373 = vrot.slane %v2363, 4
      %v2374 = vrot.slane %v2365, 4
      %v2375 = vrot.slane %v2367, 4
      %v2376 = vsel %vm480, %v2368, %v2369
      %v2377 = vsel %vm949, %v2353, %v2376
      %v2378 = vsel %vm480, %v2370, %v2371
      %v2379 = vsel %vm949, %v2357, %v2378
      %v2380 = vsel %vm480, %v2372, %v2373
      %v2381 = vsel %vm949, %v2361, %v2380
      %v2382 = vsel %vm480, %v2374, %v2375
      %v2383 = vsel %vm949, %v2365, %v2382
      %2388 = vst [vmem:[#allocation3 + $0xa0] sm:$0xff] %v2377
      %2389 = vst [vmem:[#allocation3 + $0xa8] sm:$0xff] %v2379
      %2390 = vst [vmem:[#allocation3 + $0xb0] sm:$0xff] %v2381
      %2391 = vst [vmem:[#allocation3 + $0xb8] sm:$0xff] %v2383
      %v2392 = vld [vmem:[#allocation2] sm:$0xff]
      %v2393 = vld [vmem:[#allocation2 + $0x8] sm:$0xff]
      %v2394 = vld [vmem:[#allocation2 + $0x10] sm:$0xff]
      %v2395 = vld [vmem:[#allocation2 + $0x18] sm:$0xff]
      %v2396 = vld [vmem:[#allocation2 + $0x20] sm:$0xff]
      %v2397 = vld [vmem:[#allocation2 + $0x28] sm:$0xff]
      %v2398 = vld [vmem:[#allocation2 + $0x30] sm:$0xff]
      %v2399 = vld [vmem:[#allocation2 + $0x38] sm:$0xff]
      %v2400 = vld [vmem:[#allocation2 + $0x40] sm:$0xff]
      %v2401 = vld [vmem:[#allocation2 + $0x48] sm:$0xff]
      %v2402 = vld [vmem:[#allocation2 + $0x50] sm:$0xff]
      %v2403 = vld [vmem:[#allocation2 + $0x58] sm:$0xff]
      %v2404 = vld [vmem:[%s977] ss:$8 sm:$0x3]
      %v2406 = vlaneseq
      %v2407 = vshrl.u32 %v2406, 7
      %v2408 = vsub.s32 0, %v2407
      %v2409 = vrot.slane %v2404, %v2408
      %v2410 = vlaneseq
      %v2411 = vshrl.u32 %v2410, 7
      %v2412 = vsub.s32 1, %v2411
      %v2413 = vrot.slane %v2404, %v2412
      %2414 = vrot.lane.b32.xlu0 %v2409, 32
      %v2415 = vpop.permute.xlu0 %2414
      %2416 = vrot.lane.b32.xlu0 %v2413, 32
      %v2417 = vpop.permute.xlu0 %2416
      %v2418 = vsel %vm992, %v2415, %v2417
      %v2422 = vmul.f32 %v2392, %v2415
      %v2423 = vmul.f32 %v2393, %v2418
      %v2424 = vmul.f32 %v2394, %v2417
      %v2425 = vmul.f32 %v2395, %v2415
      %v2426 = vmul.f32 %v2396, %v2418
      %v2427 = vmul.f32 %v2397, %v2417
      %v2428 = vmul.f32 %v2398, %v2415
      %v2429 = vmul.f32 %v2399, %v2418
      %v2430 = vmul.f32 %v2400, %v2417
      %v2431 = vmul.f32 %v2401, %v2415
      %v2432 = vmul.f32 %v2402, %v2418
      %v2433 = vmul.f32 %v2403, %v2417
      %v2434 = vpack.c.bf16 %v2425, %v2422
      %v2435 = vpack.c.bf16 %v2426, %v2423
      %v2436 = vpack.c.bf16 %v2427, %v2424
      %v2437 = vpack.c.bf16 %v2431, %v2428
      %v2438 = vpack.c.bf16 %v2432, %v2429
      %v2439 = vpack.c.bf16 %v2433, %v2430
      %v2446 = vunpack.c.l.b16 %v2434
      %v2447 = vunpack.c.l.b16 %v2435
      %v2448 = vunpack.c.l.b16 %v2436
      %v2449 = vunpack.c.h.b16 %v2434
      %v2450 = vunpack.c.h.b16 %v2435
      %v2451 = vunpack.c.h.b16 %v2436
      %v2452 = vunpack.c.l.b16 %v2437
      %v2453 = vunpack.c.l.b16 %v2438
      %v2454 = vunpack.c.l.b16 %v2439
      %v2455 = vunpack.c.h.b16 %v2437
      %v2456 = vunpack.c.h.b16 %v2438
      %v2457 = vunpack.c.h.b16 %v2439
      %v2458 = vpack.c.b16 %v2447, %v2446
      %v2459 = vpack.c.b16 %v2448, %v2448
      %v2460 = vpack.c.b16 %v2450, %v2449
      %v2461 = vpack.c.b16 %v2451, %v2451
      %v2462 = vpack.c.b16 %v2453, %v2452
      %v2463 = vpack.c.b16 %v2454, %v2454
      %v2464 = vpack.c.b16 %v2456, %v2455
      %v2465 = vpack.c.b16 %v2457, %v2457
      %2466 = vrot.lane.b32.xlu0 %v2458, 96
      %v2467 = vpop.permute.xlu0 %2466
      %2468 = vrot.lane.b32.xlu0 %v2459, 96
      %v2469 = vpop.permute.xlu0 %2468
      %2470 = vrot.lane.b32.xlu0 %v2460, 96
      %v2471 = vpop.permute.xlu0 %2470
      %2472 = vrot.lane.b32.xlu0 %v2461, 96
      %v2473 = vpop.permute.xlu0 %2472
      %2474 = vrot.lane.b32.xlu0 %v2462, 96
      %v2475 = vpop.permute.xlu0 %2474
      %2476 = vrot.lane.b32.xlu0 %v2463, 96
      %v2477 = vpop.permute.xlu0 %2476
      %2478 = vrot.lane.b32.xlu0 %v2464, 96
      %v2479 = vpop.permute.xlu0 %2478
      %2480 = vrot.lane.b32.xlu0 %v2465, 96
      %v2481 = vpop.permute.xlu0 %2480
      %v2482 = vrot.slane %v2467, 4
      %v2483 = vrot.slane %v2469, 4
      %v2484 = vrot.slane %v2471, 4
      %v2485 = vrot.slane %v2473, 4
      %v2486 = vrot.slane %v2475, 4
      %v2487 = vrot.slane %v2477, 4
      %v2488 = vrot.slane %v2479, 4
      %v2489 = vrot.slane %v2481, 4
      %v2490 = vsel %vm480, %v2482, %v2483
      %v2491 = vsel %vm1066, %v2467, %v2490
      %v2492 = vsel %vm480, %v2484, %v2485
      %v2493 = vsel %vm1066, %v2471, %v2492
      %v2494 = vsel %vm480, %v2486, %v2487
      %v2495 = vsel %vm1066, %v2475, %v2494
      %v2496 = vsel %vm480, %v2488, %v2489
      %v2497 = vsel %vm1066, %v2479, %v2496
      %2502 = vst [vmem:[#allocation3 + $0xc0] sm:$0xff] %v2491
      %2503 = vst [vmem:[#allocation3 + $0xc8] sm:$0xff] %v2493
      %2504 = vst [vmem:[#allocation3 + $0xd0] sm:$0xff] %v2495
      %2505 = vst [vmem:[#allocation3 + $0xd8] sm:$0xff] %v2497
      %v2506 = vld [vmem:[#allocation2] sm:$0xff]
      %v2507 = vld [vmem:[#allocation2 + $0x8] sm:$0xff]
      %v2508 = vld [vmem:[#allocation2 + $0x10] sm:$0xff]
      %v2509 = vld [vmem:[#allocation2 + $0x18] sm:$0xff]
      %v2510 = vld [vmem:[#allocation2 + $0x20] sm:$0xff]
      %v2511 = vld [vmem:[#allocation2 + $0x28] sm:$0xff]
      %v2512 = vld [vmem:[#allocation2 + $0x30] sm:$0xff]
      %v2513 = vld [vmem:[#allocation2 + $0x38] sm:$0xff]
      %v2514 = vld [vmem:[#allocation2 + $0x40] sm:$0xff]
      %v2515 = vld [vmem:[#allocation2 + $0x48] sm:$0xff]
      %v2516 = vld [vmem:[#allocation2 + $0x50] sm:$0xff]
      %v2517 = vld [vmem:[#allocation2 + $0x58] sm:$0xff]
      %v2518 = vld [vmem:[%s1094] ss:$8 sm:$0x3]
      %v2520 = vlaneseq
      %v2521 = vshrl.u32 %v2520, 7
      %v2522 = vsub.s32 0, %v2521
      %v2523 = vrot.slane %v2518, %v2522
      %v2524 = vlaneseq
      %v2525 = vshrl.u32 %v2524, 7
      %v2526 = vsub.s32 1, %v2525
      %v2527 = vrot.slane %v2518, %v2526
      %2528 = vrot.lane.b32.xlu0 %v2523, 33
      %v2529 = vpop.permute.xlu0 %2528
      %2530 = vrot.lane.b32.xlu0 %v2527, 33
      %v2531 = vpop.permute.xlu0 %2530
      %v2532 = vsel %vm1109, %v2529, %v2531
      %v2536 = vmul.f32 %v2506, %v2529
      %v2537 = vmul.f32 %v2507, %v2532
      %v2538 = vmul.f32 %v2508, %v2531
      %v2539 = vmul.f32 %v2509, %v2529
      %v2540 = vmul.f32 %v2510, %v2532
      %v2541 = vmul.f32 %v2511, %v2531
      %v2542 = vmul.f32 %v2512, %v2529
      %v2543 = vmul.f32 %v2513, %v2532
      %v2544 = vmul.f32 %v2514, %v2531
      %v2545 = vmul.f32 %v2515, %v2529
      %v2546 = vmul.f32 %v2516, %v2532
      %v2547 = vmul.f32 %v2517, %v2531
      %v2548 = vpack.c.bf16 %v2539, %v2536
      %v2549 = vpack.c.bf16 %v2540, %v2537
      %v2550 = vpack.c.bf16 %v2541, %v2538
      %v2551 = vpack.c.bf16 %v2545, %v2542
      %v2552 = vpack.c.bf16 %v2546, %v2543
      %v2553 = vpack.c.bf16 %v2547, %v2544
      %v2560 = vunpack.c.l.b16 %v2548
      %v2561 = vunpack.c.l.b16 %v2549
      %v2562 = vunpack.c.l.b16 %v2550
      %v2563 = vunpack.c.h.b16 %v2548
      %v2564 = vunpack.c.h.b16 %v2549
      %v2565 = vunpack.c.h.b16 %v2550
      %v2566 = vunpack.c.l.b16 %v2551
      %v2567 = vunpack.c.l.b16 %v2552
      %v2568 = vunpack.c.l.b16 %v2553
      %v2569 = vunpack.c.h.b16 %v2551
      %v2570 = vunpack.c.h.b16 %v2552
      %v2571 = vunpack.c.h.b16 %v2553
      %v2572 = vpack.c.b16 %v2561, %v2560
      %v2573 = vpack.c.b16 %v2562, %v2562
      %v2574 = vpack.c.b16 %v2564, %v2563
      %v2575 = vpack.c.b16 %v2565, %v2565
      %v2576 = vpack.c.b16 %v2567, %v2566
      %v2577 = vpack.c.b16 %v2568, %v2568
      %v2578 = vpack.c.b16 %v2570, %v2569
      %v2579 = vpack.c.b16 %v2571, %v2571
      %2580 = vrot.lane.b32.xlu0 %v2572, 95
      %v2581 = vpop.permute.xlu0 %2580
      %2582 = vrot.lane.b32.xlu0 %v2573, 95
      %v2583 = vpop.permute.xlu0 %2582
      %2584 = vrot.lane.b32.xlu0 %v2574, 95
      %v2585 = vpop.permute.xlu0 %2584
      %2586 = vrot.lane.b32.xlu0 %v2575, 95
      %v2587 = vpop.permute.xlu0 %2586
      %2588 = vrot.lane.b32.xlu0 %v2576, 95
      %v2589 = vpop.permute.xlu0 %2588
      %2590 = vrot.lane.b32.xlu0 %v2577, 95
      %v2591 = vpop.permute.xlu0 %2590
      %2592 = vrot.lane.b32.xlu0 %v2578, 95
      %v2593 = vpop.permute.xlu0 %2592
      %2594 = vrot.lane.b32.xlu0 %v2579, 95
      %v2595 = vpop.permute.xlu0 %2594
      %v2596 = vrot.slane %v2581, 4
      %v2597 = vrot.slane %v2583, 4
      %v2598 = vrot.slane %v2585, 4
      %v2599 = vrot.slane %v2587, 4
      %v2600 = vrot.slane %v2589, 4
      %v2601 = vrot.slane %v2591, 4
      %v2602 = vrot.slane %v2593, 4
      %v2603 = vrot.slane %v2595, 4
      %v2604 = vsel %vm480, %v2596, %v2597
      %v2605 = vsel %vm1183, %v2581, %v2604
      %v2606 = vsel %vm480, %v2598, %v2599
      %v2607 = vsel %vm1183, %v2585, %v2606
      %v2608 = vsel %vm480, %v2600, %v2601
      %v2609 = vsel %vm1183, %v2589, %v2608
      %v2610 = vsel %vm480, %v2602, %v2603
      %v2611 = vsel %vm1183, %v2593, %v2610
      %2616 = vst [vmem:[#allocation3 + $0xe0] sm:$0xff] %v2605
      %2617 = vst [vmem:[#allocation3 + $0xe8] sm:$0xff] %v2607
      %2618 = vst [vmem:[#allocation3 + $0xf0] sm:$0xff] %v2609
      %2619 = vst [vmem:[#allocation3 + $0xf8] sm:$0xff] %v2611
      %v2620 = vld [vmem:[#allocation2] sm:$0xff]
      %v2621 = vld [vmem:[#allocation2 + $0x8] sm:$0xff]
      %v2622 = vld [vmem:[#allocation2 + $0x10] sm:$0xff]
      %v2623 = vld [vmem:[#allocation2 + $0x18] sm:$0xff]
      %v2624 = vld [vmem:[#allocation2 + $0x20] sm:$0xff]
      %v2625 = vld [vmem:[#allocation2 + $0x28] sm:$0xff]
      %v2626 = vld [vmem:[#allocation2 + $0x30] sm:$0xff]
      %v2627 = vld [vmem:[#allocation2 + $0x38] sm:$0xff]
      %v2628 = vld [vmem:[#allocation2 + $0x40] sm:$0xff]
      %v2629 = vld [vmem:[#allocation2 + $0x48] sm:$0xff]
      %v2630 = vld [vmem:[#allocation2 + $0x50] sm:$0xff]
      %v2631 = vld [vmem:[#allocation2 + $0x58] sm:$0xff]
      %v2632 = vld [vmem:[%s1211] ss:$8 sm:$0x3]
      %v2634 = vlaneseq
      %v2635 = vshrl.u32 %v2634, 7
      %v2636 = vsub.s32 0, %v2635
      %v2637 = vrot.slane %v2632, %v2636
      %v2638 = vlaneseq
      %v2639 = vshrl.u32 %v2638, 7
      %v2640 = vsub.s32 1, %v2639
      %v2641 = vrot.slane %v2632, %v2640
      %2642 = vrot.lane.b32.xlu0 %v2637, 34
      %v2643 = vpop.permute.xlu0 %2642
      %2644 = vrot.lane.b32.xlu0 %v2641, 34
      %v2645 = vpop.permute.xlu0 %2644
      %v2646 = vsel %vm1226, %v2643, %v2645
      %v2650 = vmul.f32 %v2620, %v2643
      %v2651 = vmul.f32 %v2621, %v2646
      %v2652 = vmul.f32 %v2622, %v2645
      %v2653 = vmul.f32 %v2623, %v2643
      %v2654 = vmul.f32 %v2624, %v2646
      %v2655 = vmul.f32 %v2625, %v2645
      %v2656 = vmul.f32 %v2626, %v2643
      %v2657 = vmul.f32 %v2627, %v2646
      %v2658 = vmul.f32 %v2628, %v2645
      %v2659 = vmul.f32 %v2629, %v2643
      %v2660 = vmul.f32 %v2630, %v2646
      %v2661 = vmul.f32 %v2631, %v2645
      %v2662 = vpack.c.bf16 %v2653, %v2650
      %v2663 = vpack.c.bf16 %v2654, %v2651
      %v2664 = vpack.c.bf16 %v2655, %v2652
      %v2665 = vpack.c.bf16 %v2659, %v2656
      %v2666 = vpack.c.bf16 %v2660, %v2657
      %v2667 = vpack.c.bf16 %v2661, %v2658
      %v2674 = vunpack.c.l.b16 %v2662
      %v2675 = vunpack.c.l.b16 %v2663
      %v2676 = vunpack.c.l.b16 %v2664
      %v2677 = vunpack.c.h.b16 %v2662
      %v2678 = vunpack.c.h.b16 %v2663
      %v2679 = vunpack.c.h.b16 %v2664
      %v2680 = vunpack.c.l.b16 %v2665
      %v2681 = vunpack.c.l.b16 %v2666
      %v2682 = vunpack.c.l.b16 %v2667
      %v2683 = vunpack.c.h.b16 %v2665
      %v2684 = vunpack.c.h.b16 %v2666
      %v2685 = vunpack.c.h.b16 %v2667
      %v2686 = vpack.c.b16 %v2675, %v2674
      %v2687 = vpack.c.b16 %v2676, %v2676
      %v2688 = vpack.c.b16 %v2678, %v2677
      %v2689 = vpack.c.b16 %v2679, %v2679
      %v2690 = vpack.c.b16 %v2681, %v2680
      %v2691 = vpack.c.b16 %v2682, %v2682
      %v2692 = vpack.c.b16 %v2684, %v2683
      %v2693 = vpack.c.b16 %v2685, %v2685
      %2694 = vrot.lane.b32.xlu0 %v2686, 94
      %v2695 = vpop.permute.xlu0 %2694
      %2696 = vrot.lane.b32.xlu0 %v2687, 94
      %v2697 = vpop.permute.xlu0 %2696
      %2698 = vrot.lane.b32.xlu0 %v2688, 94
      %v2699 = vpop.permute.xlu0 %2698
      %2700 = vrot.lane.b32.xlu0 %v2689, 94
      %v2701 = vpop.permute.xlu0 %2700
      %2702 = vrot.lane.b32.xlu0 %v2690, 94
      %v2703 = vpop.permute.xlu0 %2702
      %2704 = vrot.lane.b32.xlu0 %v2691, 94
      %v2705 = vpop.permute.xlu0 %2704
      %2706 = vrot.lane.b32.xlu0 %v2692, 94
      %v2707 = vpop.permute.xlu0 %2706
      %2708 = vrot.lane.b32.xlu0 %v2693, 94
      %v2709 = vpop.permute.xlu0 %2708
      %v2710 = vrot.slane %v2695, 4
      %v2711 = vrot.slane %v2697, 4
      %v2712 = vrot.slane %v2699, 4
      %v2713 = vrot.slane %v2701, 4
      %v2714 = vrot.slane %v2703, 4
      %v2715 = vrot.slane %v2705, 4
      %v2716 = vrot.slane %v2707, 4
      %v2717 = vrot.slane %v2709, 4
      %v2718 = vsel %vm480, %v2710, %v2711
      %v2719 = vsel %vm1300, %v2695, %v2718
      %v2720 = vsel %vm480, %v2712, %v2713
      %v2721 = vsel %vm1300, %v2699, %v2720
      %v2722 = vsel %vm480, %v2714, %v2715
      %v2723 = vsel %vm1300, %v2703, %v2722
      %v2724 = vsel %vm480, %v2716, %v2717
      %v2725 = vsel %vm1300, %v2707, %v2724
      %2730 = vst [vmem:[#allocation3 + $0x100] sm:$0xff] %v2719
      %2731 = vst [vmem:[#allocation3 + $0x108] sm:$0xff] %v2721
      %2732 = vst [vmem:[#allocation3 + $0x110] sm:$0xff] %v2723
      %2733 = vst [vmem:[#allocation3 + $0x118] sm:$0xff] %v2725
      %v2734 = vld [vmem:[%s3] sm:$0xff]
      %v2735 = vld [vmem:[%s3 + $0x8] sm:$0xf]
      %v2736 = vld [vmem:[%s3 + $0xc] sm:$0xff]
      %v2737 = vld [vmem:[%s3 + $0x14] sm:$0xf]
      %v2738 = vld [vmem:[%s3 + $0x18] sm:$0xff]
      %v2739 = vld [vmem:[%s3 + $0x20] sm:$0xf]
      %v2740 = vld [vmem:[%s3 + $0x24] sm:$0xff]
      %v2741 = vld [vmem:[%s3 + $0x2c] sm:$0xf]
      %v2742 = vld [vmem:[#allocation3] sm:$0xff]
      %v2743 = vld [vmem:[#allocation3 + $0x8] sm:$0xff]
      %v2744 = vld [vmem:[#allocation3 + $0x10] sm:$0xff]
      %v2745 = vld [vmem:[#allocation3 + $0x18] sm:$0xff]
      %v2746 = vld [vmem:[#allocation3 + $0x20] sm:$0xff]
      %v2747 = vld [vmem:[#allocation3 + $0x28] sm:$0xff]
      %v2748 = vld [vmem:[#allocation3 + $0x30] sm:$0xff]
      %v2749 = vld [vmem:[#allocation3 + $0x38] sm:$0xff]
      %v2750 = vld [vmem:[#allocation3 + $0x40] sm:$0xff]
      %v2751 = vld [vmem:[#allocation3 + $0x48] sm:$0xff]
      %v2752 = vld [vmem:[#allocation3 + $0x50] sm:$0xff]
      %v2753 = vld [vmem:[#allocation3 + $0x58] sm:$0xff]
      %v2754 = vld [vmem:[#allocation3 + $0x60] sm:$0xff]
      %v2755 = vld [vmem:[#allocation3 + $0x68] sm:$0xff]
      %v2756 = vld [vmem:[#allocation3 + $0x70] sm:$0xff]
      %v2757 = vld [vmem:[#allocation3 + $0x78] sm:$0xff]
      %v2758 = vld [vmem:[#allocation3 + $0x80] sm:$0xff]
      %v2759 = vld [vmem:[#allocation3 + $0x88] sm:$0xff]
      %v2760 = vld [vmem:[#allocation3 + $0x90] sm:$0xff]
      %v2761 = vld [vmem:[#allocation3 + $0x98] sm:$0xff]
      %v2762 = vld [vmem:[#allocation3 + $0xa0] sm:$0xff]
      %v2763 = vld [vmem:[#allocation3 + $0xa8] sm:$0xff]
      %v2764 = vld [vmem:[#allocation3 + $0xb0] sm:$0xff]
      %v2765 = vld [vmem:[#allocation3 + $0xb8] sm:$0xff]
      %v2766 = vld [vmem:[#allocation3 + $0xc0] sm:$0xff]
      %v2767 = vld [vmem:[#allocation3 + $0xc8] sm:$0xff]
      %v2768 = vld [vmem:[#allocation3 + $0xd0] sm:$0xff]
      %v2769 = vld [vmem:[#allocation3 + $0xd8] sm:$0xff]
      %v2770 = vld [vmem:[#allocation3 + $0xe0] sm:$0xff]
      %v2771 = vld [vmem:[#allocation3 + $0xe8] sm:$0xff]
      %v2772 = vld [vmem:[#allocation3 + $0xf0] sm:$0xff]
      %v2773 = vld [vmem:[#allocation3 + $0xf8] sm:$0xff]
      %v2774 = vld [vmem:[#allocation3 + $0x100] sm:$0xff]
      %v2775 = vld [vmem:[#allocation3 + $0x108] sm:$0xff]
      %v2776 = vld [vmem:[#allocation3 + $0x110] sm:$0xff]
      %v2777 = vld [vmem:[#allocation3 + $0x118] sm:$0xff]
      %v2778 = vld [vmem:[%s4] sm:$0xff]
      %v2779 = vld [vmem:[%s4 + $0x8] sm:$0xff]
      %v2780 = vld [vmem:[%s4 + $0x10] sm:$0xff]
      %v2781 = vld [vmem:[%s4 + $0x18] sm:$0xff]
      %2783 = vset.pattern.permute.xlu0 0
      %2784 = vperm.xlu0 %2783, %v2778
      %v2785 = vpop.permute.xlu0 %2784
      %2788 = vset.pattern.permute.xlu0 0
      %2789 = vperm.xlu0 %2788, %v2779
      %v2790 = vpop.permute.xlu0 %2789
      %2793 = vset.pattern.permute.xlu0 0
      %2794 = vperm.xlu0 %2793, %v2780
      %v2795 = vpop.permute.xlu0 %2794
      %2798 = vset.pattern.permute.xlu0 0
      %2799 = vperm.xlu0 %2798, %v2781
      %v2800 = vpop.permute.xlu0 %2799
      %v2810 = vunpack.c.l.b16 %v2734
      %v2811 = vunpack.c.h.b16 %v2734
      %v2812 = vunpack.c.l.b16 %v2735
      %v2813 = vunpack.c.l.b16 %v2736
      %v2814 = vunpack.c.h.b16 %v2736
      %v2815 = vunpack.c.l.b16 %v2737
      %v2816 = vunpack.c.l.b16 %v2738
      %v2817 = vunpack.c.h.b16 %v2738
      %v2818 = vunpack.c.l.b16 %v2739
      %v2819 = vunpack.c.l.b16 %v2740
      %v2820 = vunpack.c.h.b16 %v2740
      %v2821 = vunpack.c.l.b16 %v2741
      %v2822 = vpack.c.b16 %v2813, %v2810
      %v2823 = vpack.c.b16 %v2814, %v2811
      %v2824 = vpack.c.b16 %v2815, %v2812
      %v2825 = vpack.c.b16 %v2819, %v2816
      %v2826 = vpack.c.b16 %v2820, %v2817
      %v2827 = vpack.c.b16 %v2821, %v2818
      %v2868 = vunpack.c.l.b16 %v2742
      %v2869 = vunpack.c.h.b16 %v2742
      %v2870 = vunpack.c.l.b16 %v2743
      %v2871 = vunpack.c.h.b16 %v2743
      %v2872 = vunpack.c.l.b16 %v2744
      %v2873 = vunpack.c.h.b16 %v2744
      %v2874 = vunpack.c.l.b16 %v2745
      %v2875 = vunpack.c.h.b16 %v2745
      %v2876 = vunpack.c.l.b16 %v2746
      %v2877 = vunpack.c.h.b16 %v2746
      %v2878 = vunpack.c.l.b16 %v2747
      %v2879 = vunpack.c.h.b16 %v2747
      %v2880 = vunpack.c.l.b16 %v2748
      %v2881 = vunpack.c.h.b16 %v2748
      %v2882 = vunpack.c.l.b16 %v2749
      %v2883 = vunpack.c.h.b16 %v2749
      %v2884 = vunpack.c.l.b16 %v2750
      %v2885 = vunpack.c.h.b16 %v2750
      %v2886 = vunpack.c.l.b16 %v2751
      %v2887 = vunpack.c.h.b16 %v2751
      %v2888 = vunpack.c.l.b16 %v2752
      %v2889 = vunpack.c.h.b16 %v2752
      %v2890 = vunpack.c.l.b16 %v2753
      %v2891 = vunpack.c.h.b16 %v2753
      %v2892 = vunpack.c.l.b16 %v2754
      %v2893 = vunpack.c.h.b16 %v2754
      %v2894 = vunpack.c.l.b16 %v2755
      %v2895 = vunpack.c.h.b16 %v2755
      %v2896 = vunpack.c.l.b16 %v2756
      %v2897 = vunpack.c.h.b16 %v2756
      %v2898 = vunpack.c.l.b16 %v2757
      %v2899 = vunpack.c.h.b16 %v2757
      %v2900 = vunpack.c.l.b16 %v2758
      %v2901 = vunpack.c.h.b16 %v2758
      %v2902 = vunpack.c.l.b16 %v2759
      %v2903 = vunpack.c.h.b16 %v2759
      %v2904 = vunpack.c.l.b16 %v2760
      %v2905 = vunpack.c.h.b16 %v2760
      %v2906 = vunpack.c.l.b16 %v2761
      %v2907 = vunpack.c.h.b16 %v2761
      %v2908 = vunpack.c.l.b16 %v2762
      %v2909 = vunpack.c.h.b16 %v2762
      %v2910 = vunpack.c.l.b16 %v2763
      %v2911 = vunpack.c.h.b16 %v2763
      %v2912 = vunpack.c.l.b16 %v2764
      %v2913 = vunpack.c.h.b16 %v2764
      %v2914 = vunpack.c.l.b16 %v2765
      %v2915 = vunpack.c.h.b16 %v2765
      %v2916 = vunpack.c.l.b16 %v2766
      %v2917 = vunpack.c.h.b16 %v2766
      %v2918 = vunpack.c.l.b16 %v2767
      %v2919 = vunpack.c.h.b16 %v2767
      %v2920 = vunpack.c.l.b16 %v2768
      %v2921 = vunpack.c.h.b16 %v2768
      %v2922 = vunpack.c.l.b16 %v2769
      %v2923 = vunpack.c.h.b16 %v2769
      %v2924 = vunpack.c.l.b16 %v2770
      %v2925 = vunpack.c.h.b16 %v2770
      %v2926 = vunpack.c.l.b16 %v2771
      %v2927 = vunpack.c.h.b16 %v2771
      %v2928 = vunpack.c.l.b16 %v2772
      %v2929 = vunpack.c.h.b16 %v2772
      %v2930 = vunpack.c.l.b16 %v2773
      %v2931 = vunpack.c.h.b16 %v2773
      %v2932 = vunpack.c.l.b16 %v2774
      %v2933 = vunpack.c.h.b16 %v2774
      %v2934 = vunpack.c.l.b16 %v2775
      %v2935 = vunpack.c.h.b16 %v2775
      %v2936 = vunpack.c.l.b16 %v2776
      %v2937 = vunpack.c.h.b16 %v2776
      %v2938 = vunpack.c.l.b16 %v2777
      %v2939 = vunpack.c.h.b16 %v2777
      %v2940 = vpack.c.b16 %v2870, %v2868
      %v2941 = vpack.c.b16 %v2871, %v2869
      %v2942 = vpack.c.b16 %v2874, %v2872
      %v2943 = vpack.c.b16 %v2875, %v2873
      %v2944 = vpack.c.b16 %v2878, %v2876
      %v2945 = vpack.c.b16 %v2879, %v2877
      %v2946 = vpack.c.b16 %v2882, %v2880
      %v2947 = vpack.c.b16 %v2883, %v2881
      %v2948 = vpack.c.b16 %v2886, %v2884
      %v2949 = vpack.c.b16 %v2887, %v2885
      %v2950 = vpack.c.b16 %v2890, %v2888
      %v2951 = vpack.c.b16 %v2891, %v2889
      %v2952 = vpack.c.b16 %v2894, %v2892
      %v2953 = vpack.c.b16 %v2895, %v2893
      %v2954 = vpack.c.b16 %v2898, %v2896
      %v2955 = vpack.c.b16 %v2899, %v2897
      %v2956 = vpack.c.b16 %v2902, %v2900
      %v2957 = vpack.c.b16 %v2903, %v2901
      %v2958 = vpack.c.b16 %v2906, %v2904
      %v2959 = vpack.c.b16 %v2907, %v2905
      %v2960 = vpack.c.b16 %v2910, %v2908
      %v2961 = vpack.c.b16 %v2911, %v2909
      %v2962 = vpack.c.b16 %v2914, %v2912
      %v2963 = vpack.c.b16 %v2915, %v2913
      %v2964 = vpack.c.b16 %v2918, %v2916
      %v2965 = vpack.c.b16 %v2919, %v2917
      %v2966 = vpack.c.b16 %v2922, %v2920
      %v2967 = vpack.c.b16 %v2923, %v2921
      %v2968 = vpack.c.b16 %v2926, %v2924
      %v2969 = vpack.c.b16 %v2927, %v2925
      %v2970 = vpack.c.b16 %v2930, %v2928
      %v2971 = vpack.c.b16 %v2931, %v2929
      %v2972 = vpack.c.b16 %v2934, %v2932
      %v2973 = vpack.c.b16 %v2935, %v2933
      %v2974 = vpack.c.b16 %v2938, %v2936
      %v2975 = vpack.c.b16 %v2939, %v2937
      %v3013 = vsel %vm992, %v2824, 0
      %v3016 = vsel %vm992, %v2827, 0
      %3018 = vmatprep.subr.bf16.mxu0 %v2955
      %3019 = vmatpush1.bf16.msra.mxu0 %v2954
      %3020 = vmatprep.subr.bf16.mxu0 %v2953
      %3021 = vmatpush1.bf16.msra.mxu0 %v2952
      %3022 = vmatprep.subr.bf16.mxu0 %v2951
      %3023 = vmatpush1.bf16.msra.mxu0 %v2950
      %3024 = vmatprep.subr.bf16.mxu0 %v2949
      %3025 = vmatpush1.bf16.msra.mxu0 %v2948
      %3026 = vmatprep.subr.bf16.mxu0 %v2947
      %3027 = vmatpush1.bf16.msra.mxu0 %v2946
      %3028 = vmatprep.subr.bf16.mxu0 %v2945
      %3029 = vmatpush1.bf16.msra.mxu0 %v2944
      %3030 = vmatprep.subr.bf16.mxu0 %v2943
      %3031 = vmatpush1.bf16.msra.mxu0 %v2942
      %3032 = vmatprep.subr.bf16.mxu0 %v2941
      %3033 = vmatpush1.bf16.msra.mxu0 %v2940
      %3034 = vmatprep.subr.bf16.mxu0 %v2971
      %3035 = vmatpush2.bf16.msra.mxu0 %v2970
      %3036 = vmatprep.subr.bf16.mxu0 %v2969
      %3037 = vmatpush2.bf16.msra.mxu0 %v2968
      %3038 = vmatprep.subr.bf16.mxu0 %v2967
      %3039 = vmatpush2.bf16.msra.mxu0 %v2966
      %3040 = vmatprep.subr.bf16.mxu0 %v2965
      %3041 = vmatpush2.bf16.msra.mxu0 %v2964
      %3042 = vmatprep.subr.bf16.mxu0 %v2963
      %3043 = vmatpush2.bf16.msra.mxu0 %v2962
      %3044 = vmatprep.subr.bf16.mxu0 %v2961
      %3045 = vmatpush2.bf16.msra.mxu0 %v2960
      %3046 = vmatprep.subr.bf16.mxu0 %v2959
      %3047 = vmatpush2.bf16.msra.mxu0 %v2958
      %3048 = vmatprep.subr.bf16.mxu0 %v2957
      %3049 = vmatpush2.bf16.msra.mxu0 %v2956
      %3050 = vmatprep.mubr.bf16.mxu0 %v2823
      %3051 = vmatmul.mubr.bf16.gmra.mxu0 %v2822
      %v3052 = vpop.f32.mrf.mxu0
      %v3053 = vadd.f32 %v2785, %v3052
      %v3054 = vpop.f32.mrf.mxu0
      %v3055 = vadd.f32 %v2785, %v3054
      %v3056 = vpop.f32.mrf.mxu0
      %v3057 = vadd.f32 %v2790, %v3056
      %v3058 = vpop.f32.mrf.mxu0
      %v3059 = vadd.f32 %v2790, %v3058
      %3060 = vmatprep.mubr.bf16.mxu0 %v2826
      %3061 = vmatmul.mubr.bf16.gmra.mxu0 %v2825
      %v3062 = vpop.f32.mrf.mxu0
      %v3063 = vadd.f32 %v2795, %v3062
      %v3064 = vpop.f32.mrf.mxu0
      %v3065 = vadd.f32 %v2795, %v3064
      %v3066 = vpop.f32.mrf.mxu0
      %v3067 = vadd.f32 %v2800, %v3066
      %v3068 = vpop.f32.mrf.mxu0
      %v3069 = vadd.f32 %v2800, %v3068
      %3070 = vdwg.mxu0
      %3071 = vmatprep.subr.bf16.mxu0 0
      %3072 = vmatpush1.bf16.msra.mxu0 0
      %3073 = vmatprep.subr.bf16.mxu0 0
      %3074 = vmatpush1.bf16.msra.mxu0 0
      %3075 = vmatprep.subr.bf16.mxu0 0
      %3076 = vmatpush1.bf16.msra.mxu0 0
      %3077 = vmatprep.subr.bf16.mxu0 0
      %3078 = vmatpush1.bf16.msra.mxu0 0
      %3079 = vmatprep.subr.bf16.mxu0 0
      %3080 = vmatpush1.bf16.msra.mxu0 0
      %3081 = vmatprep.subr.bf16.mxu0 0
      %3082 = vmatpush1.bf16.msra.mxu0 0
      %3083 = vmatprep.subr.bf16.mxu0 %v2975
      %3084 = vmatpush1.bf16.msra.mxu0 %v2974
      %3085 = vmatprep.subr.bf16.mxu0 %v2973
      %3086 = vmatpush1.bf16.msra.mxu0 %v2972
      %3087 = vmatprep.subr.bf16.mxu0 0
      %3088 = vmatpush2.bf16.msra.mxu0 0
      %3089 = vmatprep.subr.bf16.mxu0 0
      %3090 = vmatpush2.bf16.msra.mxu0 0
      %3091 = vmatprep.subr.bf16.mxu0 0
      %3092 = vmatpush2.bf16.msra.mxu0 0
      %3093 = vmatprep.subr.bf16.mxu0 0
      %3094 = vmatpush2.bf16.msra.mxu0 0
      %3095 = vmatprep.subr.bf16.mxu0 0
      %3096 = vmatpush2.bf16.msra.mxu0 0
      %3097 = vmatprep.subr.bf16.mxu0 0
      %3098 = vmatpush2.bf16.msra.mxu0 0
      %3099 = vmatprep.subr.bf16.mxu0 0
      %3100 = vmatpush2.bf16.msra.mxu0 0
      %3101 = vmatprep.subr.bf16.mxu0 0
      %3102 = vmatpush2.bf16.msra.mxu0 0
      %3103 = vmatprep.mubr.bf16.mxu0 0
      %3104 = vmatmul.mubr.bf16.gmra.mxu0 %v3013
      %v3105 = vpop.f32.mrf.mxu0
      %v3106 = vadd.f32 %v3053, %v3105
      %v3107 = vpop.f32.mrf.mxu0
      %v3108 = vadd.f32 %v3055, %v3107
      %v3109 = vpop.f32.mrf.mxu0
      %v3110 = vadd.f32 %v3057, %v3109
      %v3111 = vpop.f32.mrf.mxu0
      %v3112 = vadd.f32 %v3059, %v3111
      %3113 = vmatprep.mubr.bf16.mxu0 0
      %3114 = vmatmul.mubr.bf16.gmra.mxu0 %v3016
      %v3115 = vpop.f32.mrf.mxu0
      %v3116 = vadd.f32 %v3063, %v3115
      %v3117 = vpop.f32.mrf.mxu0
      %v3118 = vadd.f32 %v3065, %v3117
      %v3119 = vpop.f32.mrf.mxu0
      %v3120 = vadd.f32 %v3067, %v3119
      %v3121 = vpop.f32.mrf.mxu0
      %v3122 = vadd.f32 %v3069, %v3121
      %3123 = vdwg.mxu0
      %v3124 = vld [vmem:[%s246] sm:$0xff]
      %v3125 = vld [vmem:[%s246 + $0x8] sm:$0xff]
      %v3126 = vld [vmem:[%s246 + $0x10] sm:$0xff]
      %v3127 = vld [vmem:[%s246 + $0x18] sm:$0xff]
      %v3128 = vld [vmem:[%s246 + $0x20] sm:$0xff]
      %v3129 = vld [vmem:[%s246 + $0x28] sm:$0xff]
      %v3130 = vld [vmem:[%s246 + $0x30] sm:$0xff]
      %v3131 = vld [vmem:[%s246 + $0x38] sm:$0xff]
      %v3132 = vadd.f32 %v3106, %v3124
      %v3133 = vadd.f32 %v3108, %v3125
      %v3134 = vadd.f32 %v3110, %v3126
      %v3135 = vadd.f32 %v3112, %v3127
      %v3136 = vadd.f32 %v3116, %v3128
      %v3137 = vadd.f32 %v3118, %v3129
      %v3138 = vadd.f32 %v3120, %v3130
      %v3139 = vadd.f32 %v3122, %v3131
      %v3140 = vmax.f32 %v3132, 0.0
      %v3141 = vmax.f32 %v3133, 0.0
      %v3142 = vmax.f32 %v3134, 0.0
      %v3143 = vmax.f32 %v3135, 0.0
      %v3144 = vmax.f32 %v3136, 0.0
      %v3145 = vmax.f32 %v3137, 0.0
      %v3146 = vmax.f32 %v3138, 0.0
      %v3147 = vmax.f32 %v3139, 0.0
      %3148 = vst [vmem:[%s251] sm:$0xff] %v3140
      %3149 = vst [vmem:[%s251 + $0x8] sm:$0xff] %v3141
      %3150 = vst [vmem:[%s251 + $0x10] sm:$0xff] %v3142
      %3151 = vst [vmem:[%s251 + $0x18] sm:$0xff] %v3143
      %3152 = vst [vmem:[%s251 + $0x20] sm:$0xff] %v3144
      %3153 = vst [vmem:[%s251 + $0x28] sm:$0xff] %v3145
      %3154 = vst [vmem:[%s251 + $0x30] sm:$0xff] %v3146
      %3155 = vst [vmem:[%s251 + $0x38] sm:$0xff] %v3147
      %p3156 = scmp.lt.s32.totalorder %s17, 1
      %s3157 = scalar_select %p3156, %s17, 1
      %s3158 = smul.addr %s3157, 8
      %s3159 = smul.addr %s3158, 8
      %s3160 = scalar_lea.vmem %s6, %s3159
      // Predicated region
      $region45: #{basic_block.1} parent=43 // pred_check
        %p3161 = pneg %p166
      $region46: #{basic_block.1} parent=43 // pred_check_branch
        %3163 = sbr.rel (%p3161) target = $region48
      $region47: #{basic_block.1} parent=43 // pred_region
        _
      $region48: #{basic_block.1} parent=43 // pred_fallthru
        _
    $region44: #{basic_block.1} parent=5 // pred_fallthru
      _
    %p3164 = scmp.le.s32.totalorder 2, %s12
    // Predicated region
    $region49: #{basic_block.1} parent=5 // pred_check
      %p3165 = pneg %p3164
    $region50: #{basic_block.1} parent=5 // pred_check_branch
      %3167 = sbr.rel (%p3165) target = $region52
    $region51: #{basic_block.1} parent=5 // pred_region
      %s3168 = ssub.s32 %s12, 2
      // Predicated region
      $region53: #{basic_block.1} parent=51 // pred_check
        %p3169 = pneg %p172
      $region54: #{basic_block.1} parent=51 // pred_check_branch
        %3171 = sbr.rel (%p3169) target = $region56
      $region55: #{basic_block.1} parent=51 // pred_region
        %p3172 = scmp.lt.s32.totalorder %s18, 1
        %s3173 = scalar_select %p3172, %s18, 1
        %s3174 = smul.addr %s3173, 8
        %s3175 = smul.addr %s3174, 8
        %s3176 = scalar_lea.vmem %s6, %s3175
      $region56: #{basic_block.1} parent=51 // pred_fallthru
        _
    $region52: #{basic_block.1} parent=5 // pred_fallthru
      _
  $region6: #{basic_block.1} parent=0 // loop_footer
    %s16 = sadd.s32 1, %s12
  $region7: #{basic_block.1} parent=0 // loop_footer_branch
    %11 = sbr.rel target = $region3
  $region8: #{basic_block.1} parent=0 // loop_exit
    _

</llo_original>
